<compile_context>
chip_gen: v7x
topology: tpu7x:2x2x1
jax: 0.10.0
libtpu: 0.0.40
codegen_flags: <defaults>
</compile_context>

<pallas_src>
import functools

import jax
import jax.numpy as jnp
from jax.experimental import pallas as pl
from jax.experimental.pallas import tpu as pltpu

LANE = 128
_MIB = 1024 * 1024


def fcn_kernel(x_ref, w1_ref, b1_ref, w2_ref, b2_ref, w3_ref, b3_ref, o_ref):
    """Fused 3-layer MLP: tanh, tanh, sigmoid. All operands resident in VMEM."""
    mm_dtype = w1_ref.dtype                      # matmul operand dtype (f32 / bf16)
    x = x_ref[...].astype(mm_dtype)

    # Layer 1: Linear + tanh. MXU accumulates in f32; bias adds in f32.
    z1 = jnp.dot(x, w1_ref[...], preferred_element_type=jnp.float32) + b1_ref[...]
    h1 = jnp.tanh(z1).astype(mm_dtype)

    # Dropout(p=0) / eval-mode dropout is the identity -> omitted.

    # Layer 2: Linear + tanh.
    z2 = jnp.dot(h1, w2_ref[...], preferred_element_type=jnp.float32) + b2_ref[...]
    h2 = jnp.tanh(z2).astype(mm_dtype)

    # Layer 3: Linear + sigmoid. Transcendentals sit on the EUP slot, which has
    # large slack here -> left as-is per review.
    z3 = jnp.dot(h2, w3_ref[...], preferred_element_type=jnp.float32) + b3_ref[...]
    o_ref[...] = jax.nn.sigmoid(z3).astype(o_ref.dtype)


def _round_up(n, m):
    return ((n + m - 1) // m) * m


def _sublane(*dtypes):
    """Sublane granularity required by the widest-packed dtype involved."""
    s = 8
    for dt in dtypes:
        isz = jnp.dtype(dt).itemsize
        if isz == 2:
            s = max(s, 16)
        elif isz == 1:
            s = max(s, 32)
    return s


def _vmem_budget_bytes():
    """Generation-aware scoped-VMEM budget: ~0.75 * physical, capped ~100 MiB.

    v7x (64 MiB physical/TC) -> 48 MiB; v5e/v6e (128 MiB) -> 96 MiB.
    """
    try:
        cap = pltpu.get_tpu_info().vmem_capacity_bytes
    except Exception:
        cap = 64 * _MIB                          # conservative fallback (v7x-sized)
    return int(min(0.75 * cap, 100 * _MIB))


def _const_spec(shape, single_buffer=True):
    """BlockSpec for a grid-invariant (broadcast) operand.

    index_map always returns block (0, 0); with single_buffer=True the block is
    kept single-buffered (no pointless double-buffering of weights/biases).
    """
    index_map = lambda i: (0,) * len(shape)
    if single_buffer:
        try:
            return pl.BlockSpec(shape, index_map, pipeline_mode=pl.Buffered(1))
        except TypeError:
            pass                                 # jax without pipeline_mode kwarg
    return pl.BlockSpec(shape, index_map)


def prepare_params(w1, b1, w2, b2, w3, b3, compute_dtype=jnp.bfloat16):
    """One-time padding/cast of parameters (hoisted out of the forward path).

    Hidden/output feature axes are zero-padded to multiples of 128 lanes so
    compute and stores are lane-dense; the input-feature axis (first matmul's
    K) stays unpadded. Zero padding is numerically inert (tanh(0)=0 keeps
    padded hidden lanes at 0; padded output lanes are sliced off). Weights are
    cast to `compute_dtype` (bf16 recommended on all TPU generations — MXU
    accumulation stays f32); biases stay f32.
    """
    in_dim, hid = w1.shape
    out_dim = w3.shape[1]
    hid_p = _round_up(hid, LANE)
    out_p = _round_up(out_dim, LANE)

    w1p = jnp.pad(w1, ((0, 0), (0, hid_p - hid))).astype(compute_dtype)
    b1p = jnp.pad(b1, ((0, 0), (0, hid_p - hid))).astype(jnp.float32)
    w2p = jnp.pad(w2, ((0, hid_p - hid), (0, hid_p - hid))).astype(compute_dtype)
    b2p = jnp.pad(b2, ((0, 0), (0, hid_p - hid))).astype(jnp.float32)
    w3p = jnp.pad(w3, ((0, hid_p - hid), (0, out_p - out_dim))).astype(compute_dtype)
    b3p = jnp.pad(b3, ((0, 0), (0, out_p - out_dim))).astype(jnp.float32)
    return (w1p, b1p, w2p, b2p, w3p, b3p), out_dim


@functools.partial(
    jax.jit,
    static_argnames=("out_dim", "batch_tile", "out_dtype", "vmem_budget_bytes",
                     "single_buffer_weights"))
def fcn_forward(x, w1, b1, w2, b2, w3, b3, *, out_dim, batch_tile=None,
                out_dtype=jnp.float32, vmem_budget_bytes=None,
                single_buffer_weights=True):
    """FCNModel forward (autoencoder=None) on pre-padded params from prepare_params."""
    B, in_dim = x.shape
    assert w1.shape[0] == in_dim, "x feature dim must match w1 rows"
    hid_p = w1.shape[1]
    out_p = w3.shape[1]
    compute_dtype = w1.dtype

    budget = (vmem_budget_bytes if vmem_budget_bytes is not None
              else _vmem_budget_bytes())
    sublane = _sublane(x.dtype, compute_dtype, out_dtype)

    w_isz = jnp.dtype(compute_dtype).itemsize
    x_isz = jnp.dtype(x.dtype).itemsize
    o_isz = jnp.dtype(out_dtype).itemsize
    w_bufs = 1 if single_buffer_weights else 2

    def vmem_needed(bt):
        return (
            2 * bt * in_dim * x_isz                                   # x tiles (double-buffered)
            + 2 * bt * out_p * o_isz                                  # out tiles (double-buffered)
            + w_bufs * (in_dim * hid_p + hid_p * hid_p + hid_p * out_p) * w_isz  # weights
            + w_bufs * (2 * hid_p + out_p) * 4                        # biases (f32)
            + 5 * bt * hid_p * 4                                      # f32 intermediates z/h
        )

    auto = batch_tile is None
    bt = 512 if auto else batch_tile
    bt = max(sublane, _round_up(bt, sublane))
    # Shrink batch_tile to fit the budget instead of clamping the VMEM limit.
    while 2 * vmem_needed(bt) > budget and bt > sublane:
        bt = max(sublane, _round_up(bt // 2, sublane))

    if auto:
        b_single = _round_up(B, sublane)
        if b_single <= bt:
            bt = b_single                         # tiny batch: one grid step, no exposed prologue
        elif pl.cdiv(B, bt) < 4:
            bt = max(sublane, _round_up(pl.cdiv(B, 4), sublane))  # >=2 steps per v7x core

    steps = pl.cdiv(B, bt)
    B_p = steps * bt
    xp = jnp.pad(x, ((0, B_p - B), (0, 0)))       # batch padding only; K stays unpadded

    vmem_limit = int(min(budget, max(32 * _MIB, 2 * vmem_needed(bt))))

    in_specs = [
        pl.BlockSpec((bt, in_dim), lambda i: (i, 0)),                 # x (tiled over batch)
        _const_spec((in_dim, hid_p), single_buffer_weights),          # w1
        _const_spec((1, hid_p), single_buffer_weights),               # b1
        _const_spec((hid_p, hid_p), single_buffer_weights),           # w2
        _const_spec((1, hid_p), single_buffer_weights),               # b2
        _const_spec((hid_p, out_p), single_buffer_weights),           # w3
        _const_spec((1, out_p), single_buffer_weights),               # b3
    ]
    out_spec = pl.BlockSpec((bt, out_p), lambda i: (i, 0))

    out_padded = pl.pallas_call(
        fcn_kernel,
        out_shape=jax.ShapeDtypeStruct((B_p, out_p), out_dtype),
        grid_spec=pltpu.PrefetchScalarGridSpec(
            num_scalar_prefetch=0,
            grid=(steps,),
            in_specs=in_specs,
            out_specs=out_spec,
        ),
        compiler_params=pltpu.CompilerParams(
            dimension_semantics=("parallel",),    # megacore sharding when steps > 1
            vmem_limit_bytes=vmem_limit,
        ),
    )(xp, w1, b1, w2, b2, w3, b3)

    # NOTE: this slice is an extra XLA copy over the padded buffer; consumers
    # that tolerate the padded (B_p, out_p) slab can take out_padded directly.
    return out_padded[:B, :out_dim]


def xavier_uniform(key, fan_in, fan_out, dtype=jnp.float32):
    """Matches nn.init.xavier_uniform_ (gain=1): U(-a, a), a = sqrt(6/(fan_in+fan_out))."""
    a = (6.0 / (fan_in + fan_out)) ** 0.5
    # Stored as [fan_in, fan_out] so the kernel computes x @ W.
    return jax.random.uniform(key, (fan_in, fan_out), dtype, minval=-a, maxval=a)


def linear_bias(key, fan_in, fan_out, dtype=jnp.float32):
    """PyTorch nn.Linear default bias init: U(-1/sqrt(fan_in), 1/sqrt(fan_in))."""
    bound = 1.0 / (fan_in ** 0.5)
    return jax.random.uniform(key, (1, fan_out), dtype, minval=-bound, maxval=bound)


def reference_forward(x, w1, b1, w2, b2, w3, b3):
    h1 = jnp.tanh(x @ w1 + b1)
    h2 = jnp.tanh(h1 @ w2 + b2)
    return jax.nn.sigmoid(h2 @ w3 + b3)


def _run_forward(x, params, out_dim):
    """Call the kernel; fall back to double-buffered weights on older jax."""
    try:
        return fcn_forward(x, *params, out_dim=out_dim)
    except Exception:
        # TODO(synk): fallback for jax versions where BlockSpec pipeline_mode /
        # pl.Buffered(1) is not supported by the TPU pipeliner.
        return fcn_forward(x, *params, out_dim=out_dim, single_buffer_weights=False)


if __name__ == "__main__":
    # Small deterministic problem. Batch is intentionally ragged (500); the
    # auto tiler covers it in a single grid step (504 / 512 rows after rounding).
    input_size, hidden_size, output_size = 32, 64, 16
    batch = 500

    key = jax.random.PRNGKey(0)
    kx, kw1, kb1, kw2, kb2, kw3, kb3 = jax.random.split(key, 7)

    x = jax.random.normal(kx, (batch, input_size), jnp.float32)

    w1 = xavier_uniform(kw1, input_size, hidden_size)
    b1 = linear_bias(kb1, input_size, hidden_size)
    w2 = xavier_uniform(kw2, hidden_size, hidden_size)
    b2 = linear_bias(kb2, hidden_size, hidden_size)
    w3 = xavier_uniform(kw3, hidden_size, output_size)
    b3 = linear_bias(kb3, hidden_size, output_size)

    # TODO(synk): optional pretrained Autoencoder encoder path is not modeled
    # (constructor receives autoencoder=None here), so forward is just the FCN.

    ref = reference_forward(x, w1, b1, w2, b2, w3, b3)

    # 1) f32 matmul operands: bit-level parity check with the JAX reference.
    params_f32, out_dim = prepare_params(w1, b1, w2, b2, w3, b3,
                                         compute_dtype=jnp.float32)
    out_f32 = jax.block_until_ready(_run_forward(x, params_f32, out_dim))
    assert out_f32.shape == (batch, output_size)
    assert jnp.allclose(out_f32, ref, atol=1e-5, rtol=1e-5), "f32 mismatch vs reference"

    # 2) bf16 matmul operands (recommended default on v5e/v6e/v7x; f32 accumulation).
    params_bf16, _ = prepare_params(w1, b1, w2, b2, w3, b3,
                                    compute_dtype=jnp.bfloat16)
    out_bf16 = jax.block_until_ready(_run_forward(x, params_bf16, out_dim))
    assert out_bf16.shape == (batch, output_size)
    assert jnp.allclose(out_bf16, ref, atol=3e-2, rtol=3e-2), "bf16 mismatch vs reference"

    print("KERNEL_OK")
</pallas_src>

<mosaic_0001>
module attributes {stable_mosaic.version = 11 : i64} {
  func.func @fcn_kernel(%arg0: i32, %arg1: memref<504x32xf32, #tpu.memory_space<vmem>>, %arg2: memref<32x128xf32, #tpu.memory_space<vmem>>, %arg3: memref<1x128xf32, #tpu.memory_space<vmem>>, %arg4: memref<128x128xf32, #tpu.memory_space<vmem>>, %arg5: memref<1x128xf32, #tpu.memory_space<vmem>>, %arg6: memref<128x128xf32, #tpu.memory_space<vmem>>, %arg7: memref<1x128xf32, #tpu.memory_space<vmem>>, %arg8: memref<504x128xf32, #tpu.memory_space<vmem>>) attributes {dimension_semantics = [#tpu.dimension_semantics<parallel>], iteration_bounds = array<i64: 1>, scalar_prefetch = 0 : i64, scratch_operands = 0 : i64, tpu.core_type = #tpu.core_type<tc>, window_params = [{transform_indices = @transform_0, window_bounds = array<i64: 504, 32>}, {pipeline_mode = #tpu.pipeline_mode<synchronous>, transform_indices = @transform_1, window_bounds = array<i64: 32, 128>}, {pipeline_mode = #tpu.pipeline_mode<synchronous>, transform_indices = @transform_2, window_bounds = array<i64: 1, 128>}, {pipeline_mode = #tpu.pipeline_mode<synchronous>, transform_indices = @transform_3, window_bounds = array<i64: 128, 128>}, {pipeline_mode = #tpu.pipeline_mode<synchronous>, transform_indices = @transform_4, window_bounds = array<i64: 1, 128>}, {pipeline_mode = #tpu.pipeline_mode<synchronous>, transform_indices = @transform_5, window_bounds = array<i64: 128, 128>}, {pipeline_mode = #tpu.pipeline_mode<synchronous>, transform_indices = @transform_6, window_bounds = array<i64: 1, 128>}, {transform_indices = @transform_7, window_bounds = array<i64: 504, 128>}]} {
    %c0 = arith.constant 0 : index
    %c0_0 = arith.constant 0 : index
    %0 = vector.load %arg1[%c0, %c0_0] : memref<504x32xf32, #tpu.memory_space<vmem>>, vector<504x32xf32>
    %c0_1 = arith.constant 0 : index
    %c0_2 = arith.constant 0 : index
    %1 = vector.load %arg2[%c0_1, %c0_2] : memref<32x128xf32, #tpu.memory_space<vmem>>, vector<32x128xf32>
    %cst = arith.constant dense<0.000000e+00> : vector<504x128xf32>
    %2 = tpu.matmul %0, %1, %cst {dimension_numbers = #tpu.dot_dimension_numbers<[1], [0], [0], [1], [0, 0, 1, 1], [], []>} : vector<504x32xf32>, vector<32x128xf32>, vector<504x128xf32> -> vector<504x128xf32>
    %c0_3 = arith.constant 0 : index
    %c0_4 = arith.constant 0 : index
    %3 = vector.load %arg3[%c0_3, %c0_4] : memref<1x128xf32, #tpu.memory_space<vmem>>, vector<1x128xf32>
    %4 = vector.broadcast %3 : vector<1x128xf32> to vector<504x128xf32>
    %5 = arith.addf %2, %4 : vector<504x128xf32>
    %6 = math.tanh %5 : vector<504x128xf32>
    %c0_5 = arith.constant 0 : index
    %c0_6 = arith.constant 0 : index
    %7 = vector.load %arg4[%c0_5, %c0_6] : memref<128x128xf32, #tpu.memory_space<vmem>>, vector<128x128xf32>
    %cst_7 = arith.constant dense<0.000000e+00> : vector<504x128xf32>
    %8 = tpu.matmul %6, %7, %cst_7 {dimension_numbers = #tpu.dot_dimension_numbers<[1], [0], [0], [1], [0, 0, 1, 1], [], []>} : vector<504x128xf32>, vector<128x128xf32>, vector<504x128xf32> -> vector<504x128xf32>
    %c0_8 = arith.constant 0 : index
    %c0_9 = arith.constant 0 : index
    %9 = vector.load %arg5[%c0_8, %c0_9] : memref<1x128xf32, #tpu.memory_space<vmem>>, vector<1x128xf32>
    %10 = vector.broadcast %9 : vector<1x128xf32> to vector<504x128xf32>
    %11 = arith.addf %8, %10 : vector<504x128xf32>
    %12 = math.tanh %11 : vector<504x128xf32>
    %c0_10 = arith.constant 0 : index
    %c0_11 = arith.constant 0 : index
    %13 = vector.load %arg6[%c0_10, %c0_11] : memref<128x128xf32, #tpu.memory_space<vmem>>, vector<128x128xf32>
    %cst_12 = arith.constant dense<0.000000e+00> : vector<504x128xf32>
    %14 = tpu.matmul %12, %13, %cst_12 {dimension_numbers = #tpu.dot_dimension_numbers<[1], [0], [0], [1], [0, 0, 1, 1], [], []>} : vector<504x128xf32>, vector<128x128xf32>, vector<504x128xf32> -> vector<504x128xf32>
    %c0_13 = arith.constant 0 : index
    %c0_14 = arith.constant 0 : index
    %15 = vector.load %arg7[%c0_13, %c0_14] : memref<1x128xf32, #tpu.memory_space<vmem>>, vector<1x128xf32>
    %16 = vector.broadcast %15 : vector<1x128xf32> to vector<504x128xf32>
    %17 = arith.addf %14, %16 : vector<504x128xf32>
    %18 = arith.negf %17 : vector<504x128xf32>
    %19 = math.exp %18 : vector<504x128xf32>
    %cst_15 = arith.constant 1.000000e+00 : f32
    %20 = vector.broadcast %cst_15 : f32 to vector<504x128xf32>
    %21 = arith.addf %20, %19 : vector<504x128xf32>
    %22 = arith.divf %20, %21 : vector<504x128xf32>
    %c0_16 = arith.constant 0 : index
    %c0_17 = arith.constant 0 : index
    %23 = vector.load %arg8[%c0_16, %c0_17] : memref<504x128xf32, #tpu.memory_space<vmem>>, vector<504x128xf32>
    tpu.vector_store %arg8[%c0_16, %c0_17], %22 {strides = array<i32>} : memref<504x128xf32, #tpu.memory_space<vmem>>, vector<504x128xf32>,
    return
  }
  func.func @transform_0(%arg0: i32) -> (i32, i32) {
    %c0_i32 = arith.constant 0 : i32
    %c0_i32_0 = arith.constant 0 : i32
    return %arg0, %c0_i32 : i32, i32
  }
  func.func @transform_1(%arg0: i32) -> (i32, i32) {
    %c0_i32 = arith.constant 0 : i32
    %c0_i32_0 = arith.constant 0 : i32
    %c0_i32_1 = arith.constant 0 : i32
    return %c0_i32, %c0_i32_0 : i32, i32
  }
  func.func @transform_2(%arg0: i32) -> (i32, i32) {
    %c0_i32 = arith.constant 0 : i32
    %c0_i32_0 = arith.constant 0 : i32
    %c0_i32_1 = arith.constant 0 : i32
    return %c0_i32, %c0_i32_0 : i32, i32
  }
  func.func @transform_3(%arg0: i32) -> (i32, i32) {
    %c0_i32 = arith.constant 0 : i32
    %c0_i32_0 = arith.constant 0 : i32
    %c0_i32_1 = arith.constant 0 : i32
    return %c0_i32, %c0_i32_0 : i32, i32
  }
  func.func @transform_4(%arg0: i32) -> (i32, i32) {
    %c0_i32 = arith.constant 0 : i32
    %c0_i32_0 = arith.constant 0 : i32
    %c0_i32_1 = arith.constant 0 : i32
    return %c0_i32, %c0_i32_0 : i32, i32
  }
  func.func @transform_5(%arg0: i32) -> (i32, i32) {
    %c0_i32 = arith.constant 0 : i32
    %c0_i32_0 = arith.constant 0 : i32
    %c0_i32_1 = arith.constant 0 : i32
    return %c0_i32, %c0_i32_0 : i32, i32
  }
  func.func @transform_6(%arg0: i32) -> (i32, i32) {
    %c0_i32 = arith.constant 0 : i32
    %c0_i32_0 = arith.constant 0 : i32
    %c0_i32_1 = arith.constant 0 : i32
    return %c0_i32, %c0_i32_0 : i32, i32
  }
  func.func @transform_7(%arg0: i32) -> (i32, i32) {
    %c0_i32 = arith.constant 0 : i32
    %c0_i32_0 = arith.constant 0 : i32
    return %arg0, %c0_i32 : i32, i32
  }
}

module attributes {stable_mosaic.version = 11 : i64} {
  func.func @fcn_kernel(%arg0: i32, %arg1: memref<504x32xf32, #tpu.memory_space<vmem>>, %arg2: memref<32x128xf32, #tpu.memory_space<vmem>>, %arg3: memref<1x128xf32, #tpu.memory_space<vmem>>, %arg4: memref<128x128xf32, #tpu.memory_space<vmem>>, %arg5: memref<1x128xf32, #tpu.memory_space<vmem>>, %arg6: memref<128x128xf32, #tpu.memory_space<vmem>>, %arg7: memref<1x128xf32, #tpu.memory_space<vmem>>, %arg8: memref<504x128xf32, #tpu.memory_space<vmem>>) attributes {dimension_semantics = [#tpu.dimension_semantics<parallel>], iteration_bounds = array<i64: 1>, scalar_prefetch = 0 : i64, scratch_operands = 0 : i64, tpu.core_type = #tpu.core_type<tc>, window_params = [{transform_indices = @transform_0, window_bounds = array<i64: 504, 32>}, {pipeline_mode = #tpu.pipeline_mode<synchronous>, transform_indices = @transform_1, window_bounds = array<i64: 32, 128>}, {pipeline_mode = #tpu.pipeline_mode<synchronous>, transform_indices = @transform_2, window_bounds = array<i64: 1, 128>}, {pipeline_mode = #tpu.pipeline_mode<synchronous>, transform_indices = @transform_3, window_bounds = array<i64: 128, 128>}, {pipeline_mode = #tpu.pipeline_mode<synchronous>, transform_indices = @transform_4, window_bounds = array<i64: 1, 128>}, {pipeline_mode = #tpu.pipeline_mode<synchronous>, transform_indices = @transform_5, window_bounds = array<i64: 128, 128>}, {pipeline_mode = #tpu.pipeline_mode<synchronous>, transform_indices = @transform_6, window_bounds = array<i64: 1, 128>}, {transform_indices = @transform_7, window_bounds = array<i64: 504, 128>}]} {
    %c0 = arith.constant 0 : index
    %c0_0 = arith.constant 0 : index
    %0 = vector.load %arg1[%c0, %c0_0] : memref<504x32xf32, #tpu.memory_space<vmem>>, vector<504x32xf32>
    %c0_1 = arith.constant 0 : index
    %c0_2 = arith.constant 0 : index
    %1 = vector.load %arg2[%c0_1, %c0_2] : memref<32x128xf32, #tpu.memory_space<vmem>>, vector<32x128xf32>
    %cst = arith.constant dense<0.000000e+00> : vector<504x128xf32>
    %2 = tpu.matmul %0, %1, %cst {dimension_numbers = #tpu.dot_dimension_numbers<[1], [0], [0], [1], [0, 0, 1, 1], [], []>} : vector<504x32xf32>, vector<32x128xf32>, vector<504x128xf32> -> vector<504x128xf32>
    %c0_3 = arith.constant 0 : index
    %c0_4 = arith.constant 0 : index
    %3 = vector.load %arg3[%c0_3, %c0_4] : memref<1x128xf32, #tpu.memory_space<vmem>>, vector<1x128xf32>
    %4 = vector.broadcast %3 : vector<1x128xf32> to vector<504x128xf32>
    %5 = arith.addf %2, %4 : vector<504x128xf32>
    %6 = math.tanh %5 : vector<504x128xf32>
    %c0_5 = arith.constant 0 : index
    %c0_6 = arith.constant 0 : index
    %7 = vector.load %arg4[%c0_5, %c0_6] : memref<128x128xf32, #tpu.memory_space<vmem>>, vector<128x128xf32>
    %cst_7 = arith.constant dense<0.000000e+00> : vector<504x128xf32>
    %8 = tpu.matmul %6, %7, %cst_7 {dimension_numbers = #tpu.dot_dimension_numbers<[1], [0], [0], [1], [0, 0, 1, 1], [], []>} : vector<504x128xf32>, vector<128x128xf32>, vector<504x128xf32> -> vector<504x128xf32>
    %c0_8 = arith.constant 0 : index
    %c0_9 = arith.constant 0 : index
    %9 = vector.load %arg5[%c0_8, %c0_9] : memref<1x128xf32, #tpu.memory_space<vmem>>, vector<1x128xf32>
    %10 = vector.broadcast %9 : vector<1x128xf32> to vector<504x128xf32>
    %11 = arith.addf %8, %10 : vector<504x128xf32>
    %12 = math.tanh %11 : vector<504x128xf32>
    %c0_10 = arith.constant 0 : index
    %c0_11 = arith.constant 0 : index
    %13 = vector.load %arg6[%c0_10, %c0_11] : memref<128x128xf32, #tpu.memory_space<vmem>>, vector<128x128xf32>
    %cst_12 = arith.constant dense<0.000000e+00> : vector<504x128xf32>
    %14 = tpu.matmul %12, %13, %cst_12 {dimension_numbers = #tpu.dot_dimension_numbers<[1], [0], [0], [1], [0, 0, 1, 1], [], []>} : vector<504x128xf32>, vector<128x128xf32>, vector<504x128xf32> -> vector<504x128xf32>
    %c0_13 = arith.constant 0 : index
    %c0_14 = arith.constant 0 : index
    %15 = vector.load %arg7[%c0_13, %c0_14] : memref<1x128xf32, #tpu.memory_space<vmem>>, vector<1x128xf32>
    %16 = vector.broadcast %15 : vector<1x128xf32> to vector<504x128xf32>
    %17 = arith.addf %14, %16 : vector<504x128xf32>
    %18 = arith.negf %17 : vector<504x128xf32>
    %19 = math.exp %18 : vector<504x128xf32>
    %cst_15 = arith.constant 1.000000e+00 : f32
    %20 = vector.broadcast %cst_15 : f32 to vector<504x128xf32>
    %21 = arith.addf %20, %19 : vector<504x128xf32>
    %22 = arith.divf %20, %21 : vector<504x128xf32>
    %c0_16 = arith.constant 0 : index
    %c0_17 = arith.constant 0 : index
    %23 = vector.load %arg8[%c0_16, %c0_17] : memref<504x128xf32, #tpu.memory_space<vmem>>, vector<504x128xf32>
    tpu.vector_store %arg8[%c0_16, %c0_17], %22 {strides = array<i32>} : memref<504x128xf32, #tpu.memory_space<vmem>>, vector<504x128xf32>,
    return
  }
  func.func @transform_0(%arg0: i32) -> (i32, i32) {
    %c0_i32 = arith.constant 0 : i32
    %c0_i32_0 = arith.constant 0 : i32
    return %arg0, %c0_i32 : i32, i32
  }
  func.func @transform_1(%arg0: i32) -> (i32, i32) {
    %c0_i32 = arith.constant 0 : i32
    %c0_i32_0 = arith.constant 0 : i32
    %c0_i32_1 = arith.constant 0 : i32
    return %c0_i32, %c0_i32_0 : i32, i32
  }
  func.func @transform_2(%arg0: i32) -> (i32, i32) {
    %c0_i32 = arith.constant 0 : i32
    %c0_i32_0 = arith.constant 0 : i32
    %c0_i32_1 = arith.constant 0 : i32
    return %c0_i32, %c0_i32_0 : i32, i32
  }
  func.func @transform_3(%arg0: i32) -> (i32, i32) {
    %c0_i32 = arith.constant 0 : i32
    %c0_i32_0 = arith.constant 0 : i32
    %c0_i32_1 = arith.constant 0 : i32
    return %c0_i32, %c0_i32_0 : i32, i32
  }
  func.func @transform_4(%arg0: i32) -> (i32, i32) {
    %c0_i32 = arith.constant 0 : i32
    %c0_i32_0 = arith.constant 0 : i32
    %c0_i32_1 = arith.constant 0 : i32
    return %c0_i32, %c0_i32_0 : i32, i32
  }
  func.func @transform_5(%arg0: i32) -> (i32, i32) {
    %c0_i32 = arith.constant 0 : i32
    %c0_i32_0 = arith.constant 0 : i32
    %c0_i32_1 = arith.constant 0 : i32
    return %c0_i32, %c0_i32_0 : i32, i32
  }
  func.func @transform_6(%arg0: i32) -> (i32, i32) {
    %c0_i32 = arith.constant 0 : i32
    %c0_i32_0 = arith.constant 0 : i32
    %c0_i32_1 = arith.constant 0 : i32
    return %c0_i32, %c0_i32_0 : i32, i32
  }
  func.func @transform_7(%arg0: i32) -> (i32, i32) {
    %c0_i32 = arith.constant 0 : i32
    %c0_i32_0 = arith.constant 0 : i32
    return %arg0, %c0_i32 : i32, i32
  }
}

</mosaic_0001>

<llo_original>
// kernel: fcn_forward.1
$region0: #{fcn_forward.1}
  #allocation0 [shape = 'u32[]', space=smem, size = 0x4, offset = 0x4, fixed_abs, tag = 'smem constant byte address 0x4 - core index']
  #allocation1 [shape = 'u32[144,128]{1,0:T(1,128)}', space=vmem, size = 0x12000, scoped, tag = 'internal scratch']
  %s0 = inlined_call_operand.vmem [shape: f32[504,32], index: 0, kind: input, shape index: {}]
  %s1 = inlined_call_operand.vmem [shape: f32[32,128], index: 1, kind: input, shape index: {}]
  %s2 = inlined_call_operand.vmem [shape: f32[1,128], index: 2, kind: input, shape index: {}]
  %s3 = inlined_call_operand.vmem [shape: f32[128,128], index: 3, kind: input, shape index: {}]
  %s4 = inlined_call_operand.vmem [shape: f32[1,128], index: 4, kind: input, shape index: {}]
  %s5 = inlined_call_operand.vmem [shape: f32[128,128], index: 5, kind: input, shape index: {}]
  %s6 = inlined_call_operand.vmem [shape: f32[1,128], index: 6, kind: input, shape index: {}]
  %s7 = inlined_call_operand.vmem [shape: f32[504,128], index: 7, kind: output, shape index: {}]
  %s8 = sld [smem:[#allocation0]]
  $region38: #{fcn_forward.1} parent=0
    _
  %s10 = ssub.s32 1, %s8
  %s11 = scalar_select 0, %s10, %s8
  // Predicated region
  $region2: #{fcn_forward.1} parent=0 // pred_check
    _
  $region3: #{fcn_forward.1} parent=0 // pred_check_branch
    %13 = sbr.rel (0) target = $region5
  $region4: #{fcn_forward.1} parent=0 // pred_region
    _
  $region5: #{fcn_forward.1} parent=0 // pred_fallthru
    _
  // Predicated region
  $region6: #{fcn_forward.1} parent=0 // pred_check
    _
  $region7: #{fcn_forward.1} parent=0 // pred_check_branch
    %15 = sbr.rel (0) target = $region9
  $region8: #{fcn_forward.1} parent=0 // pred_region
    _
  $region9: #{fcn_forward.1} parent=0 // pred_fallthru
    _
  // Predicated region
  $region10: #{fcn_forward.1} parent=0 // pred_check
    _
  $region11: #{fcn_forward.1} parent=0 // pred_check_branch
    %17 = sbr.rel (0) target = $region13
  $region12: #{fcn_forward.1} parent=0 // pred_region
    _
  $region13: #{fcn_forward.1} parent=0 // pred_fallthru
    _
  // Predicated region
  $region14: #{fcn_forward.1} parent=0 // pred_check
    _
  $region15: #{fcn_forward.1} parent=0 // pred_check_branch
    %19 = sbr.rel (0) target = $region17
  $region16: #{fcn_forward.1} parent=0 // pred_region
    _
  $region17: #{fcn_forward.1} parent=0 // pred_fallthru
    _
  // Predicated region
  $region18: #{fcn_forward.1} parent=0 // pred_check
    _
  $region19: #{fcn_forward.1} parent=0 // pred_check_branch
    %21 = sbr.rel (0) target = $region21
  $region20: #{fcn_forward.1} parent=0 // pred_region
    _
  $region21: #{fcn_forward.1} parent=0 // pred_fallthru
    _
  // Predicated region
  $region22: #{fcn_forward.1} parent=0 // pred_check
    _
  $region23: #{fcn_forward.1} parent=0 // pred_check_branch
    %23 = sbr.rel (0) target = $region25
  $region24: #{fcn_forward.1} parent=0 // pred_region
    _
  $region25: #{fcn_forward.1} parent=0 // pred_fallthru
    _
  // Predicated region
  $region26: #{fcn_forward.1} parent=0 // pred_check
    _
  $region27: #{fcn_forward.1} parent=0 // pred_check_branch
    %25 = sbr.rel (0) target = $region29
  $region28: #{fcn_forward.1} parent=0 // pred_region
    _
  $region29: #{fcn_forward.1} parent=0 // pred_fallthru
    _
  %v26 = vld [vmem:[%s0] sm:$0xff]
  %v27 = vld [vmem:[%s0 + $0x8] sm:$0xff]
  %v28 = vld [vmem:[%s0 + $0x10] sm:$0xff]
  %v29 = vld [vmem:[%s0 + $0x18] sm:$0xff]
  %v30 = vld [vmem:[%s0 + $0x20] sm:$0xff]
  %v31 = vld [vmem:[%s0 + $0x28] sm:$0xff]
  %v32 = vld [vmem:[%s0 + $0x30] sm:$0xff]
  %v33 = vld [vmem:[%s0 + $0x38] sm:$0xff]
  %v34 = vld [vmem:[%s0 + $0x40] sm:$0xff]
  %v35 = vld [vmem:[%s0 + $0x48] sm:$0xff]
  %v36 = vld [vmem:[%s0 + $0x50] sm:$0xff]
  %v37 = vld [vmem:[%s0 + $0x58] sm:$0xff]
  %v38 = vld [vmem:[%s0 + $0x60] sm:$0xff]
  %v39 = vld [vmem:[%s0 + $0x68] sm:$0xff]
  %v40 = vld [vmem:[%s0 + $0x70] sm:$0xff]
  %v41 = vld [vmem:[%s0 + $0x78] sm:$0xff]
  %v42 = vld [vmem:[%s0 + $0x80] sm:$0xff]
  %v43 = vld [vmem:[%s0 + $0x88] sm:$0xff]
  %v44 = vld [vmem:[%s0 + $0x90] sm:$0xff]
  %v45 = vld [vmem:[%s0 + $0x98] sm:$0xff]
  %v46 = vld [vmem:[%s0 + $0xa0] sm:$0xff]
  %v47 = vld [vmem:[%s0 + $0xa8] sm:$0xff]
  %v48 = vld [vmem:[%s0 + $0xb0] sm:$0xff]
  %v49 = vld [vmem:[%s0 + $0xb8] sm:$0xff]
  %v50 = vld [vmem:[%s0 + $0xc0] sm:$0xff]
  %v51 = vld [vmem:[%s0 + $0xc8] sm:$0xff]
  %v52 = vld [vmem:[%s0 + $0xd0] sm:$0xff]
  %v53 = vld [vmem:[%s0 + $0xd8] sm:$0xff]
  %v54 = vld [vmem:[%s0 + $0xe0] sm:$0xff]
  %v55 = vld [vmem:[%s0 + $0xe8] sm:$0xff]
  %v56 = vld [vmem:[%s0 + $0xf0] sm:$0xff]
  %v57 = vld [vmem:[%s0 + $0xf8] sm:$0xff]
  %v58 = vld [vmem:[%s0 + $0x100] sm:$0xff]
  %v59 = vld [vmem:[%s0 + $0x108] sm:$0xff]
  %v60 = vld [vmem:[%s0 + $0x110] sm:$0xff]
  %v61 = vld [vmem:[%s0 + $0x118] sm:$0xff]
  %v62 = vld [vmem:[%s0 + $0x120] sm:$0xff]
  %v63 = vld [vmem:[%s0 + $0x128] sm:$0xff]
  %v64 = vld [vmem:[%s0 + $0x130] sm:$0xff]
  %v65 = vld [vmem:[%s0 + $0x138] sm:$0xff]
  %v66 = vld [vmem:[%s0 + $0x140] sm:$0xff]
  %v67 = vld [vmem:[%s0 + $0x148] sm:$0xff]
  %v68 = vld [vmem:[%s0 + $0x150] sm:$0xff]
  %v69 = vld [vmem:[%s0 + $0x158] sm:$0xff]
  %v70 = vld [vmem:[%s0 + $0x160] sm:$0xff]
  %v71 = vld [vmem:[%s0 + $0x168] sm:$0xff]
  %v72 = vld [vmem:[%s0 + $0x170] sm:$0xff]
  %v73 = vld [vmem:[%s0 + $0x178] sm:$0xff]
  %v74 = vld [vmem:[%s0 + $0x180] sm:$0xff]
  %v75 = vld [vmem:[%s0 + $0x188] sm:$0xff]
  %v76 = vld [vmem:[%s0 + $0x190] sm:$0xff]
  %v77 = vld [vmem:[%s0 + $0x198] sm:$0xff]
  %v78 = vld [vmem:[%s0 + $0x1a0] sm:$0xff]
  %v79 = vld [vmem:[%s0 + $0x1a8] sm:$0xff]
  %v80 = vld [vmem:[%s0 + $0x1b0] sm:$0xff]
  %v81 = vld [vmem:[%s0 + $0x1b8] sm:$0xff]
  %v82 = vld [vmem:[%s0 + $0x1c0] sm:$0xff]
  %v83 = vld [vmem:[%s0 + $0x1c8] sm:$0xff]
  %v84 = vld [vmem:[%s0 + $0x1d0] sm:$0xff]
  %v85 = vld [vmem:[%s0 + $0x1d8] sm:$0xff]
  %v86 = vld [vmem:[%s0 + $0x1e0] sm:$0xff]
  %v87 = vld [vmem:[%s0 + $0x1e8] sm:$0xff]
  %v88 = vld [vmem:[%s0 + $0x1f0] sm:$0xff]
  %v89 = vld [vmem:[%s1] sm:$0xff]
  %v90 = vld [vmem:[%s1 + $0x8] sm:$0xff]
  %v91 = vld [vmem:[%s1 + $0x10] sm:$0xff]
  %v92 = vld [vmem:[%s1 + $0x18] sm:$0xff]
  %v93 = vld [vmem:[%s2] sm:$0x1]
  %v95 = vlaneseq
  %v96 = vshrl.u32 %v95, 7
  %v97 = vsub.s32 0, %v96
  %v98 = vrot.slane %v93, %v97
  %vm100 = vcmask 261120
  %v102 = vsel %vm100, %v26, 0
  %v105 = vsel %vm100, %v27, 0
  %v108 = vsel %vm100, %v28, 0
  %v111 = vsel %vm100, %v29, 0
  %v114 = vsel %vm100, %v30, 0
  %v117 = vsel %vm100, %v31, 0
  %v120 = vsel %vm100, %v32, 0
  %v123 = vsel %vm100, %v33, 0
  %v126 = vsel %vm100, %v34, 0
  %v129 = vsel %vm100, %v35, 0
  %v132 = vsel %vm100, %v36, 0
  %v135 = vsel %vm100, %v37, 0
  %v138 = vsel %vm100, %v38, 0
  %v141 = vsel %vm100, %v39, 0
  %v144 = vsel %vm100, %v40, 0
  %v147 = vsel %vm100, %v41, 0
  %v150 = vsel %vm100, %v42, 0
  %v153 = vsel %vm100, %v43, 0
  %v156 = vsel %vm100, %v44, 0
  %v159 = vsel %vm100, %v45, 0
  %v162 = vsel %vm100, %v46, 0
  %v165 = vsel %vm100, %v47, 0
  %v168 = vsel %vm100, %v48, 0
  %v171 = vsel %vm100, %v49, 0
  %v174 = vsel %vm100, %v50, 0
  %v177 = vsel %vm100, %v51, 0
  %v180 = vsel %vm100, %v52, 0
  %v183 = vsel %vm100, %v53, 0
  %v186 = vsel %vm100, %v54, 0
  %v189 = vsel %vm100, %v55, 0
  %v192 = vsel %vm100, %v56, 0
  %v195 = vsel %vm100, %v57, 0
  %v198 = vsel %vm100, %v58, 0
  %v201 = vsel %vm100, %v59, 0
  %v204 = vsel %vm100, %v60, 0
  %v207 = vsel %vm100, %v61, 0
  %v210 = vsel %vm100, %v62, 0
  %v213 = vsel %vm100, %v63, 0
  %v216 = vsel %vm100, %v64, 0
  %v219 = vsel %vm100, %v65, 0
  %v222 = vsel %vm100, %v66, 0
  %v225 = vsel %vm100, %v67, 0
  %v228 = vsel %vm100, %v68, 0
  %v231 = vsel %vm100, %v69, 0
  %v234 = vsel %vm100, %v70, 0
  %v237 = vsel %vm100, %v71, 0
  %v240 = vsel %vm100, %v72, 0
  %v243 = vsel %vm100, %v73, 0
  %v246 = vsel %vm100, %v74, 0
  %v249 = vsel %vm100, %v75, 0
  %v252 = vsel %vm100, %v76, 0
  %v255 = vsel %vm100, %v77, 0
  %v258 = vsel %vm100, %v78, 0
  %v261 = vsel %vm100, %v79, 0
  %v264 = vsel %vm100, %v80, 0
  %v267 = vsel %vm100, %v81, 0
  %v270 = vsel %vm100, %v82, 0
  %v273 = vsel %vm100, %v83, 0
  %v276 = vsel %vm100, %v84, 0
  %v279 = vsel %vm100, %v85, 0
  %v282 = vsel %vm100, %v86, 0
  %v285 = vsel %vm100, %v87, 0
  %v288 = vsel %vm100, %v88, 0
  %290 = vmatprep.subr.mxu0 0.0
  %291 = vmatpush1.msra.mxu0 %v89
  %292 = vmatprep.subr.mxu0 0.0
  %293 = vmatpush1.msra.mxu0 %v90
  %294 = vmatprep.subr.mxu0 0.0
  %295 = vmatpush1.msra.mxu0 %v91
  %296 = vmatprep.subr.mxu0 0.0
  %297 = vmatpush1.msra.mxu0 %v92
  %298 = vmatprep.subr.mxu0 0.0
  %299 = vmatpush1.msra.mxu0 0.0
  %300 = vmatprep.subr.mxu0 0.0
  %301 = vmatpush1.msra.mxu0 0.0
  %302 = vmatprep.subr.mxu0 0.0
  %303 = vmatpush1.msra.mxu0 0.0
  %304 = vmatprep.subr.mxu0 0.0
  %305 = vmatpush1.msra.mxu0 0.0
  %306 = vmatprep.subr.mxu0 0.0
  %307 = vmatpush1.msra.mxu0 0.0
  %308 = vmatprep.subr.mxu0 0.0
  %309 = vmatpush1.msra.mxu0 0.0
  %310 = vmatprep.subr.mxu0 0.0
  %311 = vmatpush1.msra.mxu0 0.0
  %312 = vmatprep.subr.mxu0 0.0
  %313 = vmatpush1.msra.mxu0 0.0
  %314 = vmatprep.subr.mxu0 0.0
  %315 = vmatpush1.msra.mxu0 0.0
  %316 = vmatprep.subr.mxu0 0.0
  %317 = vmatpush1.msra.mxu0 0.0
  %318 = vmatprep.subr.mxu0 0.0
  %319 = vmatpush1.msra.mxu0 0.0
  %320 = vmatprep.subr.mxu0 0.0
  %321 = vmatpush1.msra.mxu0 0.0
  %322 = vmatprep.subr.mxu0 0.0
  %323 = vmatpush1.msra.mxu0 0.0
  %324 = vmatprep.subr.mxu0 0.0
  %325 = vmatpush1.msra.mxu0 0.0
  %326 = vmatprep.subr.mxu0 0.0
  %327 = vmatpush1.msra.mxu0 0.0
  %328 = vmatprep.subr.mxu0 0.0
  %329 = vmatpush1.msra.mxu0 0.0
  %330 = vmatprep.subr.mxu0 0.0
  %331 = vmatpush1.msra.mxu0 0.0
  %332 = vmatprep.subr.mxu0 0.0
  %333 = vmatpush1.msra.mxu0 0.0
  %334 = vmatprep.subr.mxu0 0.0
  %335 = vmatpush1.msra.mxu0 0.0
  %336 = vmatprep.subr.mxu0 0.0
  %337 = vmatpush1.msra.mxu0 0.0
  %338 = vmatprep.subr.mxu0 0.0
  %339 = vmatpush1.msra.mxu0 0.0
  %340 = vmatprep.subr.mxu0 0.0
  %341 = vmatpush1.msra.mxu0 0.0
  %342 = vmatprep.subr.mxu0 0.0
  %343 = vmatpush1.msra.mxu0 0.0
  %344 = vmatprep.subr.mxu0 0.0
  %345 = vmatpush1.msra.mxu0 0.0
  %346 = vmatprep.subr.mxu0 0.0
  %347 = vmatpush1.msra.mxu0 0.0
  %348 = vmatprep.subr.mxu0 0.0
  %349 = vmatpush1.msra.mxu0 0.0
  %350 = vmatprep.subr.mxu0 0.0
  %351 = vmatpush1.msra.mxu0 0.0
  %352 = vmatprep.subr.mxu0 0.0
  %353 = vmatpush1.msra.mxu0 0.0
  %354 = vmatprep.mubr.f32.mxu0 0.0
  %355 = vmatmul.mubr.f32.gmra.mrb[0].mxu0 %v102
  %v356 = vpop.f32.mrb[0].mxu0
  %v357 = vadd.f32 %v98, %v356
  %v358 = vpop.f32.mrb[0].mxu0
  %359 = vmatprep.mubr.f32.mxu0 0.0
  %360 = vmatmul.mubr.f32.gmra.mrb[0].mxu0 %v105
  %v361 = vpop.f32.mrb[0].mxu0
  %v362 = vadd.f32 %v98, %v361
  %v363 = vpop.f32.mrb[0].mxu0
  %364 = vmatprep.mubr.f32.mxu0 0.0
  %365 = vmatmul.mubr.f32.gmra.mrb[0].mxu0 %v108
  %v366 = vpop.f32.mrb[0].mxu0
  %v367 = vadd.f32 %v98, %v366
  %v368 = vpop.f32.mrb[0].mxu0
  %369 = vmatprep.mubr.f32.mxu0 0.0
  %370 = vmatmul.mubr.f32.gmra.mrb[0].mxu0 %v111
  %v371 = vpop.f32.mrb[0].mxu0
  %v372 = vadd.f32 %v98, %v371
  %v373 = vpop.f32.mrb[0].mxu0
  %374 = vmatprep.mubr.f32.mxu0 0.0
  %375 = vmatmul.mubr.f32.gmra.mrb[0].mxu0 %v114
  %v376 = vpop.f32.mrb[0].mxu0
  %v377 = vadd.f32 %v98, %v376
  %v378 = vpop.f32.mrb[0].mxu0
  %379 = vmatprep.mubr.f32.mxu0 0.0
  %380 = vmatmul.mubr.f32.gmra.mrb[0].mxu0 %v117
  %v381 = vpop.f32.mrb[0].mxu0
  %v382 = vadd.f32 %v98, %v381
  %v383 = vpop.f32.mrb[0].mxu0
  %384 = vmatprep.mubr.f32.mxu0 0.0
  %385 = vmatmul.mubr.f32.gmra.mrb[0].mxu0 %v120
  %v386 = vpop.f32.mrb[0].mxu0
  %v387 = vadd.f32 %v98, %v386
  %v388 = vpop.f32.mrb[0].mxu0
  %389 = vmatprep.mubr.f32.mxu0 0.0
  %390 = vmatmul.mubr.f32.gmra.mrb[0].mxu0 %v123
  %v391 = vpop.f32.mrb[0].mxu0
  %v392 = vadd.f32 %v98, %v391
  %v393 = vpop.f32.mrb[0].mxu0
  %394 = vmatprep.mubr.f32.mxu0 0.0
  %395 = vmatmul.mubr.f32.gmra.mrb[0].mxu0 %v126
  %v396 = vpop.f32.mrb[0].mxu0
  %v397 = vadd.f32 %v98, %v396
  %v398 = vpop.f32.mrb[0].mxu0
  %399 = vmatprep.mubr.f32.mxu0 0.0
  %400 = vmatmul.mubr.f32.gmra.mrb[0].mxu0 %v129
  %v401 = vpop.f32.mrb[0].mxu0
  %v402 = vadd.f32 %v98, %v401
  %v403 = vpop.f32.mrb[0].mxu0
  %404 = vmatprep.mubr.f32.mxu0 0.0
  %405 = vmatmul.mubr.f32.gmra.mrb[0].mxu0 %v132
  %v406 = vpop.f32.mrb[0].mxu0
  %v407 = vadd.f32 %v98, %v406
  %v408 = vpop.f32.mrb[0].mxu0
  %409 = vmatprep.mubr.f32.mxu0 0.0
  %410 = vmatmul.mubr.f32.gmra.mrb[0].mxu0 %v135
  %v411 = vpop.f32.mrb[0].mxu0
  %v412 = vadd.f32 %v98, %v411
  %v413 = vpop.f32.mrb[0].mxu0
  %414 = vmatprep.mubr.f32.mxu0 0.0
  %415 = vmatmul.mubr.f32.gmra.mrb[0].mxu0 %v138
  %v416 = vpop.f32.mrb[0].mxu0
  %v417 = vadd.f32 %v98, %v416
  %v418 = vpop.f32.mrb[0].mxu0
  %419 = vmatprep.mubr.f32.mxu0 0.0
  %420 = vmatmul.mubr.f32.gmra.mrb[0].mxu0 %v141
  %v421 = vpop.f32.mrb[0].mxu0
  %v422 = vadd.f32 %v98, %v421
  %v423 = vpop.f32.mrb[0].mxu0
  %424 = vmatprep.mubr.f32.mxu0 0.0
  %425 = vmatmul.mubr.f32.gmra.mrb[0].mxu0 %v144
  %v426 = vpop.f32.mrb[0].mxu0
  %v427 = vadd.f32 %v98, %v426
  %v428 = vpop.f32.mrb[0].mxu0
  %429 = vmatprep.mubr.f32.mxu0 0.0
  %430 = vmatmul.mubr.f32.gmra.mrb[0].mxu0 %v147
  %v431 = vpop.f32.mrb[0].mxu0
  %v432 = vadd.f32 %v98, %v431
  %v433 = vpop.f32.mrb[0].mxu0
  %434 = vmatprep.mubr.f32.mxu0 0.0
  %435 = vmatmul.mubr.f32.gmra.mrb[0].mxu0 %v150
  %v436 = vpop.f32.mrb[0].mxu0
  %v437 = vadd.f32 %v98, %v436
  %v438 = vpop.f32.mrb[0].mxu0
  %439 = vmatprep.mubr.f32.mxu0 0.0
  %440 = vmatmul.mubr.f32.gmra.mrb[0].mxu0 %v153
  %v441 = vpop.f32.mrb[0].mxu0
  %v442 = vadd.f32 %v98, %v441
  %v443 = vpop.f32.mrb[0].mxu0
  %444 = vmatprep.mubr.f32.mxu0 0.0
  %445 = vmatmul.mubr.f32.gmra.mrb[0].mxu0 %v156
  %v446 = vpop.f32.mrb[0].mxu0
  %v447 = vadd.f32 %v98, %v446
  %v448 = vpop.f32.mrb[0].mxu0
  %449 = vmatprep.mubr.f32.mxu0 0.0
  %450 = vmatmul.mubr.f32.gmra.mrb[0].mxu0 %v159
  %v451 = vpop.f32.mrb[0].mxu0
  %v452 = vadd.f32 %v98, %v451
  %v453 = vpop.f32.mrb[0].mxu0
  %454 = vmatprep.mubr.f32.mxu0 0.0
  %455 = vmatmul.mubr.f32.gmra.mrb[0].mxu0 %v162
  %v456 = vpop.f32.mrb[0].mxu0
  %v457 = vadd.f32 %v98, %v456
  %v458 = vpop.f32.mrb[0].mxu0
  %459 = vmatprep.mubr.f32.mxu0 0.0
  %460 = vmatmul.mubr.f32.gmra.mrb[0].mxu0 %v165
  %v461 = vpop.f32.mrb[0].mxu0
  %v462 = vadd.f32 %v98, %v461
  %v463 = vpop.f32.mrb[0].mxu0
  %464 = vmatprep.mubr.f32.mxu0 0.0
  %465 = vmatmul.mubr.f32.gmra.mrb[0].mxu0 %v168
  %v466 = vpop.f32.mrb[0].mxu0
  %v467 = vadd.f32 %v98, %v466
  %v468 = vpop.f32.mrb[0].mxu0
  %469 = vmatprep.mubr.f32.mxu0 0.0
  %470 = vmatmul.mubr.f32.gmra.mrb[0].mxu0 %v171
  %v471 = vpop.f32.mrb[0].mxu0
  %v472 = vadd.f32 %v98, %v471
  %v473 = vpop.f32.mrb[0].mxu0
  %474 = vmatprep.mubr.f32.mxu0 0.0
  %475 = vmatmul.mubr.f32.gmra.mrb[0].mxu0 %v174
  %v476 = vpop.f32.mrb[0].mxu0
  %v477 = vadd.f32 %v98, %v476
  %v478 = vpop.f32.mrb[0].mxu0
  %479 = vmatprep.mubr.f32.mxu0 0.0
  %480 = vmatmul.mubr.f32.gmra.mrb[0].mxu0 %v177
  %v481 = vpop.f32.mrb[0].mxu0
  %v482 = vadd.f32 %v98, %v481
  %v483 = vpop.f32.mrb[0].mxu0
  %484 = vmatprep.mubr.f32.mxu0 0.0
  %485 = vmatmul.mubr.f32.gmra.mrb[0].mxu0 %v180
  %v486 = vpop.f32.mrb[0].mxu0
  %v487 = vadd.f32 %v98, %v486
  %v488 = vpop.f32.mrb[0].mxu0
  %489 = vmatprep.mubr.f32.mxu0 0.0
  %490 = vmatmul.mubr.f32.gmra.mrb[0].mxu0 %v183
  %v491 = vpop.f32.mrb[0].mxu0
  %v492 = vadd.f32 %v98, %v491
  %v493 = vpop.f32.mrb[0].mxu0
  %494 = vmatprep.mubr.f32.mxu0 0.0
  %495 = vmatmul.mubr.f32.gmra.mrb[0].mxu0 %v186
  %v496 = vpop.f32.mrb[0].mxu0
  %v497 = vadd.f32 %v98, %v496
  %v498 = vpop.f32.mrb[0].mxu0
  %499 = vmatprep.mubr.f32.mxu0 0.0
  %500 = vmatmul.mubr.f32.gmra.mrb[0].mxu0 %v189
  %v501 = vpop.f32.mrb[0].mxu0
  %v502 = vadd.f32 %v98, %v501
  %v503 = vpop.f32.mrb[0].mxu0
  %504 = vmatprep.mubr.f32.mxu0 0.0
  %505 = vmatmul.mubr.f32.gmra.mrb[0].mxu0 %v192
  %v506 = vpop.f32.mrb[0].mxu0
  %v507 = vadd.f32 %v98, %v506
  %v508 = vpop.f32.mrb[0].mxu0
  %509 = vmatprep.mubr.f32.mxu0 0.0
  %510 = vmatmul.mubr.f32.gmra.mrb[0].mxu0 %v195
  %v511 = vpop.f32.mrb[0].mxu0
  %v512 = vadd.f32 %v98, %v511
  %v513 = vpop.f32.mrb[0].mxu0
  %514 = vmatprep.mubr.f32.mxu0 0.0
  %515 = vmatmul.mubr.f32.gmra.mrb[0].mxu0 %v198
  %v516 = vpop.f32.mrb[0].mxu0
  %v517 = vadd.f32 %v98, %v516
  %v518 = vpop.f32.mrb[0].mxu0
  %519 = vmatprep.mubr.f32.mxu0 0.0
  %520 = vmatmul.mubr.f32.gmra.mrb[0].mxu0 %v201
  %v521 = vpop.f32.mrb[0].mxu0
  %v522 = vadd.f32 %v98, %v521
  %v523 = vpop.f32.mrb[0].mxu0
  %524 = vmatprep.mubr.f32.mxu0 0.0
  %525 = vmatmul.mubr.f32.gmra.mrb[0].mxu0 %v204
  %v526 = vpop.f32.mrb[0].mxu0
  %v527 = vadd.f32 %v98, %v526
  %v528 = vpop.f32.mrb[0].mxu0
  %529 = vmatprep.mubr.f32.mxu0 0.0
  %530 = vmatmul.mubr.f32.gmra.mrb[0].mxu0 %v207
  %v531 = vpop.f32.mrb[0].mxu0
  %v532 = vadd.f32 %v98, %v531
  %v533 = vpop.f32.mrb[0].mxu0
  %534 = vmatprep.mubr.f32.mxu0 0.0
  %535 = vmatmul.mubr.f32.gmra.mrb[0].mxu0 %v210
  %v536 = vpop.f32.mrb[0].mxu0
  %v537 = vadd.f32 %v98, %v536
  %v538 = vpop.f32.mrb[0].mxu0
  %539 = vmatprep.mubr.f32.mxu0 0.0
  %540 = vmatmul.mubr.f32.gmra.mrb[0].mxu0 %v213
  %v541 = vpop.f32.mrb[0].mxu0
  %v542 = vadd.f32 %v98, %v541
  %v543 = vpop.f32.mrb[0].mxu0
  %544 = vmatprep.mubr.f32.mxu0 0.0
  %545 = vmatmul.mubr.f32.gmra.mrb[0].mxu0 %v216
  %v546 = vpop.f32.mrb[0].mxu0
  %v547 = vadd.f32 %v98, %v546
  %v548 = vpop.f32.mrb[0].mxu0
  %549 = vmatprep.mubr.f32.mxu0 0.0
  %550 = vmatmul.mubr.f32.gmra.mrb[0].mxu0 %v219
  %v551 = vpop.f32.mrb[0].mxu0
  %v552 = vadd.f32 %v98, %v551
  %v553 = vpop.f32.mrb[0].mxu0
  %554 = vmatprep.mubr.f32.mxu0 0.0
  %555 = vmatmul.mubr.f32.gmra.mrb[0].mxu0 %v222
  %v556 = vpop.f32.mrb[0].mxu0
  %v557 = vadd.f32 %v98, %v556
  %v558 = vpop.f32.mrb[0].mxu0
  %559 = vmatprep.mubr.f32.mxu0 0.0
  %560 = vmatmul.mubr.f32.gmra.mrb[0].mxu0 %v225
  %v561 = vpop.f32.mrb[0].mxu0
  %v562 = vadd.f32 %v98, %v561
  %v563 = vpop.f32.mrb[0].mxu0
  %564 = vmatprep.mubr.f32.mxu0 0.0
  %565 = vmatmul.mubr.f32.gmra.mrb[0].mxu0 %v228
  %v566 = vpop.f32.mrb[0].mxu0
  %v567 = vadd.f32 %v98, %v566
  %v568 = vpop.f32.mrb[0].mxu0
  %569 = vmatprep.mubr.f32.mxu0 0.0
  %570 = vmatmul.mubr.f32.gmra.mrb[0].mxu0 %v231
  %v571 = vpop.f32.mrb[0].mxu0
  %v572 = vadd.f32 %v98, %v571
  %v573 = vpop.f32.mrb[0].mxu0
  %574 = vmatprep.mubr.f32.mxu0 0.0
  %575 = vmatmul.mubr.f32.gmra.mrb[0].mxu0 %v234
  %v576 = vpop.f32.mrb[0].mxu0
  %v577 = vadd.f32 %v98, %v576
  %v578 = vpop.f32.mrb[0].mxu0
  %579 = vmatprep.mubr.f32.mxu0 0.0
  %580 = vmatmul.mubr.f32.gmra.mrb[0].mxu0 %v237
  %v581 = vpop.f32.mrb[0].mxu0
  %v582 = vadd.f32 %v98, %v581
  %v583 = vpop.f32.mrb[0].mxu0
  %584 = vmatprep.mubr.f32.mxu0 0.0
  %585 = vmatmul.mubr.f32.gmra.mrb[0].mxu0 %v240
  %v586 = vpop.f32.mrb[0].mxu0
  %v587 = vadd.f32 %v98, %v586
  %v588 = vpop.f32.mrb[0].mxu0
  %589 = vmatprep.mubr.f32.mxu0 0.0
  %590 = vmatmul.mubr.f32.gmra.mrb[0].mxu0 %v243
  %v591 = vpop.f32.mrb[0].mxu0
  %v592 = vadd.f32 %v98, %v591
  %v593 = vpop.f32.mrb[0].mxu0
  %594 = vmatprep.mubr.f32.mxu0 0.0
  %595 = vmatmul.mubr.f32.gmra.mrb[0].mxu0 %v246
  %v596 = vpop.f32.mrb[0].mxu0
  %v597 = vadd.f32 %v98, %v596
  %v598 = vpop.f32.mrb[0].mxu0
  %599 = vmatprep.mubr.f32.mxu0 0.0
  %600 = vmatmul.mubr.f32.gmra.mrb[0].mxu0 %v249
  %v601 = vpop.f32.mrb[0].mxu0
  %v602 = vadd.f32 %v98, %v601
  %v603 = vpop.f32.mrb[0].mxu0
  %604 = vmatprep.mubr.f32.mxu0 0.0
  %605 = vmatmul.mubr.f32.gmra.mrb[0].mxu0 %v252
  %v606 = vpop.f32.mrb[0].mxu0
  %v607 = vadd.f32 %v98, %v606
  %v608 = vpop.f32.mrb[0].mxu0
  %609 = vmatprep.mubr.f32.mxu0 0.0
  %610 = vmatmul.mubr.f32.gmra.mrb[0].mxu0 %v255
  %v611 = vpop.f32.mrb[0].mxu0
  %v612 = vadd.f32 %v98, %v611
  %v613 = vpop.f32.mrb[0].mxu0
  %614 = vmatprep.mubr.f32.mxu0 0.0
  %615 = vmatmul.mubr.f32.gmra.mrb[0].mxu0 %v258
  %v616 = vpop.f32.mrb[0].mxu0
  %v617 = vadd.f32 %v98, %v616
  %v618 = vpop.f32.mrb[0].mxu0
  %619 = vmatprep.mubr.f32.mxu0 0.0
  %620 = vmatmul.mubr.f32.gmra.mrb[0].mxu0 %v261
  %v621 = vpop.f32.mrb[0].mxu0
  %v622 = vadd.f32 %v98, %v621
  %v623 = vpop.f32.mrb[0].mxu0
  %624 = vmatprep.mubr.f32.mxu0 0.0
  %625 = vmatmul.mubr.f32.gmra.mrb[0].mxu0 %v264
  %v626 = vpop.f32.mrb[0].mxu0
  %v627 = vadd.f32 %v98, %v626
  %v628 = vpop.f32.mrb[0].mxu0
  %629 = vmatprep.mubr.f32.mxu0 0.0
  %630 = vmatmul.mubr.f32.gmra.mrb[0].mxu0 %v267
  %v631 = vpop.f32.mrb[0].mxu0
  %v632 = vadd.f32 %v98, %v631
  %v633 = vpop.f32.mrb[0].mxu0
  %634 = vmatprep.mubr.f32.mxu0 0.0
  %635 = vmatmul.mubr.f32.gmra.mrb[0].mxu0 %v270
  %v636 = vpop.f32.mrb[0].mxu0
  %v637 = vadd.f32 %v98, %v636
  %v638 = vpop.f32.mrb[0].mxu0
  %639 = vmatprep.mubr.f32.mxu0 0.0
  %640 = vmatmul.mubr.f32.gmra.mrb[0].mxu0 %v273
  %v641 = vpop.f32.mrb[0].mxu0
  %v642 = vadd.f32 %v98, %v641
  %v643 = vpop.f32.mrb[0].mxu0
  %644 = vmatprep.mubr.f32.mxu0 0.0
  %645 = vmatmul.mubr.f32.gmra.mrb[0].mxu0 %v276
  %v646 = vpop.f32.mrb[0].mxu0
  %v647 = vadd.f32 %v98, %v646
  %v648 = vpop.f32.mrb[0].mxu0
  %649 = vmatprep.mubr.f32.mxu0 0.0
  %650 = vmatmul.mubr.f32.gmra.mrb[0].mxu0 %v279
  %v651 = vpop.f32.mrb[0].mxu0
  %v652 = vadd.f32 %v98, %v651
  %v653 = vpop.f32.mrb[0].mxu0
  %654 = vmatprep.mubr.f32.mxu0 0.0
  %655 = vmatmul.mubr.f32.gmra.mrb[0].mxu0 %v282
  %v656 = vpop.f32.mrb[0].mxu0
  %v657 = vadd.f32 %v98, %v656
  %v658 = vpop.f32.mrb[0].mxu0
  %659 = vmatprep.mubr.f32.mxu0 0.0
  %660 = vmatmul.mubr.f32.gmra.mrb[0].mxu0 %v285
  %v661 = vpop.f32.mrb[0].mxu0
  %v662 = vadd.f32 %v98, %v661
  %v663 = vpop.f32.mrb[0].mxu0
  %664 = vmatprep.mubr.f32.mxu0 0.0
  %665 = vmatmul.mubr.f32.gmra.mrb[0].mxu0 %v288
  %v666 = vpop.f32.mrb[0].mxu0
  %v667 = vadd.f32 %v98, %v666
  %v668 = vpop.f32.mrb[0].mxu0
  %669 = vdwg.mxu0
  %v670 = vtanh.pop %v357
  %v671 = vtanh.pop %v362
  %v672 = vtanh.pop %v367
  %v673 = vtanh.pop %v372
  %v674 = vtanh.pop %v377
  %v675 = vtanh.pop %v382
  %v676 = vtanh.pop %v387
  %v677 = vtanh.pop %v392
  %v678 = vtanh.pop %v397
  %v679 = vtanh.pop %v402
  %v680 = vtanh.pop %v407
  %v681 = vtanh.pop %v412
  %v682 = vtanh.pop %v417
  %v683 = vtanh.pop %v422
  %v684 = vtanh.pop %v427
  %v685 = vtanh.pop %v432
  %v686 = vtanh.pop %v437
  %v687 = vtanh.pop %v442
  %v688 = vtanh.pop %v447
  %v689 = vtanh.pop %v452
  %v690 = vtanh.pop %v457
  %v691 = vtanh.pop %v462
  %v692 = vtanh.pop %v467
  %v693 = vtanh.pop %v472
  %v694 = vtanh.pop %v477
  %v695 = vtanh.pop %v482
  %v696 = vtanh.pop %v487
  %v697 = vtanh.pop %v492
  %v698 = vtanh.pop %v497
  %v699 = vtanh.pop %v502
  %v700 = vtanh.pop %v507
  %v701 = vtanh.pop %v512
  %v702 = vtanh.pop %v517
  %v703 = vtanh.pop %v522
  %v704 = vtanh.pop %v527
  %v705 = vtanh.pop %v532
  %v706 = vtanh.pop %v537
  %v707 = vtanh.pop %v542
  %v708 = vtanh.pop %v547
  %v709 = vtanh.pop %v552
  %v710 = vtanh.pop %v557
  %v711 = vtanh.pop %v562
  %v712 = vtanh.pop %v567
  %v713 = vtanh.pop %v572
  %v714 = vtanh.pop %v577
  %v715 = vtanh.pop %v582
  %v716 = vtanh.pop %v587
  %v717 = vtanh.pop %v592
  %v718 = vtanh.pop %v597
  %v719 = vtanh.pop %v602
  %v720 = vtanh.pop %v607
  %v721 = vtanh.pop %v612
  %v722 = vtanh.pop %v617
  %v723 = vtanh.pop %v622
  %v724 = vtanh.pop %v627
  %v725 = vtanh.pop %v632
  %v726 = vtanh.pop %v637
  %v727 = vtanh.pop %v642
  %v728 = vtanh.pop %v647
  %v729 = vtanh.pop %v652
  %v730 = vtanh.pop %v657
  %v731 = vtanh.pop %v662
  %v732 = vtanh.pop %v667
  %v733 = vld [vmem:[%s3] sm:$0xff]
  %v734 = vld [vmem:[%s3 + $0x8] sm:$0xff]
  %v735 = vld [vmem:[%s3 + $0x10] sm:$0xff]
  %v736 = vld [vmem:[%s3 + $0x18] sm:$0xff]
  %v737 = vld [vmem:[%s3 + $0x20] sm:$0xff]
  %v738 = vld [vmem:[%s3 + $0x28] sm:$0xff]
  %v739 = vld [vmem:[%s3 + $0x30] sm:$0xff]
  %v740 = vld [vmem:[%s3 + $0x38] sm:$0xff]
  %v741 = vld [vmem:[%s3 + $0x40] sm:$0xff]
  %v742 = vld [vmem:[%s3 + $0x48] sm:$0xff]
  %v743 = vld [vmem:[%s3 + $0x50] sm:$0xff]
  %v744 = vld [vmem:[%s3 + $0x58] sm:$0xff]
  %v745 = vld [vmem:[%s3 + $0x60] sm:$0xff]
  %v746 = vld [vmem:[%s3 + $0x68] sm:$0xff]
  %v747 = vld [vmem:[%s3 + $0x70] sm:$0xff]
  %v748 = vld [vmem:[%s3 + $0x78] sm:$0xff]
  %v749 = vld [vmem:[%s4] sm:$0x1]
  %v751 = vlaneseq
  %v752 = vshrl.u32 %v751, 7
  %v753 = vsub.s32 0, %v752
  %v754 = vrot.slane %v749, %v753
  %756 = vmatprep.subr.mxu0 0.0
  %757 = vmatpush1.msra.mxu0 %v733
  %758 = vmatprep.subr.mxu0 0.0
  %759 = vmatpush1.msra.mxu0 %v734
  %760 = vmatprep.subr.mxu0 0.0
  %761 = vmatpush1.msra.mxu0 %v735
  %762 = vmatprep.subr.mxu0 0.0
  %763 = vmatpush1.msra.mxu0 %v736
  %764 = vmatprep.subr.mxu0 0.0
  %765 = vmatpush1.msra.mxu0 %v737
  %766 = vmatprep.subr.mxu0 0.0
  %767 = vmatpush1.msra.mxu0 %v738
  %768 = vmatprep.subr.mxu0 0.0
  %769 = vmatpush1.msra.mxu0 %v739
  %770 = vmatprep.subr.mxu0 0.0
  %771 = vmatpush1.msra.mxu0 %v740
  %772 = vmatprep.subr.mxu0 0.0
  %773 = vmatpush1.msra.mxu0 %v741
  %774 = vmatprep.subr.mxu0 0.0
  %775 = vmatpush1.msra.mxu0 %v742
  %776 = vmatprep.subr.mxu0 0.0
  %777 = vmatpush1.msra.mxu0 %v743
  %778 = vmatprep.subr.mxu0 0.0
  %779 = vmatpush1.msra.mxu0 %v744
  %780 = vmatprep.subr.mxu0 0.0
  %781 = vmatpush1.msra.mxu0 %v745
  %782 = vmatprep.subr.mxu0 0.0
  %783 = vmatpush1.msra.mxu0 %v746
  %784 = vmatprep.subr.mxu0 0.0
  %785 = vmatpush1.msra.mxu0 %v747
  %786 = vmatprep.subr.mxu0 0.0
  %787 = vmatpush1.msra.mxu0 %v748
  %788 = vmatprep.subr.mxu0 0.0
  %789 = vmatpush1.msra.mxu0 0.0
  %790 = vmatprep.subr.mxu0 0.0
  %791 = vmatpush1.msra.mxu0 0.0
  %792 = vmatprep.subr.mxu0 0.0
  %793 = vmatpush1.msra.mxu0 0.0
  %794 = vmatprep.subr.mxu0 0.0
  %795 = vmatpush1.msra.mxu0 0.0
  %796 = vmatprep.subr.mxu0 0.0
  %797 = vmatpush1.msra.mxu0 0.0
  %798 = vmatprep.subr.mxu0 0.0
  %799 = vmatpush1.msra.mxu0 0.0
  %800 = vmatprep.subr.mxu0 0.0
  %801 = vmatpush1.msra.mxu0 0.0
  %802 = vmatprep.subr.mxu0 0.0
  %803 = vmatpush1.msra.mxu0 0.0
  %804 = vmatprep.subr.mxu0 0.0
  %805 = vmatpush1.msra.mxu0 0.0
  %806 = vmatprep.subr.mxu0 0.0
  %807 = vmatpush1.msra.mxu0 0.0
  %808 = vmatprep.subr.mxu0 0.0
  %809 = vmatpush1.msra.mxu0 0.0
  %810 = vmatprep.subr.mxu0 0.0
  %811 = vmatpush1.msra.mxu0 0.0
  %812 = vmatprep.subr.mxu0 0.0
  %813 = vmatpush1.msra.mxu0 0.0
  %814 = vmatprep.subr.mxu0 0.0
  %815 = vmatpush1.msra.mxu0 0.0
  %816 = vmatprep.subr.mxu0 0.0
  %817 = vmatpush1.msra.mxu0 0.0
  %818 = vmatprep.subr.mxu0 0.0
  %819 = vmatpush1.msra.mxu0 0.0
  %820 = vmatprep.mubr.f32.mxu0 0.0
  %821 = vmatmul.mubr.f32.gmra.mrb[0].mxu0 %v670
  %v822 = vpop.f32.mrb[0].mxu0
  %v823 = vadd.f32 %v754, %v822
  %v824 = vpop.f32.mrb[0].mxu0
  %825 = vmatprep.mubr.f32.mxu0 0.0
  %826 = vmatmul.mubr.f32.gmra.mrb[0].mxu0 %v671
  %v827 = vpop.f32.mrb[0].mxu0
  %v828 = vadd.f32 %v754, %v827
  %v829 = vpop.f32.mrb[0].mxu0
  %830 = vmatprep.mubr.f32.mxu0 0.0
  %831 = vmatmul.mubr.f32.gmra.mrb[0].mxu0 %v672
  %v832 = vpop.f32.mrb[0].mxu0
  %v833 = vadd.f32 %v754, %v832
  %v834 = vpop.f32.mrb[0].mxu0
  %835 = vmatprep.mubr.f32.mxu0 0.0
  %836 = vmatmul.mubr.f32.gmra.mrb[0].mxu0 %v673
  %v837 = vpop.f32.mrb[0].mxu0
  %v838 = vadd.f32 %v754, %v837
  %v839 = vpop.f32.mrb[0].mxu0
  %840 = vmatprep.mubr.f32.mxu0 0.0
  %841 = vmatmul.mubr.f32.gmra.mrb[0].mxu0 %v674
  %v842 = vpop.f32.mrb[0].mxu0
  %v843 = vadd.f32 %v754, %v842
  %v844 = vpop.f32.mrb[0].mxu0
  %845 = vmatprep.mubr.f32.mxu0 0.0
  %846 = vmatmul.mubr.f32.gmra.mrb[0].mxu0 %v675
  %v847 = vpop.f32.mrb[0].mxu0
  %v848 = vadd.f32 %v754, %v847
  %v849 = vpop.f32.mrb[0].mxu0
  %850 = vmatprep.mubr.f32.mxu0 0.0
  %851 = vmatmul.mubr.f32.gmra.mrb[0].mxu0 %v676
  %v852 = vpop.f32.mrb[0].mxu0
  %v853 = vadd.f32 %v754, %v852
  %v854 = vpop.f32.mrb[0].mxu0
  %855 = vmatprep.mubr.f32.mxu0 0.0
  %856 = vmatmul.mubr.f32.gmra.mrb[0].mxu0 %v677
  %v857 = vpop.f32.mrb[0].mxu0
  %v858 = vadd.f32 %v754, %v857
  %v859 = vpop.f32.mrb[0].mxu0
  %860 = vmatprep.mubr.f32.mxu0 0.0
  %861 = vmatmul.mubr.f32.gmra.mrb[0].mxu0 %v678
  %v862 = vpop.f32.mrb[0].mxu0
  %v863 = vadd.f32 %v754, %v862
  %v864 = vpop.f32.mrb[0].mxu0
  %865 = vmatprep.mubr.f32.mxu0 0.0
  %866 = vmatmul.mubr.f32.gmra.mrb[0].mxu0 %v679
  %v867 = vpop.f32.mrb[0].mxu0
  %v868 = vadd.f32 %v754, %v867
  %v869 = vpop.f32.mrb[0].mxu0
  %870 = vmatprep.mubr.f32.mxu0 0.0
  %871 = vmatmul.mubr.f32.gmra.mrb[0].mxu0 %v680
  %v872 = vpop.f32.mrb[0].mxu0
  %v873 = vadd.f32 %v754, %v872
  %v874 = vpop.f32.mrb[0].mxu0
  %875 = vmatprep.mubr.f32.mxu0 0.0
  %876 = vmatmul.mubr.f32.gmra.mrb[0].mxu0 %v681
  %v877 = vpop.f32.mrb[0].mxu0
  %v878 = vadd.f32 %v754, %v877
  %v879 = vpop.f32.mrb[0].mxu0
  %880 = vmatprep.mubr.f32.mxu0 0.0
  %881 = vmatmul.mubr.f32.gmra.mrb[0].mxu0 %v682
  %v882 = vpop.f32.mrb[0].mxu0
  %v883 = vadd.f32 %v754, %v882
  %v884 = vpop.f32.mrb[0].mxu0
  %885 = vmatprep.mubr.f32.mxu0 0.0
  %886 = vmatmul.mubr.f32.gmra.mrb[0].mxu0 %v683
  %v887 = vpop.f32.mrb[0].mxu0
  %v888 = vadd.f32 %v754, %v887
  %v889 = vpop.f32.mrb[0].mxu0
  %890 = vmatprep.mubr.f32.mxu0 0.0
  %891 = vmatmul.mubr.f32.gmra.mrb[0].mxu0 %v684
  %v892 = vpop.f32.mrb[0].mxu0
  %v893 = vadd.f32 %v754, %v892
  %v894 = vpop.f32.mrb[0].mxu0
  %895 = vmatprep.mubr.f32.mxu0 0.0
  %896 = vmatmul.mubr.f32.gmra.mrb[0].mxu0 %v685
  %v897 = vpop.f32.mrb[0].mxu0
  %v898 = vadd.f32 %v754, %v897
  %v899 = vpop.f32.mrb[0].mxu0
  %900 = vmatprep.mubr.f32.mxu0 0.0
  %901 = vmatmul.mubr.f32.gmra.mrb[0].mxu0 %v686
  %v902 = vpop.f32.mrb[0].mxu0
  %v903 = vadd.f32 %v754, %v902
  %v904 = vpop.f32.mrb[0].mxu0
  %905 = vmatprep.mubr.f32.mxu0 0.0
  %906 = vmatmul.mubr.f32.gmra.mrb[0].mxu0 %v687
  %v907 = vpop.f32.mrb[0].mxu0
  %v908 = vadd.f32 %v754, %v907
  %v909 = vpop.f32.mrb[0].mxu0
  %910 = vmatprep.mubr.f32.mxu0 0.0
  %911 = vmatmul.mubr.f32.gmra.mrb[0].mxu0 %v688
  %v912 = vpop.f32.mrb[0].mxu0
  %v913 = vadd.f32 %v754, %v912
  %v914 = vpop.f32.mrb[0].mxu0
  %915 = vmatprep.mubr.f32.mxu0 0.0
  %916 = vmatmul.mubr.f32.gmra.mrb[0].mxu0 %v689
  %v917 = vpop.f32.mrb[0].mxu0
  %v918 = vadd.f32 %v754, %v917
  %v919 = vpop.f32.mrb[0].mxu0
  %920 = vmatprep.mubr.f32.mxu0 0.0
  %921 = vmatmul.mubr.f32.gmra.mrb[0].mxu0 %v690
  %v922 = vpop.f32.mrb[0].mxu0
  %v923 = vadd.f32 %v754, %v922
  %v924 = vpop.f32.mrb[0].mxu0
  %925 = vmatprep.mubr.f32.mxu0 0.0
  %926 = vmatmul.mubr.f32.gmra.mrb[0].mxu0 %v691
  %v927 = vpop.f32.mrb[0].mxu0
  %v928 = vadd.f32 %v754, %v927
  %v929 = vpop.f32.mrb[0].mxu0
  %930 = vmatprep.mubr.f32.mxu0 0.0
  %931 = vmatmul.mubr.f32.gmra.mrb[0].mxu0 %v692
  %v932 = vpop.f32.mrb[0].mxu0
  %v933 = vadd.f32 %v754, %v932
  %v934 = vpop.f32.mrb[0].mxu0
  %935 = vmatprep.mubr.f32.mxu0 0.0
  %936 = vmatmul.mubr.f32.gmra.mrb[0].mxu0 %v693
  %v937 = vpop.f32.mrb[0].mxu0
  %v938 = vadd.f32 %v754, %v937
  %v939 = vpop.f32.mrb[0].mxu0
  %940 = vmatprep.mubr.f32.mxu0 0.0
  %941 = vmatmul.mubr.f32.gmra.mrb[0].mxu0 %v694
  %v942 = vpop.f32.mrb[0].mxu0
  %v943 = vadd.f32 %v754, %v942
  %v944 = vpop.f32.mrb[0].mxu0
  %945 = vmatprep.mubr.f32.mxu0 0.0
  %946 = vmatmul.mubr.f32.gmra.mrb[0].mxu0 %v695
  %v947 = vpop.f32.mrb[0].mxu0
  %v948 = vadd.f32 %v754, %v947
  %v949 = vpop.f32.mrb[0].mxu0
  %950 = vmatprep.mubr.f32.mxu0 0.0
  %951 = vmatmul.mubr.f32.gmra.mrb[0].mxu0 %v696
  %v952 = vpop.f32.mrb[0].mxu0
  %v953 = vadd.f32 %v754, %v952
  %v954 = vpop.f32.mrb[0].mxu0
  %955 = vmatprep.mubr.f32.mxu0 0.0
  %956 = vmatmul.mubr.f32.gmra.mrb[0].mxu0 %v697
  %v957 = vpop.f32.mrb[0].mxu0
  %v958 = vadd.f32 %v754, %v957
  %v959 = vpop.f32.mrb[0].mxu0
  %960 = vmatprep.mubr.f32.mxu0 0.0
  %961 = vmatmul.mubr.f32.gmra.mrb[0].mxu0 %v698
  %v962 = vpop.f32.mrb[0].mxu0
  %v963 = vadd.f32 %v754, %v962
  %v964 = vpop.f32.mrb[0].mxu0
  %965 = vmatprep.mubr.f32.mxu0 0.0
  %966 = vmatmul.mubr.f32.gmra.mrb[0].mxu0 %v699
  %v967 = vpop.f32.mrb[0].mxu0
  %v968 = vadd.f32 %v754, %v967
  %v969 = vpop.f32.mrb[0].mxu0
  %970 = vmatprep.mubr.f32.mxu0 0.0
  %971 = vmatmul.mubr.f32.gmra.mrb[0].mxu0 %v700
  %v972 = vpop.f32.mrb[0].mxu0
  %v973 = vadd.f32 %v754, %v972
  %v974 = vpop.f32.mrb[0].mxu0
  %975 = vmatprep.mubr.f32.mxu0 0.0
  %976 = vmatmul.mubr.f32.gmra.mrb[0].mxu0 %v701
  %v977 = vpop.f32.mrb[0].mxu0
  %v978 = vadd.f32 %v754, %v977
  %v979 = vpop.f32.mrb[0].mxu0
  %980 = vmatprep.mubr.f32.mxu0 0.0
  %981 = vmatmul.mubr.f32.gmra.mrb[0].mxu0 %v702
  %v982 = vpop.f32.mrb[0].mxu0
  %v983 = vadd.f32 %v754, %v982
  %v984 = vpop.f32.mrb[0].mxu0
  %985 = vmatprep.mubr.f32.mxu0 0.0
  %986 = vmatmul.mubr.f32.gmra.mrb[0].mxu0 %v703
  %v987 = vpop.f32.mrb[0].mxu0
  %v988 = vadd.f32 %v754, %v987
  %v989 = vpop.f32.mrb[0].mxu0
  %990 = vmatprep.mubr.f32.mxu0 0.0
  %991 = vmatmul.mubr.f32.gmra.mrb[0].mxu0 %v704
  %v992 = vpop.f32.mrb[0].mxu0
  %v993 = vadd.f32 %v754, %v992
  %v994 = vpop.f32.mrb[0].mxu0
  %995 = vmatprep.mubr.f32.mxu0 0.0
  %996 = vmatmul.mubr.f32.gmra.mrb[0].mxu0 %v705
  %v997 = vpop.f32.mrb[0].mxu0
  %v998 = vadd.f32 %v754, %v997
  %v999 = vpop.f32.mrb[0].mxu0
  %1000 = vmatprep.mubr.f32.mxu0 0.0
  %1001 = vmatmul.mubr.f32.gmra.mrb[0].mxu0 %v706
  %v1002 = vpop.f32.mrb[0].mxu0
  %v1003 = vadd.f32 %v754, %v1002
  %v1004 = vpop.f32.mrb[0].mxu0
  %1005 = vmatprep.mubr.f32.mxu0 0.0
  %1006 = vmatmul.mubr.f32.gmra.mrb[0].mxu0 %v707
  %v1007 = vpop.f32.mrb[0].mxu0
  %v1008 = vadd.f32 %v754, %v1007
  %v1009 = vpop.f32.mrb[0].mxu0
  %1010 = vmatprep.mubr.f32.mxu0 0.0
  %1011 = vmatmul.mubr.f32.gmra.mrb[0].mxu0 %v708
  %v1012 = vpop.f32.mrb[0].mxu0
  %v1013 = vadd.f32 %v754, %v1012
  %v1014 = vpop.f32.mrb[0].mxu0
  %1015 = vmatprep.mubr.f32.mxu0 0.0
  %1016 = vmatmul.mubr.f32.gmra.mrb[0].mxu0 %v709
  %v1017 = vpop.f32.mrb[0].mxu0
  %v1018 = vadd.f32 %v754, %v1017
  %v1019 = vpop.f32.mrb[0].mxu0
  %1020 = vmatprep.mubr.f32.mxu0 0.0
  %1021 = vmatmul.mubr.f32.gmra.mrb[0].mxu0 %v710
  %v1022 = vpop.f32.mrb[0].mxu0
  %v1023 = vadd.f32 %v754, %v1022
  %v1024 = vpop.f32.mrb[0].mxu0
  %1025 = vmatprep.mubr.f32.mxu0 0.0
  %1026 = vmatmul.mubr.f32.gmra.mrb[0].mxu0 %v711
  %v1027 = vpop.f32.mrb[0].mxu0
  %v1028 = vadd.f32 %v754, %v1027
  %v1029 = vpop.f32.mrb[0].mxu0
  %1030 = vmatprep.mubr.f32.mxu0 0.0
  %1031 = vmatmul.mubr.f32.gmra.mrb[0].mxu0 %v712
  %v1032 = vpop.f32.mrb[0].mxu0
  %v1033 = vadd.f32 %v754, %v1032
  %v1034 = vpop.f32.mrb[0].mxu0
  %1035 = vmatprep.mubr.f32.mxu0 0.0
  %1036 = vmatmul.mubr.f32.gmra.mrb[0].mxu0 %v713
  %v1037 = vpop.f32.mrb[0].mxu0
  %v1038 = vadd.f32 %v754, %v1037
  %v1039 = vpop.f32.mrb[0].mxu0
  %1040 = vmatprep.mubr.f32.mxu0 0.0
  %1041 = vmatmul.mubr.f32.gmra.mrb[0].mxu0 %v714
  %v1042 = vpop.f32.mrb[0].mxu0
  %v1043 = vadd.f32 %v754, %v1042
  %v1044 = vpop.f32.mrb[0].mxu0
  %1045 = vmatprep.mubr.f32.mxu0 0.0
  %1046 = vmatmul.mubr.f32.gmra.mrb[0].mxu0 %v715
  %v1047 = vpop.f32.mrb[0].mxu0
  %v1048 = vadd.f32 %v754, %v1047
  %v1049 = vpop.f32.mrb[0].mxu0
  %1050 = vmatprep.mubr.f32.mxu0 0.0
  %1051 = vmatmul.mubr.f32.gmra.mrb[0].mxu0 %v716
  %v1052 = vpop.f32.mrb[0].mxu0
  %v1053 = vadd.f32 %v754, %v1052
  %v1054 = vpop.f32.mrb[0].mxu0
  %1055 = vmatprep.mubr.f32.mxu0 0.0
  %1056 = vmatmul.mubr.f32.gmra.mrb[0].mxu0 %v717
  %v1057 = vpop.f32.mrb[0].mxu0
  %v1058 = vadd.f32 %v754, %v1057
  %v1059 = vpop.f32.mrb[0].mxu0
  %1060 = vmatprep.mubr.f32.mxu0 0.0
  %1061 = vmatmul.mubr.f32.gmra.mrb[0].mxu0 %v718
  %v1062 = vpop.f32.mrb[0].mxu0
  %v1063 = vadd.f32 %v754, %v1062
  %v1064 = vpop.f32.mrb[0].mxu0
  %1065 = vmatprep.mubr.f32.mxu0 0.0
  %1066 = vmatmul.mubr.f32.gmra.mrb[0].mxu0 %v719
  %v1067 = vpop.f32.mrb[0].mxu0
  %v1068 = vadd.f32 %v754, %v1067
  %v1069 = vpop.f32.mrb[0].mxu0
  %1070 = vmatprep.mubr.f32.mxu0 0.0
  %1071 = vmatmul.mubr.f32.gmra.mrb[0].mxu0 %v720
  %v1072 = vpop.f32.mrb[0].mxu0
  %v1073 = vadd.f32 %v754, %v1072
  %v1074 = vpop.f32.mrb[0].mxu0
  %1075 = vmatprep.mubr.f32.mxu0 0.0
  %1076 = vmatmul.mubr.f32.gmra.mrb[0].mxu0 %v721
  %v1077 = vpop.f32.mrb[0].mxu0
  %v1078 = vadd.f32 %v754, %v1077
  %v1079 = vpop.f32.mrb[0].mxu0
  %1080 = vmatprep.mubr.f32.mxu0 0.0
  %1081 = vmatmul.mubr.f32.gmra.mrb[0].mxu0 %v722
  %v1082 = vpop.f32.mrb[0].mxu0
  %v1083 = vadd.f32 %v754, %v1082
  %v1084 = vpop.f32.mrb[0].mxu0
  %1085 = vmatprep.mubr.f32.mxu0 0.0
  %1086 = vmatmul.mubr.f32.gmra.mrb[0].mxu0 %v723
  %v1087 = vpop.f32.mrb[0].mxu0
  %v1088 = vadd.f32 %v754, %v1087
  %v1089 = vpop.f32.mrb[0].mxu0
  %1090 = vmatprep.mubr.f32.mxu0 0.0
  %1091 = vmatmul.mubr.f32.gmra.mrb[0].mxu0 %v724
  %v1092 = vpop.f32.mrb[0].mxu0
  %v1093 = vadd.f32 %v754, %v1092
  %v1094 = vpop.f32.mrb[0].mxu0
  %1095 = vmatprep.mubr.f32.mxu0 0.0
  %1096 = vmatmul.mubr.f32.gmra.mrb[0].mxu0 %v725
  %v1097 = vpop.f32.mrb[0].mxu0
  %v1098 = vadd.f32 %v754, %v1097
  %v1099 = vpop.f32.mrb[0].mxu0
  %1100 = vmatprep.mubr.f32.mxu0 0.0
  %1101 = vmatmul.mubr.f32.gmra.mrb[0].mxu0 %v726
  %v1102 = vpop.f32.mrb[0].mxu0
  %v1103 = vadd.f32 %v754, %v1102
  %v1104 = vpop.f32.mrb[0].mxu0
  %1105 = vmatprep.mubr.f32.mxu0 0.0
  %1106 = vmatmul.mubr.f32.gmra.mrb[0].mxu0 %v727
  %v1107 = vpop.f32.mrb[0].mxu0
  %v1108 = vadd.f32 %v754, %v1107
  %v1109 = vpop.f32.mrb[0].mxu0
  %1110 = vmatprep.mubr.f32.mxu0 0.0
  %1111 = vmatmul.mubr.f32.gmra.mrb[0].mxu0 %v728
  %v1112 = vpop.f32.mrb[0].mxu0
  %v1113 = vadd.f32 %v754, %v1112
  %v1114 = vpop.f32.mrb[0].mxu0
  %1115 = vmatprep.mubr.f32.mxu0 0.0
  %1116 = vmatmul.mubr.f32.gmra.mrb[0].mxu0 %v729
  %v1117 = vpop.f32.mrb[0].mxu0
  %v1118 = vadd.f32 %v754, %v1117
  %v1119 = vpop.f32.mrb[0].mxu0
  %1120 = vmatprep.mubr.f32.mxu0 0.0
  %1121 = vmatmul.mubr.f32.gmra.mrb[0].mxu0 %v730
  %v1122 = vpop.f32.mrb[0].mxu0
  %v1123 = vadd.f32 %v754, %v1122
  %v1124 = vpop.f32.mrb[0].mxu0
  %1125 = vmatprep.mubr.f32.mxu0 0.0
  %1126 = vmatmul.mubr.f32.gmra.mrb[0].mxu0 %v731
  %v1127 = vpop.f32.mrb[0].mxu0
  %v1128 = vadd.f32 %v754, %v1127
  %v1129 = vpop.f32.mrb[0].mxu0
  %1130 = vmatprep.mubr.f32.mxu0 0.0
  %1131 = vmatmul.mubr.f32.gmra.mrb[0].mxu0 %v732
  %v1132 = vpop.f32.mrb[0].mxu0
  %v1133 = vadd.f32 %v754, %v1132
  %v1134 = vpop.f32.mrb[0].mxu0
  %1135 = vdwg.mxu0
  %v1136 = vtanh.pop %v823
  %v1137 = vtanh.pop %v828
  %v1138 = vtanh.pop %v833
  %v1139 = vtanh.pop %v838
  %v1140 = vtanh.pop %v843
  %v1141 = vtanh.pop %v848
  %v1142 = vtanh.pop %v853
  %v1143 = vtanh.pop %v858
  %v1144 = vtanh.pop %v863
  %v1145 = vtanh.pop %v868
  %v1146 = vtanh.pop %v873
  %v1147 = vtanh.pop %v878
  %v1148 = vtanh.pop %v883
  %v1149 = vtanh.pop %v888
  %v1150 = vtanh.pop %v893
  %v1151 = vtanh.pop %v898
  %v1152 = vtanh.pop %v903
  %v1153 = vtanh.pop %v908
  %v1154 = vtanh.pop %v913
  %v1155 = vtanh.pop %v918
  %v1156 = vtanh.pop %v923
  %v1157 = vtanh.pop %v928
  %v1158 = vtanh.pop %v933
  %v1159 = vtanh.pop %v938
  %v1160 = vtanh.pop %v943
  %v1161 = vtanh.pop %v948
  %v1162 = vtanh.pop %v953
  %v1163 = vtanh.pop %v958
  %v1164 = vtanh.pop %v963
  %v1165 = vtanh.pop %v968
  %v1166 = vtanh.pop %v973
  %v1167 = vtanh.pop %v978
  %v1168 = vtanh.pop %v983
  %v1169 = vtanh.pop %v988
  %v1170 = vtanh.pop %v993
  %v1171 = vtanh.pop %v998
  %v1172 = vtanh.pop %v1003
  %v1173 = vtanh.pop %v1008
  %v1174 = vtanh.pop %v1013
  %v1175 = vtanh.pop %v1018
  %v1176 = vtanh.pop %v1023
  %v1177 = vtanh.pop %v1028
  %v1178 = vtanh.pop %v1033
  %v1179 = vtanh.pop %v1038
  %v1180 = vtanh.pop %v1043
  %v1181 = vtanh.pop %v1048
  %v1182 = vtanh.pop %v1053
  %v1183 = vtanh.pop %v1058
  %v1184 = vtanh.pop %v1063
  %v1185 = vtanh.pop %v1068
  %v1186 = vtanh.pop %v1073
  %v1187 = vtanh.pop %v1078
  %v1188 = vtanh.pop %v1083
  %v1189 = vtanh.pop %v1088
  %v1190 = vtanh.pop %v1093
  %v1191 = vtanh.pop %v1098
  %v1192 = vtanh.pop %v1103
  %v1193 = vtanh.pop %v1108
  %v1194 = vtanh.pop %v1113
  %v1195 = vtanh.pop %v1118
  %v1196 = vtanh.pop %v1123
  %v1197 = vtanh.pop %v1128
  %v1198 = vtanh.pop %v1133
  %v1199 = vld [vmem:[%s5] sm:$0xff]
  %v1200 = vld [vmem:[%s5 + $0x8] sm:$0xff]
  %v1201 = vld [vmem:[%s5 + $0x10] sm:$0xff]
  %v1202 = vld [vmem:[%s5 + $0x18] sm:$0xff]
  %v1203 = vld [vmem:[%s5 + $0x20] sm:$0xff]
  %v1204 = vld [vmem:[%s5 + $0x28] sm:$0xff]
  %v1205 = vld [vmem:[%s5 + $0x30] sm:$0xff]
  %v1206 = vld [vmem:[%s5 + $0x38] sm:$0xff]
  %v1207 = vld [vmem:[%s5 + $0x40] sm:$0xff]
  %v1208 = vld [vmem:[%s5 + $0x48] sm:$0xff]
  %v1209 = vld [vmem:[%s5 + $0x50] sm:$0xff]
  %v1210 = vld [vmem:[%s5 + $0x58] sm:$0xff]
  %v1211 = vld [vmem:[%s5 + $0x60] sm:$0xff]
  %v1212 = vld [vmem:[%s5 + $0x68] sm:$0xff]
  %v1213 = vld [vmem:[%s5 + $0x70] sm:$0xff]
  %v1214 = vld [vmem:[%s5 + $0x78] sm:$0xff]
  %v1215 = vld [vmem:[%s6] sm:$0x1]
  %v1217 = vlaneseq
  %v1218 = vshrl.u32 %v1217, 7
  %v1219 = vsub.s32 0, %v1218
  %v1220 = vrot.slane %v1215, %v1219
  %1222 = vmatprep.subr.mxu0 0.0
  %1223 = vmatpush1.msra.mxu0 %v1199
  %1224 = vmatprep.subr.mxu0 0.0
  %1225 = vmatpush1.msra.mxu0 %v1200
  %1226 = vmatprep.subr.mxu0 0.0
  %1227 = vmatpush1.msra.mxu0 %v1201
  %1228 = vmatprep.subr.mxu0 0.0
  %1229 = vmatpush1.msra.mxu0 %v1202
  %1230 = vmatprep.subr.mxu0 0.0
  %1231 = vmatpush1.msra.mxu0 %v1203
  %1232 = vmatprep.subr.mxu0 0.0
  %1233 = vmatpush1.msra.mxu0 %v1204
  %1234 = vmatprep.subr.mxu0 0.0
  %1235 = vmatpush1.msra.mxu0 %v1205
  %1236 = vmatprep.subr.mxu0 0.0
  %1237 = vmatpush1.msra.mxu0 %v1206
  %1238 = vmatprep.subr.mxu0 0.0
  %1239 = vmatpush1.msra.mxu0 %v1207
  %1240 = vmatprep.subr.mxu0 0.0
  %1241 = vmatpush1.msra.mxu0 %v1208
  %1242 = vmatprep.subr.mxu0 0.0
  %1243 = vmatpush1.msra.mxu0 %v1209
  %1244 = vmatprep.subr.mxu0 0.0
  %1245 = vmatpush1.msra.mxu0 %v1210
  %1246 = vmatprep.subr.mxu0 0.0
  %1247 = vmatpush1.msra.mxu0 %v1211
  %1248 = vmatprep.subr.mxu0 0.0
  %1249 = vmatpush1.msra.mxu0 %v1212
  %1250 = vmatprep.subr.mxu0 0.0
  %1251 = vmatpush1.msra.mxu0 %v1213
  %1252 = vmatprep.subr.mxu0 0.0
  %1253 = vmatpush1.msra.mxu0 %v1214
  %1254 = vmatprep.subr.mxu0 0.0
  %1255 = vmatpush1.msra.mxu0 0.0
  %1256 = vmatprep.subr.mxu0 0.0
  %1257 = vmatpush1.msra.mxu0 0.0
  %1258 = vmatprep.subr.mxu0 0.0
  %1259 = vmatpush1.msra.mxu0 0.0
  %1260 = vmatprep.subr.mxu0 0.0
  %1261 = vmatpush1.msra.mxu0 0.0
  %1262 = vmatprep.subr.mxu0 0.0
  %1263 = vmatpush1.msra.mxu0 0.0
  %1264 = vmatprep.subr.mxu0 0.0
  %1265 = vmatpush1.msra.mxu0 0.0
  %1266 = vmatprep.subr.mxu0 0.0
  %1267 = vmatpush1.msra.mxu0 0.0
  %1268 = vmatprep.subr.mxu0 0.0
  %1269 = vmatpush1.msra.mxu0 0.0
  %1270 = vmatprep.subr.mxu0 0.0
  %1271 = vmatpush1.msra.mxu0 0.0
  %1272 = vmatprep.subr.mxu0 0.0
  %1273 = vmatpush1.msra.mxu0 0.0
  %1274 = vmatprep.subr.mxu0 0.0
  %1275 = vmatpush1.msra.mxu0 0.0
  %1276 = vmatprep.subr.mxu0 0.0
  %1277 = vmatpush1.msra.mxu0 0.0
  %1278 = vmatprep.subr.mxu0 0.0
  %1279 = vmatpush1.msra.mxu0 0.0
  %1280 = vmatprep.subr.mxu0 0.0
  %1281 = vmatpush1.msra.mxu0 0.0
  %1282 = vmatprep.subr.mxu0 0.0
  %1283 = vmatpush1.msra.mxu0 0.0
  %1284 = vmatprep.subr.mxu0 0.0
  %1285 = vmatpush1.msra.mxu0 0.0
  %1286 = vmatprep.mubr.f32.mxu0 0.0
  %1287 = vmatmul.mubr.f32.gmra.mrb[0].mxu0 %v1136
  %v1288 = vpop.f32.mrb[0].mxu0
  %v1289 = vadd.f32 %v1220, %v1288
  %v1290 = vpop.f32.mrb[0].mxu0
  %1291 = vmatprep.mubr.f32.mxu0 0.0
  %1292 = vmatmul.mubr.f32.gmra.mrb[0].mxu0 %v1137
  %v1293 = vpop.f32.mrb[0].mxu0
  %v1294 = vadd.f32 %v1220, %v1293
  %v1295 = vpop.f32.mrb[0].mxu0
  %1296 = vmatprep.mubr.f32.mxu0 0.0
  %1297 = vmatmul.mubr.f32.gmra.mrb[0].mxu0 %v1138
  %v1298 = vpop.f32.mrb[0].mxu0
  %v1299 = vadd.f32 %v1220, %v1298
  %v1300 = vpop.f32.mrb[0].mxu0
  %1301 = vmatprep.mubr.f32.mxu0 0.0
  %1302 = vmatmul.mubr.f32.gmra.mrb[0].mxu0 %v1139
  %v1303 = vpop.f32.mrb[0].mxu0
  %v1304 = vadd.f32 %v1220, %v1303
  %v1305 = vpop.f32.mrb[0].mxu0
  %1306 = vmatprep.mubr.f32.mxu0 0.0
  %1307 = vmatmul.mubr.f32.gmra.mrb[0].mxu0 %v1140
  %v1308 = vpop.f32.mrb[0].mxu0
  %v1309 = vadd.f32 %v1220, %v1308
  %v1310 = vpop.f32.mrb[0].mxu0
  %1311 = vmatprep.mubr.f32.mxu0 0.0
  %1312 = vmatmul.mubr.f32.gmra.mrb[0].mxu0 %v1141
  %v1313 = vpop.f32.mrb[0].mxu0
  %v1314 = vadd.f32 %v1220, %v1313
  %v1315 = vpop.f32.mrb[0].mxu0
  %1316 = vmatprep.mubr.f32.mxu0 0.0
  %1317 = vmatmul.mubr.f32.gmra.mrb[0].mxu0 %v1142
  %v1318 = vpop.f32.mrb[0].mxu0
  %v1319 = vadd.f32 %v1220, %v1318
  %v1320 = vpop.f32.mrb[0].mxu0
  %1321 = vmatprep.mubr.f32.mxu0 0.0
  %1322 = vmatmul.mubr.f32.gmra.mrb[0].mxu0 %v1143
  %v1323 = vpop.f32.mrb[0].mxu0
  %v1324 = vadd.f32 %v1220, %v1323
  %v1325 = vpop.f32.mrb[0].mxu0
  %1326 = vmatprep.mubr.f32.mxu0 0.0
  %1327 = vmatmul.mubr.f32.gmra.mrb[0].mxu0 %v1144
  %v1328 = vpop.f32.mrb[0].mxu0
  %v1329 = vadd.f32 %v1220, %v1328
  %v1330 = vpop.f32.mrb[0].mxu0
  %1331 = vmatprep.mubr.f32.mxu0 0.0
  %1332 = vmatmul.mubr.f32.gmra.mrb[0].mxu0 %v1145
  %v1333 = vpop.f32.mrb[0].mxu0
  %v1334 = vadd.f32 %v1220, %v1333
  %v1335 = vpop.f32.mrb[0].mxu0
  %1336 = vmatprep.mubr.f32.mxu0 0.0
  %1337 = vmatmul.mubr.f32.gmra.mrb[0].mxu0 %v1146
  %v1338 = vpop.f32.mrb[0].mxu0
  %v1339 = vadd.f32 %v1220, %v1338
  %v1340 = vpop.f32.mrb[0].mxu0
  %1341 = vmatprep.mubr.f32.mxu0 0.0
  %1342 = vmatmul.mubr.f32.gmra.mrb[0].mxu0 %v1147
  %v1343 = vpop.f32.mrb[0].mxu0
  %v1344 = vadd.f32 %v1220, %v1343
  %v1345 = vpop.f32.mrb[0].mxu0
  %1346 = vmatprep.mubr.f32.mxu0 0.0
  %1347 = vmatmul.mubr.f32.gmra.mrb[0].mxu0 %v1148
  %v1348 = vpop.f32.mrb[0].mxu0
  %v1349 = vadd.f32 %v1220, %v1348
  %v1350 = vpop.f32.mrb[0].mxu0
  %1351 = vmatprep.mubr.f32.mxu0 0.0
  %1352 = vmatmul.mubr.f32.gmra.mrb[0].mxu0 %v1149
  %v1353 = vpop.f32.mrb[0].mxu0
  %v1354 = vadd.f32 %v1220, %v1353
  %v1355 = vpop.f32.mrb[0].mxu0
  %1356 = vmatprep.mubr.f32.mxu0 0.0
  %1357 = vmatmul.mubr.f32.gmra.mrb[0].mxu0 %v1150
  %v1358 = vpop.f32.mrb[0].mxu0
  %v1359 = vadd.f32 %v1220, %v1358
  %v1360 = vpop.f32.mrb[0].mxu0
  %1361 = vmatprep.mubr.f32.mxu0 0.0
  %1362 = vmatmul.mubr.f32.gmra.mrb[0].mxu0 %v1151
  %v1363 = vpop.f32.mrb[0].mxu0
  %v1364 = vadd.f32 %v1220, %v1363
  %v1365 = vpop.f32.mrb[0].mxu0
  %1366 = vmatprep.mubr.f32.mxu0 0.0
  %1367 = vmatmul.mubr.f32.gmra.mrb[0].mxu0 %v1152
  %v1368 = vpop.f32.mrb[0].mxu0
  %v1369 = vadd.f32 %v1220, %v1368
  %v1370 = vpop.f32.mrb[0].mxu0
  %1371 = vmatprep.mubr.f32.mxu0 0.0
  %1372 = vmatmul.mubr.f32.gmra.mrb[0].mxu0 %v1153
  %v1373 = vpop.f32.mrb[0].mxu0
  %v1374 = vadd.f32 %v1220, %v1373
  %v1375 = vpop.f32.mrb[0].mxu0
  %1376 = vmatprep.mubr.f32.mxu0 0.0
  %1377 = vmatmul.mubr.f32.gmra.mrb[0].mxu0 %v1154
  %v1378 = vpop.f32.mrb[0].mxu0
  %v1379 = vadd.f32 %v1220, %v1378
  %v1380 = vpop.f32.mrb[0].mxu0
  %1381 = vmatprep.mubr.f32.mxu0 0.0
  %1382 = vmatmul.mubr.f32.gmra.mrb[0].mxu0 %v1155
  %v1383 = vpop.f32.mrb[0].mxu0
  %v1384 = vadd.f32 %v1220, %v1383
  %v1385 = vpop.f32.mrb[0].mxu0
  %1386 = vmatprep.mubr.f32.mxu0 0.0
  %1387 = vmatmul.mubr.f32.gmra.mrb[0].mxu0 %v1156
  %v1388 = vpop.f32.mrb[0].mxu0
  %v1389 = vadd.f32 %v1220, %v1388
  %v1390 = vpop.f32.mrb[0].mxu0
  %1391 = vmatprep.mubr.f32.mxu0 0.0
  %1392 = vmatmul.mubr.f32.gmra.mrb[0].mxu0 %v1157
  %v1393 = vpop.f32.mrb[0].mxu0
  %v1394 = vadd.f32 %v1220, %v1393
  %v1395 = vpop.f32.mrb[0].mxu0
  %1396 = vmatprep.mubr.f32.mxu0 0.0
  %1397 = vmatmul.mubr.f32.gmra.mrb[0].mxu0 %v1158
  %v1398 = vpop.f32.mrb[0].mxu0
  %v1399 = vadd.f32 %v1220, %v1398
  %v1400 = vpop.f32.mrb[0].mxu0
  %1401 = vmatprep.mubr.f32.mxu0 0.0
  %1402 = vmatmul.mubr.f32.gmra.mrb[0].mxu0 %v1159
  %v1403 = vpop.f32.mrb[0].mxu0
  %v1404 = vadd.f32 %v1220, %v1403
  %v1405 = vpop.f32.mrb[0].mxu0
  %1406 = vmatprep.mubr.f32.mxu0 0.0
  %1407 = vmatmul.mubr.f32.gmra.mrb[0].mxu0 %v1160
  %v1408 = vpop.f32.mrb[0].mxu0
  %v1409 = vadd.f32 %v1220, %v1408
  %v1410 = vpop.f32.mrb[0].mxu0
  %1411 = vmatprep.mubr.f32.mxu0 0.0
  %1412 = vmatmul.mubr.f32.gmra.mrb[0].mxu0 %v1161
  %v1413 = vpop.f32.mrb[0].mxu0
  %v1414 = vadd.f32 %v1220, %v1413
  %v1415 = vpop.f32.mrb[0].mxu0
  %1416 = vmatprep.mubr.f32.mxu0 0.0
  %1417 = vmatmul.mubr.f32.gmra.mrb[0].mxu0 %v1162
  %v1418 = vpop.f32.mrb[0].mxu0
  %v1419 = vadd.f32 %v1220, %v1418
  %v1420 = vpop.f32.mrb[0].mxu0
  %1421 = vmatprep.mubr.f32.mxu0 0.0
  %1422 = vmatmul.mubr.f32.gmra.mrb[0].mxu0 %v1163
  %v1423 = vpop.f32.mrb[0].mxu0
  %v1424 = vadd.f32 %v1220, %v1423
  %v1425 = vpop.f32.mrb[0].mxu0
  %1426 = vmatprep.mubr.f32.mxu0 0.0
  %1427 = vmatmul.mubr.f32.gmra.mrb[0].mxu0 %v1164
  %v1428 = vpop.f32.mrb[0].mxu0
  %v1429 = vadd.f32 %v1220, %v1428
  %v1430 = vpop.f32.mrb[0].mxu0
  %1431 = vmatprep.mubr.f32.mxu0 0.0
  %1432 = vmatmul.mubr.f32.gmra.mrb[0].mxu0 %v1165
  %v1433 = vpop.f32.mrb[0].mxu0
  %v1434 = vadd.f32 %v1220, %v1433
  %v1435 = vpop.f32.mrb[0].mxu0
  %1436 = vmatprep.mubr.f32.mxu0 0.0
  %1437 = vmatmul.mubr.f32.gmra.mrb[0].mxu0 %v1166
  %v1438 = vpop.f32.mrb[0].mxu0
  %v1439 = vadd.f32 %v1220, %v1438
  %v1440 = vpop.f32.mrb[0].mxu0
  %1441 = vmatprep.mubr.f32.mxu0 0.0
  %1442 = vmatmul.mubr.f32.gmra.mrb[0].mxu0 %v1167
  %v1443 = vpop.f32.mrb[0].mxu0
  %v1444 = vadd.f32 %v1220, %v1443
  %v1445 = vpop.f32.mrb[0].mxu0
  %1446 = vmatprep.mubr.f32.mxu0 0.0
  %1447 = vmatmul.mubr.f32.gmra.mrb[0].mxu0 %v1168
  %v1448 = vpop.f32.mrb[0].mxu0
  %v1449 = vadd.f32 %v1220, %v1448
  %v1450 = vpop.f32.mrb[0].mxu0
  %1451 = vmatprep.mubr.f32.mxu0 0.0
  %1452 = vmatmul.mubr.f32.gmra.mrb[0].mxu0 %v1169
  %v1453 = vpop.f32.mrb[0].mxu0
  %v1454 = vadd.f32 %v1220, %v1453
  %v1455 = vpop.f32.mrb[0].mxu0
  %1456 = vmatprep.mubr.f32.mxu0 0.0
  %1457 = vmatmul.mubr.f32.gmra.mrb[0].mxu0 %v1170
  %v1458 = vpop.f32.mrb[0].mxu0
  %v1459 = vadd.f32 %v1220, %v1458
  %v1460 = vpop.f32.mrb[0].mxu0
  %1461 = vmatprep.mubr.f32.mxu0 0.0
  %1462 = vmatmul.mubr.f32.gmra.mrb[0].mxu0 %v1171
  %v1463 = vpop.f32.mrb[0].mxu0
  %v1464 = vadd.f32 %v1220, %v1463
  %v1465 = vpop.f32.mrb[0].mxu0
  %1466 = vmatprep.mubr.f32.mxu0 0.0
  %1467 = vmatmul.mubr.f32.gmra.mrb[0].mxu0 %v1172
  %v1468 = vpop.f32.mrb[0].mxu0
  %v1469 = vadd.f32 %v1220, %v1468
  %v1470 = vpop.f32.mrb[0].mxu0
  %1471 = vmatprep.mubr.f32.mxu0 0.0
  %1472 = vmatmul.mubr.f32.gmra.mrb[0].mxu0 %v1173
  %v1473 = vpop.f32.mrb[0].mxu0
  %v1474 = vadd.f32 %v1220, %v1473
  %v1475 = vpop.f32.mrb[0].mxu0
  %1476 = vmatprep.mubr.f32.mxu0 0.0
  %1477 = vmatmul.mubr.f32.gmra.mrb[0].mxu0 %v1174
  %v1478 = vpop.f32.mrb[0].mxu0
  %v1479 = vadd.f32 %v1220, %v1478
  %v1480 = vpop.f32.mrb[0].mxu0
  %1481 = vmatprep.mubr.f32.mxu0 0.0
  %1482 = vmatmul.mubr.f32.gmra.mrb[0].mxu0 %v1175
  %v1483 = vpop.f32.mrb[0].mxu0
  %v1484 = vadd.f32 %v1220, %v1483
  %v1485 = vpop.f32.mrb[0].mxu0
  %1486 = vmatprep.mubr.f32.mxu0 0.0
  %1487 = vmatmul.mubr.f32.gmra.mrb[0].mxu0 %v1176
  %v1488 = vpop.f32.mrb[0].mxu0
  %v1489 = vadd.f32 %v1220, %v1488
  %v1490 = vpop.f32.mrb[0].mxu0
  %1491 = vmatprep.mubr.f32.mxu0 0.0
  %1492 = vmatmul.mubr.f32.gmra.mrb[0].mxu0 %v1177
  %v1493 = vpop.f32.mrb[0].mxu0
  %v1494 = vadd.f32 %v1220, %v1493
  %v1495 = vpop.f32.mrb[0].mxu0
  %1496 = vmatprep.mubr.f32.mxu0 0.0
  %1497 = vmatmul.mubr.f32.gmra.mrb[0].mxu0 %v1178
  %v1498 = vpop.f32.mrb[0].mxu0
  %v1499 = vadd.f32 %v1220, %v1498
  %v1500 = vpop.f32.mrb[0].mxu0
  %1501 = vmatprep.mubr.f32.mxu0 0.0
  %1502 = vmatmul.mubr.f32.gmra.mrb[0].mxu0 %v1179
  %v1503 = vpop.f32.mrb[0].mxu0
  %v1504 = vadd.f32 %v1220, %v1503
  %v1505 = vpop.f32.mrb[0].mxu0
  %1506 = vmatprep.mubr.f32.mxu0 0.0
  %1507 = vmatmul.mubr.f32.gmra.mrb[0].mxu0 %v1180
  %v1508 = vpop.f32.mrb[0].mxu0
  %v1509 = vadd.f32 %v1220, %v1508
  %v1510 = vpop.f32.mrb[0].mxu0
  %1511 = vmatprep.mubr.f32.mxu0 0.0
  %1512 = vmatmul.mubr.f32.gmra.mrb[0].mxu0 %v1181
  %v1513 = vpop.f32.mrb[0].mxu0
  %v1514 = vadd.f32 %v1220, %v1513
  %v1515 = vpop.f32.mrb[0].mxu0
  %1516 = vmatprep.mubr.f32.mxu0 0.0
  %1517 = vmatmul.mubr.f32.gmra.mrb[0].mxu0 %v1182
  %v1518 = vpop.f32.mrb[0].mxu0
  %v1519 = vadd.f32 %v1220, %v1518
  %v1520 = vpop.f32.mrb[0].mxu0
  %1521 = vmatprep.mubr.f32.mxu0 0.0
  %1522 = vmatmul.mubr.f32.gmra.mrb[0].mxu0 %v1183
  %v1523 = vpop.f32.mrb[0].mxu0
  %v1524 = vadd.f32 %v1220, %v1523
  %v1525 = vpop.f32.mrb[0].mxu0
  %1526 = vmatprep.mubr.f32.mxu0 0.0
  %1527 = vmatmul.mubr.f32.gmra.mrb[0].mxu0 %v1184
  %v1528 = vpop.f32.mrb[0].mxu0
  %v1529 = vadd.f32 %v1220, %v1528
  %v1530 = vpop.f32.mrb[0].mxu0
  %1531 = vmatprep.mubr.f32.mxu0 0.0
  %1532 = vmatmul.mubr.f32.gmra.mrb[0].mxu0 %v1185
  %v1533 = vpop.f32.mrb[0].mxu0
  %v1534 = vadd.f32 %v1220, %v1533
  %v1535 = vpop.f32.mrb[0].mxu0
  %1536 = vmatprep.mubr.f32.mxu0 0.0
  %1537 = vmatmul.mubr.f32.gmra.mrb[0].mxu0 %v1186
  %v1538 = vpop.f32.mrb[0].mxu0
  %v1539 = vadd.f32 %v1220, %v1538
  %v1540 = vpop.f32.mrb[0].mxu0
  %1541 = vmatprep.mubr.f32.mxu0 0.0
  %1542 = vmatmul.mubr.f32.gmra.mrb[0].mxu0 %v1187
  %v1543 = vpop.f32.mrb[0].mxu0
  %v1544 = vadd.f32 %v1220, %v1543
  %v1545 = vpop.f32.mrb[0].mxu0
  %1546 = vmatprep.mubr.f32.mxu0 0.0
  %1547 = vmatmul.mubr.f32.gmra.mrb[0].mxu0 %v1188
  %v1548 = vpop.f32.mrb[0].mxu0
  %v1549 = vadd.f32 %v1220, %v1548
  %v1550 = vpop.f32.mrb[0].mxu0
  %1551 = vmatprep.mubr.f32.mxu0 0.0
  %1552 = vmatmul.mubr.f32.gmra.mrb[0].mxu0 %v1189
  %v1553 = vpop.f32.mrb[0].mxu0
  %v1554 = vadd.f32 %v1220, %v1553
  %v1555 = vpop.f32.mrb[0].mxu0
  %1556 = vmatprep.mubr.f32.mxu0 0.0
  %1557 = vmatmul.mubr.f32.gmra.mrb[0].mxu0 %v1190
  %v1558 = vpop.f32.mrb[0].mxu0
  %v1559 = vadd.f32 %v1220, %v1558
  %v1560 = vpop.f32.mrb[0].mxu0
  %1561 = vmatprep.mubr.f32.mxu0 0.0
  %1562 = vmatmul.mubr.f32.gmra.mrb[0].mxu0 %v1191
  %v1563 = vpop.f32.mrb[0].mxu0
  %v1564 = vadd.f32 %v1220, %v1563
  %v1565 = vpop.f32.mrb[0].mxu0
  %1566 = vmatprep.mubr.f32.mxu0 0.0
  %1567 = vmatmul.mubr.f32.gmra.mrb[0].mxu0 %v1192
  %v1568 = vpop.f32.mrb[0].mxu0
  %v1569 = vadd.f32 %v1220, %v1568
  %v1570 = vpop.f32.mrb[0].mxu0
  %1571 = vmatprep.mubr.f32.mxu0 0.0
  %1572 = vmatmul.mubr.f32.gmra.mrb[0].mxu0 %v1193
  %v1573 = vpop.f32.mrb[0].mxu0
  %v1574 = vadd.f32 %v1220, %v1573
  %v1575 = vpop.f32.mrb[0].mxu0
  %1576 = vmatprep.mubr.f32.mxu0 0.0
  %1577 = vmatmul.mubr.f32.gmra.mrb[0].mxu0 %v1194
  %v1578 = vpop.f32.mrb[0].mxu0
  %v1579 = vadd.f32 %v1220, %v1578
  %v1580 = vpop.f32.mrb[0].mxu0
  %1581 = vmatprep.mubr.f32.mxu0 0.0
  %1582 = vmatmul.mubr.f32.gmra.mrb[0].mxu0 %v1195
  %v1583 = vpop.f32.mrb[0].mxu0
  %v1584 = vadd.f32 %v1220, %v1583
  %v1585 = vpop.f32.mrb[0].mxu0
  %1586 = vmatprep.mubr.f32.mxu0 0.0
  %1587 = vmatmul.mubr.f32.gmra.mrb[0].mxu0 %v1196
  %v1588 = vpop.f32.mrb[0].mxu0
  %v1589 = vadd.f32 %v1220, %v1588
  %v1590 = vpop.f32.mrb[0].mxu0
  %1591 = vmatprep.mubr.f32.mxu0 0.0
  %1592 = vmatmul.mubr.f32.gmra.mrb[0].mxu0 %v1197
  %v1593 = vpop.f32.mrb[0].mxu0
  %v1594 = vadd.f32 %v1220, %v1593
  %v1595 = vpop.f32.mrb[0].mxu0
  %1596 = vmatprep.mubr.f32.mxu0 0.0
  %1597 = vmatmul.mubr.f32.gmra.mrb[0].mxu0 %v1198
  %v1598 = vpop.f32.mrb[0].mxu0
  %v1599 = vadd.f32 %v1220, %v1598
  %v1600 = vpop.f32.mrb[0].mxu0
  %1601 = vdwg.mxu0
  %v1602 = vxor.u32 %v1289, 2147483648
  %v1603 = vxor.u32 %v1294, 2147483648
  %v1604 = vxor.u32 %v1299, 2147483648
  %v1605 = vxor.u32 %v1304, 2147483648
  %v1606 = vxor.u32 %v1309, 2147483648
  %v1607 = vxor.u32 %v1314, 2147483648
  %v1608 = vxor.u32 %v1319, 2147483648
  %v1609 = vxor.u32 %v1324, 2147483648
  %v1610 = vxor.u32 %v1329, 2147483648
  %v1611 = vxor.u32 %v1334, 2147483648
  %v1612 = vxor.u32 %v1339, 2147483648
  %v1613 = vxor.u32 %v1344, 2147483648
  %v1614 = vxor.u32 %v1349, 2147483648
  %v1615 = vxor.u32 %v1354, 2147483648
  %v1616 = vxor.u32 %v1359, 2147483648
  %v1617 = vxor.u32 %v1364, 2147483648
  %v1618 = vxor.u32 %v1369, 2147483648
  %v1619 = vxor.u32 %v1374, 2147483648
  %v1620 = vxor.u32 %v1379, 2147483648
  %v1621 = vxor.u32 %v1384, 2147483648
  %v1622 = vxor.u32 %v1389, 2147483648
  %v1623 = vxor.u32 %v1394, 2147483648
  %v1624 = vxor.u32 %v1399, 2147483648
  %v1625 = vxor.u32 %v1404, 2147483648
  %v1626 = vxor.u32 %v1409, 2147483648
  %v1627 = vxor.u32 %v1414, 2147483648
  %v1628 = vxor.u32 %v1419, 2147483648
  %v1629 = vxor.u32 %v1424, 2147483648
  %v1630 = vxor.u32 %v1429, 2147483648
  %v1631 = vxor.u32 %v1434, 2147483648
  %v1632 = vxor.u32 %v1439, 2147483648
  %v1633 = vxor.u32 %v1444, 2147483648
  %v1634 = vxor.u32 %v1449, 2147483648
  %v1635 = vxor.u32 %v1454, 2147483648
  %v1636 = vxor.u32 %v1459, 2147483648
  %v1637 = vxor.u32 %v1464, 2147483648
  %v1638 = vxor.u32 %v1469, 2147483648
  %v1639 = vxor.u32 %v1474, 2147483648
  %v1640 = vxor.u32 %v1479, 2147483648
  %v1641 = vxor.u32 %v1484, 2147483648
  %v1642 = vxor.u32 %v1489, 2147483648
  %v1643 = vxor.u32 %v1494, 2147483648
  %v1644 = vxor.u32 %v1499, 2147483648
  %v1645 = vxor.u32 %v1504, 2147483648
  %v1646 = vxor.u32 %v1509, 2147483648
  %v1647 = vxor.u32 %v1514, 2147483648
  %v1648 = vxor.u32 %v1519, 2147483648
  %v1649 = vxor.u32 %v1524, 2147483648
  %v1650 = vxor.u32 %v1529, 2147483648
  %v1651 = vxor.u32 %v1534, 2147483648
  %v1652 = vxor.u32 %v1539, 2147483648
  %v1653 = vxor.u32 %v1544, 2147483648
  %v1654 = vxor.u32 %v1549, 2147483648
  %v1655 = vxor.u32 %v1554, 2147483648
  %v1656 = vxor.u32 %v1559, 2147483648
  %v1657 = vxor.u32 %v1564, 2147483648
  %v1658 = vxor.u32 %v1569, 2147483648
  %v1659 = vxor.u32 %v1574, 2147483648
  %v1660 = vxor.u32 %v1579, 2147483648
  %v1661 = vxor.u32 %v1584, 2147483648
  %v1662 = vxor.u32 %v1589, 2147483648
  %v1663 = vxor.u32 %v1594, 2147483648
  %v1664 = vxor.u32 %v1599, 2147483648
  %v1665 = vmul.f32 %v1602, 1.442695
  %v1666 = vpow.pop %v1665
  %v1667 = vmul.f32 %v1603, 1.442695
  %v1668 = vpow.pop %v1667
  %v1669 = vmul.f32 %v1604, 1.442695
  %v1670 = vpow.pop %v1669
  %v1671 = vmul.f32 %v1605, 1.442695
  %v1672 = vpow.pop %v1671
  %v1673 = vmul.f32 %v1606, 1.442695
  %v1674 = vpow.pop %v1673
  %v1675 = vmul.f32 %v1607, 1.442695
  %v1676 = vpow.pop %v1675
  %v1677 = vmul.f32 %v1608, 1.442695
  %v1678 = vpow.pop %v1677
  %v1679 = vmul.f32 %v1609, 1.442695
  %v1680 = vpow.pop %v1679
  %v1681 = vmul.f32 %v1610, 1.442695
  %v1682 = vpow.pop %v1681
  %v1683 = vmul.f32 %v1611, 1.442695
  %v1684 = vpow.pop %v1683
  %v1685 = vmul.f32 %v1612, 1.442695
  %v1686 = vpow.pop %v1685
  %v1687 = vmul.f32 %v1613, 1.442695
  %v1688 = vpow.pop %v1687
  %v1689 = vmul.f32 %v1614, 1.442695
  %v1690 = vpow.pop %v1689
  %v1691 = vmul.f32 %v1615, 1.442695
  %v1692 = vpow.pop %v1691
  %v1693 = vmul.f32 %v1616, 1.442695
  %v1694 = vpow.pop %v1693
  %v1695 = vmul.f32 %v1617, 1.442695
  %v1696 = vpow.pop %v1695
  %v1697 = vmul.f32 %v1618, 1.442695
  %v1698 = vpow.pop %v1697
  %v1699 = vmul.f32 %v1619, 1.442695
  %v1700 = vpow.pop %v1699
  %v1701 = vmul.f32 %v1620, 1.442695
  %v1702 = vpow.pop %v1701
  %v1703 = vmul.f32 %v1621, 1.442695
  %v1704 = vpow.pop %v1703
  %v1705 = vmul.f32 %v1622, 1.442695
  %v1706 = vpow.pop %v1705
  %v1707 = vmul.f32 %v1623, 1.442695
  %v1708 = vpow.pop %v1707
  %v1709 = vmul.f32 %v1624, 1.442695
  %v1710 = vpow.pop %v1709
  %v1711 = vmul.f32 %v1625, 1.442695
  %v1712 = vpow.pop %v1711
  %v1713 = vmul.f32 %v1626, 1.442695
  %v1714 = vpow.pop %v1713
  %v1715 = vmul.f32 %v1627, 1.442695
  %v1716 = vpow.pop %v1715
  %v1717 = vmul.f32 %v1628, 1.442695
  %v1718 = vpow.pop %v1717
  %v1719 = vmul.f32 %v1629, 1.442695
  %v1720 = vpow.pop %v1719
  %v1721 = vmul.f32 %v1630, 1.442695
  %v1722 = vpow.pop %v1721
  %v1723 = vmul.f32 %v1631, 1.442695
  %v1724 = vpow.pop %v1723
  %v1725 = vmul.f32 %v1632, 1.442695
  %v1726 = vpow.pop %v1725
  %v1727 = vmul.f32 %v1633, 1.442695
  %v1728 = vpow.pop %v1727
  %v1729 = vmul.f32 %v1634, 1.442695
  %v1730 = vpow.pop %v1729
  %v1731 = vmul.f32 %v1635, 1.442695
  %v1732 = vpow.pop %v1731
  %v1733 = vmul.f32 %v1636, 1.442695
  %v1734 = vpow.pop %v1733
  %v1735 = vmul.f32 %v1637, 1.442695
  %v1736 = vpow.pop %v1735
  %v1737 = vmul.f32 %v1638, 1.442695
  %v1738 = vpow.pop %v1737
  %v1739 = vmul.f32 %v1639, 1.442695
  %v1740 = vpow.pop %v1739
  %v1741 = vmul.f32 %v1640, 1.442695
  %v1742 = vpow.pop %v1741
  %v1743 = vmul.f32 %v1641, 1.442695
  %v1744 = vpow.pop %v1743
  %v1745 = vmul.f32 %v1642, 1.442695
  %v1746 = vpow.pop %v1745
  %v1747 = vmul.f32 %v1643, 1.442695
  %v1748 = vpow.pop %v1747
  %v1749 = vmul.f32 %v1644, 1.442695
  %v1750 = vpow.pop %v1749
  %v1751 = vmul.f32 %v1645, 1.442695
  %v1752 = vpow.pop %v1751
  %v1753 = vmul.f32 %v1646, 1.442695
  %v1754 = vpow.pop %v1753
  %v1755 = vmul.f32 %v1647, 1.442695
  %v1756 = vpow.pop %v1755
  %v1757 = vmul.f32 %v1648, 1.442695
  %v1758 = vpow.pop %v1757
  %v1759 = vmul.f32 %v1649, 1.442695
  %v1760 = vpow.pop %v1759
  %v1761 = vmul.f32 %v1650, 1.442695
  %v1762 = vpow.pop %v1761
  %v1763 = vmul.f32 %v1651, 1.442695
  %v1764 = vpow.pop %v1763
  %v1765 = vmul.f32 %v1652, 1.442695
  %v1766 = vpow.pop %v1765
  %v1767 = vmul.f32 %v1653, 1.442695
  %v1768 = vpow.pop %v1767
  %v1769 = vmul.f32 %v1654, 1.442695
  %v1770 = vpow.pop %v1769
  %v1771 = vmul.f32 %v1655, 1.442695
  %v1772 = vpow.pop %v1771
  %v1773 = vmul.f32 %v1656, 1.442695
  %v1774 = vpow.pop %v1773
  %v1775 = vmul.f32 %v1657, 1.442695
  %v1776 = vpow.pop %v1775
  %v1777 = vmul.f32 %v1658, 1.442695
  %v1778 = vpow.pop %v1777
  %v1779 = vmul.f32 %v1659, 1.442695
  %v1780 = vpow.pop %v1779
  %v1781 = vmul.f32 %v1660, 1.442695
  %v1782 = vpow.pop %v1781
  %v1783 = vmul.f32 %v1661, 1.442695
  %v1784 = vpow.pop %v1783
  %v1785 = vmul.f32 %v1662, 1.442695
  %v1786 = vpow.pop %v1785
  %v1787 = vmul.f32 %v1663, 1.442695
  %v1788 = vpow.pop %v1787
  %v1789 = vmul.f32 %v1664, 1.442695
  %v1790 = vpow.pop %v1789
  %v1791 = vadd.f32 %v1666, 1.0
  %v1792 = vadd.f32 %v1668, 1.0
  %v1793 = vadd.f32 %v1670, 1.0
  %v1794 = vadd.f32 %v1672, 1.0
  %v1795 = vadd.f32 %v1674, 1.0
  %v1796 = vadd.f32 %v1676, 1.0
  %v1797 = vadd.f32 %v1678, 1.0
  %v1798 = vadd.f32 %v1680, 1.0
  %v1799 = vadd.f32 %v1682, 1.0
  %v1800 = vadd.f32 %v1684, 1.0
  %v1801 = vadd.f32 %v1686, 1.0
  %v1802 = vadd.f32 %v1688, 1.0
  %v1803 = vadd.f32 %v1690, 1.0
  %v1804 = vadd.f32 %v1692, 1.0
  %v1805 = vadd.f32 %v1694, 1.0
  %v1806 = vadd.f32 %v1696, 1.0
  %v1807 = vadd.f32 %v1698, 1.0
  %v1808 = vadd.f32 %v1700, 1.0
  %v1809 = vadd.f32 %v1702, 1.0
  %v1810 = vadd.f32 %v1704, 1.0
  %v1811 = vadd.f32 %v1706, 1.0
  %v1812 = vadd.f32 %v1708, 1.0
  %v1813 = vadd.f32 %v1710, 1.0
  %v1814 = vadd.f32 %v1712, 1.0
  %v1815 = vadd.f32 %v1714, 1.0
  %v1816 = vadd.f32 %v1716, 1.0
  %v1817 = vadd.f32 %v1718, 1.0
  %v1818 = vadd.f32 %v1720, 1.0
  %v1819 = vadd.f32 %v1722, 1.0
  %v1820 = vadd.f32 %v1724, 1.0
  %v1821 = vadd.f32 %v1726, 1.0
  %v1822 = vadd.f32 %v1728, 1.0
  %v1823 = vadd.f32 %v1730, 1.0
  %v1824 = vadd.f32 %v1732, 1.0
  %v1825 = vadd.f32 %v1734, 1.0
  %v1826 = vadd.f32 %v1736, 1.0
  %v1827 = vadd.f32 %v1738, 1.0
  %v1828 = vadd.f32 %v1740, 1.0
  %v1829 = vadd.f32 %v1742, 1.0
  %v1830 = vadd.f32 %v1744, 1.0
  %v1831 = vadd.f32 %v1746, 1.0
  %v1832 = vadd.f32 %v1748, 1.0
  %v1833 = vadd.f32 %v1750, 1.0
  %v1834 = vadd.f32 %v1752, 1.0
  %v1835 = vadd.f32 %v1754, 1.0
  %v1836 = vadd.f32 %v1756, 1.0
  %v1837 = vadd.f32 %v1758, 1.0
  %v1838 = vadd.f32 %v1760, 1.0
  %v1839 = vadd.f32 %v1762, 1.0
  %v1840 = vadd.f32 %v1764, 1.0
  %v1841 = vadd.f32 %v1766, 1.0
  %v1842 = vadd.f32 %v1768, 1.0
  %v1843 = vadd.f32 %v1770, 1.0
  %v1844 = vadd.f32 %v1772, 1.0
  %v1845 = vadd.f32 %v1774, 1.0
  %v1846 = vadd.f32 %v1776, 1.0
  %v1847 = vadd.f32 %v1778, 1.0
  %v1848 = vadd.f32 %v1780, 1.0
  %v1849 = vadd.f32 %v1782, 1.0
  %v1850 = vadd.f32 %v1784, 1.0
  %v1851 = vadd.f32 %v1786, 1.0
  %v1852 = vadd.f32 %v1788, 1.0
  %v1853 = vadd.f32 %v1790, 1.0
  %v1854 = vrcp.pop %v1791
  %v1855 = vmul.f32 1.0, %v1854
  %v1856 = vrcp.pop %v1792
  %v1857 = vmul.f32 1.0, %v1856
  %v1858 = vrcp.pop %v1793
  %v1859 = vmul.f32 1.0, %v1858
  %v1860 = vrcp.pop %v1794
  %v1861 = vmul.f32 1.0, %v1860
  %v1862 = vrcp.pop %v1795
  %v1863 = vmul.f32 1.0, %v1862
  %v1864 = vrcp.pop %v1796
  %v1865 = vmul.f32 1.0, %v1864
  %v1866 = vrcp.pop %v1797
  %v1867 = vmul.f32 1.0, %v1866
  %v1868 = vrcp.pop %v1798
  %v1869 = vmul.f32 1.0, %v1868
  %v1870 = vrcp.pop %v1799
  %v1871 = vmul.f32 1.0, %v1870
  %v1872 = vrcp.pop %v1800
  %v1873 = vmul.f32 1.0, %v1872
  %v1874 = vrcp.pop %v1801
  %v1875 = vmul.f32 1.0, %v1874
  %v1876 = vrcp.pop %v1802
  %v1877 = vmul.f32 1.0, %v1876
  %v1878 = vrcp.pop %v1803
  %v1879 = vmul.f32 1.0, %v1878
  %v1880 = vrcp.pop %v1804
  %v1881 = vmul.f32 1.0, %v1880
  %v1882 = vrcp.pop %v1805
  %v1883 = vmul.f32 1.0, %v1882
  %v1884 = vrcp.pop %v1806
  %v1885 = vmul.f32 1.0, %v1884
  %v1886 = vrcp.pop %v1807
  %v1887 = vmul.f32 1.0, %v1886
  %v1888 = vrcp.pop %v1808
  %v1889 = vmul.f32 1.0, %v1888
  %v1890 = vrcp.pop %v1809
  %v1891 = vmul.f32 1.0, %v1890
  %v1892 = vrcp.pop %v1810
  %v1893 = vmul.f32 1.0, %v1892
  %v1894 = vrcp.pop %v1811
  %v1895 = vmul.f32 1.0, %v1894
  %v1896 = vrcp.pop %v1812
  %v1897 = vmul.f32 1.0, %v1896
  %v1898 = vrcp.pop %v1813
  %v1899 = vmul.f32 1.0, %v1898
  %v1900 = vrcp.pop %v1814
  %v1901 = vmul.f32 1.0, %v1900
  %v1902 = vrcp.pop %v1815
  %v1903 = vmul.f32 1.0, %v1902
  %v1904 = vrcp.pop %v1816
  %v1905 = vmul.f32 1.0, %v1904
  %v1906 = vrcp.pop %v1817
  %v1907 = vmul.f32 1.0, %v1906
  %v1908 = vrcp.pop %v1818
  %v1909 = vmul.f32 1.0, %v1908
  %v1910 = vrcp.pop %v1819
  %v1911 = vmul.f32 1.0, %v1910
  %v1912 = vrcp.pop %v1820
  %v1913 = vmul.f32 1.0, %v1912
  %v1914 = vrcp.pop %v1821
  %v1915 = vmul.f32 1.0, %v1914
  %v1916 = vrcp.pop %v1822
  %v1917 = vmul.f32 1.0, %v1916
  %v1918 = vrcp.pop %v1823
  %v1919 = vmul.f32 1.0, %v1918
  %v1920 = vrcp.pop %v1824
  %v1921 = vmul.f32 1.0, %v1920
  %v1922 = vrcp.pop %v1825
  %v1923 = vmul.f32 1.0, %v1922
  %v1924 = vrcp.pop %v1826
  %v1925 = vmul.f32 1.0, %v1924
  %v1926 = vrcp.pop %v1827
  %v1927 = vmul.f32 1.0, %v1926
  %v1928 = vrcp.pop %v1828
  %v1929 = vmul.f32 1.0, %v1928
  %v1930 = vrcp.pop %v1829
  %v1931 = vmul.f32 1.0, %v1930
  %v1932 = vrcp.pop %v1830
  %v1933 = vmul.f32 1.0, %v1932
  %v1934 = vrcp.pop %v1831
  %v1935 = vmul.f32 1.0, %v1934
  %v1936 = vrcp.pop %v1832
  %v1937 = vmul.f32 1.0, %v1936
  %v1938 = vrcp.pop %v1833
  %v1939 = vmul.f32 1.0, %v1938
  %v1940 = vrcp.pop %v1834
  %v1941 = vmul.f32 1.0, %v1940
  %v1942 = vrcp.pop %v1835
  %v1943 = vmul.f32 1.0, %v1942
  %v1944 = vrcp.pop %v1836
  %v1945 = vmul.f32 1.0, %v1944
  %v1946 = vrcp.pop %v1837
  %v1947 = vmul.f32 1.0, %v1946
  %v1948 = vrcp.pop %v1838
  %v1949 = vmul.f32 1.0, %v1948
  %v1950 = vrcp.pop %v1839
  %v1951 = vmul.f32 1.0, %v1950
  %v1952 = vrcp.pop %v1840
  %v1953 = vmul.f32 1.0, %v1952
  %v1954 = vrcp.pop %v1841
  %v1955 = vmul.f32 1.0, %v1954
  %v1956 = vrcp.pop %v1842
  %v1957 = vmul.f32 1.0, %v1956
  %v1958 = vrcp.pop %v1843
  %v1959 = vmul.f32 1.0, %v1958
  %v1960 = vrcp.pop %v1844
  %v1961 = vmul.f32 1.0, %v1960
  %v1962 = vrcp.pop %v1845
  %v1963 = vmul.f32 1.0, %v1962
  %v1964 = vrcp.pop %v1846
  %v1965 = vmul.f32 1.0, %v1964
  %v1966 = vrcp.pop %v1847
  %v1967 = vmul.f32 1.0, %v1966
  %v1968 = vrcp.pop %v1848
  %v1969 = vmul.f32 1.0, %v1968
  %v1970 = vrcp.pop %v1849
  %v1971 = vmul.f32 1.0, %v1970
  %v1972 = vrcp.pop %v1850
  %v1973 = vmul.f32 1.0, %v1972
  %v1974 = vrcp.pop %v1851
  %v1975 = vmul.f32 1.0, %v1974
  %v1976 = vrcp.pop %v1852
  %v1977 = vmul.f32 1.0, %v1976
  %v1978 = vrcp.pop %v1853
  %v1979 = vmul.f32 1.0, %v1978
  %1980 = vst [vmem:[%s7] sm:$0xff] %v1855
  %1981 = vst [vmem:[%s7 + $0x8] sm:$0xff] %v1857
  %1982 = vst [vmem:[%s7 + $0x10] sm:$0xff] %v1859
  %1983 = vst [vmem:[%s7 + $0x18] sm:$0xff] %v1861
  %1984 = vst [vmem:[%s7 + $0x20] sm:$0xff] %v1863
  %1985 = vst [vmem:[%s7 + $0x28] sm:$0xff] %v1865
  %1986 = vst [vmem:[%s7 + $0x30] sm:$0xff] %v1867
  %1987 = vst [vmem:[%s7 + $0x38] sm:$0xff] %v1869
  %1988 = vst [vmem:[%s7 + $0x40] sm:$0xff] %v1871
  %1989 = vst [vmem:[%s7 + $0x48] sm:$0xff] %v1873
  %1990 = vst [vmem:[%s7 + $0x50] sm:$0xff] %v1875
  %1991 = vst [vmem:[%s7 + $0x58] sm:$0xff] %v1877
  %1992 = vst [vmem:[%s7 + $0x60] sm:$0xff] %v1879
  %1993 = vst [vmem:[%s7 + $0x68] sm:$0xff] %v1881
  %1994 = vst [vmem:[%s7 + $0x70] sm:$0xff] %v1883
  %1995 = vst [vmem:[%s7 + $0x78] sm:$0xff] %v1885
  %1996 = vst [vmem:[%s7 + $0x80] sm:$0xff] %v1887
  %1997 = vst [vmem:[%s7 + $0x88] sm:$0xff] %v1889
  %1998 = vst [vmem:[%s7 + $0x90] sm:$0xff] %v1891
  %1999 = vst [vmem:[%s7 + $0x98] sm:$0xff] %v1893
  %2000 = vst [vmem:[%s7 + $0xa0] sm:$0xff] %v1895
  %2001 = vst [vmem:[%s7 + $0xa8] sm:$0xff] %v1897
  %2002 = vst [vmem:[%s7 + $0xb0] sm:$0xff] %v1899
  %2003 = vst [vmem:[%s7 + $0xb8] sm:$0xff] %v1901
  %2004 = vst [vmem:[%s7 + $0xc0] sm:$0xff] %v1903
  %2005 = vst [vmem:[%s7 + $0xc8] sm:$0xff] %v1905
  %2006 = vst [vmem:[%s7 + $0xd0] sm:$0xff] %v1907
  %2007 = vst [vmem:[%s7 + $0xd8] sm:$0xff] %v1909
  %2008 = vst [vmem:[%s7 + $0xe0] sm:$0xff] %v1911
  %2009 = vst [vmem:[%s7 + $0xe8] sm:$0xff] %v1913
  %2010 = vst [vmem:[%s7 + $0xf0] sm:$0xff] %v1915
  %2011 = vst [vmem:[%s7 + $0xf8] sm:$0xff] %v1917
  %2012 = vst [vmem:[%s7 + $0x100] sm:$0xff] %v1919
  %2013 = vst [vmem:[%s7 + $0x108] sm:$0xff] %v1921
  %2014 = vst [vmem:[%s7 + $0x110] sm:$0xff] %v1923
  %2015 = vst [vmem:[%s7 + $0x118] sm:$0xff] %v1925
  %2016 = vst [vmem:[%s7 + $0x120] sm:$0xff] %v1927
  %2017 = vst [vmem:[%s7 + $0x128] sm:$0xff] %v1929
  %2018 = vst [vmem:[%s7 + $0x130] sm:$0xff] %v1931
  %2019 = vst [vmem:[%s7 + $0x138] sm:$0xff] %v1933
  %2020 = vst [vmem:[%s7 + $0x140] sm:$0xff] %v1935
  %2021 = vst [vmem:[%s7 + $0x148] sm:$0xff] %v1937
  %2022 = vst [vmem:[%s7 + $0x150] sm:$0xff] %v1939
  %2023 = vst [vmem:[%s7 + $0x158] sm:$0xff] %v1941
  %2024 = vst [vmem:[%s7 + $0x160] sm:$0xff] %v1943
  %2025 = vst [vmem:[%s7 + $0x168] sm:$0xff] %v1945
  %2026 = vst [vmem:[%s7 + $0x170] sm:$0xff] %v1947
  %2027 = vst [vmem:[%s7 + $0x178] sm:$0xff] %v1949
  %2028 = vst [vmem:[%s7 + $0x180] sm:$0xff] %v1951
  %2029 = vst [vmem:[%s7 + $0x188] sm:$0xff] %v1953
  %2030 = vst [vmem:[%s7 + $0x190] sm:$0xff] %v1955
  %2031 = vst [vmem:[%s7 + $0x198] sm:$0xff] %v1957
  %2032 = vst [vmem:[%s7 + $0x1a0] sm:$0xff] %v1959
  %2033 = vst [vmem:[%s7 + $0x1a8] sm:$0xff] %v1961
  %2034 = vst [vmem:[%s7 + $0x1b0] sm:$0xff] %v1963
  %2035 = vst [vmem:[%s7 + $0x1b8] sm:$0xff] %v1965
  %2036 = vst [vmem:[%s7 + $0x1c0] sm:$0xff] %v1967
  %2037 = vst [vmem:[%s7 + $0x1c8] sm:$0xff] %v1969
  %2038 = vst [vmem:[%s7 + $0x1d0] sm:$0xff] %v1971
  %2039 = vst [vmem:[%s7 + $0x1d8] sm:$0xff] %v1973
  %2040 = vst [vmem:[%s7 + $0x1e0] sm:$0xff] %v1975
  %2041 = vst [vmem:[%s7 + $0x1e8] sm:$0xff] %v1977
  %2042 = vst [vmem:[%s7 + $0x1f0] sm:$0xff] %v1979
  // Predicated region
  $region30: #{fcn_forward.1} parent=0 // pred_check
    _
  $region31: #{fcn_forward.1} parent=0 // pred_check_branch
    %2044 = sbr.rel (0) target = $region33
  $region32: #{fcn_forward.1} parent=0 // pred_region
    _
  $region33: #{fcn_forward.1} parent=0 // pred_fallthru
    _
  // Predicated region
  $region34: #{fcn_forward.1} parent=0 // pred_check
    _
  $region35: #{fcn_forward.1} parent=0 // pred_check_branch
    %2046 = sbr.rel (0) target = $region37
  $region36: #{fcn_forward.1} parent=0 // pred_region
    _
  $region37: #{fcn_forward.1} parent=0 // pred_fallthru
    _

// kernel: fcn_forward.1
$region0: #{fcn_forward.1}
  #allocation0 [shape = 'u32[]', space=smem, size = 0x4, offset = 0x4, fixed_abs, tag = 'smem constant byte address 0x4 - core index']
  #allocation1 [shape = 'u32[144,128]{1,0:T(1,128)}', space=vmem, size = 0x12000, scoped, tag = 'internal scratch']
  %s0 = inlined_call_operand.vmem [shape: f32[504,32], index: 0, kind: input, shape index: {}]
  %s1 = inlined_call_operand.vmem [shape: f32[32,128], index: 1, kind: input, shape index: {}]
  %s2 = inlined_call_operand.vmem [shape: f32[1,128], index: 2, kind: input, shape index: {}]
  %s3 = inlined_call_operand.vmem [shape: f32[128,128], index: 3, kind: input, shape index: {}]
  %s4 = inlined_call_operand.vmem [shape: f32[1,128], index: 4, kind: input, shape index: {}]
  %s5 = inlined_call_operand.vmem [shape: f32[128,128], index: 5, kind: input, shape index: {}]
  %s6 = inlined_call_operand.vmem [shape: f32[1,128], index: 6, kind: input, shape index: {}]
  %s7 = inlined_call_operand.vmem [shape: f32[504,128], index: 7, kind: output, shape index: {}]
  %s8 = sld [smem:[#allocation0]]
  $region38: #{fcn_forward.1} parent=0
    _
  %s10 = ssub.s32 1, %s8
  %s11 = scalar_select 0, %s10, %s8
  // Predicated region
  $region2: #{fcn_forward.1} parent=0 // pred_check
    _
  $region3: #{fcn_forward.1} parent=0 // pred_check_branch
    %13 = sbr.rel (0) target = $region5
  $region4: #{fcn_forward.1} parent=0 // pred_region
    _
  $region5: #{fcn_forward.1} parent=0 // pred_fallthru
    _
  // Predicated region
  $region6: #{fcn_forward.1} parent=0 // pred_check
    _
  $region7: #{fcn_forward.1} parent=0 // pred_check_branch
    %15 = sbr.rel (0) target = $region9
  $region8: #{fcn_forward.1} parent=0 // pred_region
    _
  $region9: #{fcn_forward.1} parent=0 // pred_fallthru
    _
  // Predicated region
  $region10: #{fcn_forward.1} parent=0 // pred_check
    _
  $region11: #{fcn_forward.1} parent=0 // pred_check_branch
    %17 = sbr.rel (0) target = $region13
  $region12: #{fcn_forward.1} parent=0 // pred_region
    _
  $region13: #{fcn_forward.1} parent=0 // pred_fallthru
    _
  // Predicated region
  $region14: #{fcn_forward.1} parent=0 // pred_check
    _
  $region15: #{fcn_forward.1} parent=0 // pred_check_branch
    %19 = sbr.rel (0) target = $region17
  $region16: #{fcn_forward.1} parent=0 // pred_region
    _
  $region17: #{fcn_forward.1} parent=0 // pred_fallthru
    _
  // Predicated region
  $region18: #{fcn_forward.1} parent=0 // pred_check
    _
  $region19: #{fcn_forward.1} parent=0 // pred_check_branch
    %21 = sbr.rel (0) target = $region21
  $region20: #{fcn_forward.1} parent=0 // pred_region
    _
  $region21: #{fcn_forward.1} parent=0 // pred_fallthru
    _
  // Predicated region
  $region22: #{fcn_forward.1} parent=0 // pred_check
    _
  $region23: #{fcn_forward.1} parent=0 // pred_check_branch
    %23 = sbr.rel (0) target = $region25
  $region24: #{fcn_forward.1} parent=0 // pred_region
    _
  $region25: #{fcn_forward.1} parent=0 // pred_fallthru
    _
  // Predicated region
  $region26: #{fcn_forward.1} parent=0 // pred_check
    _
  $region27: #{fcn_forward.1} parent=0 // pred_check_branch
    %25 = sbr.rel (0) target = $region29
  $region28: #{fcn_forward.1} parent=0 // pred_region
    _
  $region29: #{fcn_forward.1} parent=0 // pred_fallthru
    _
  %v26 = vld [vmem:[%s0] sm:$0xff]
  %v27 = vld [vmem:[%s0 + $0x8] sm:$0xff]
  %v28 = vld [vmem:[%s0 + $0x10] sm:$0xff]
  %v29 = vld [vmem:[%s0 + $0x18] sm:$0xff]
  %v30 = vld [vmem:[%s0 + $0x20] sm:$0xff]
  %v31 = vld [vmem:[%s0 + $0x28] sm:$0xff]
  %v32 = vld [vmem:[%s0 + $0x30] sm:$0xff]
  %v33 = vld [vmem:[%s0 + $0x38] sm:$0xff]
  %v34 = vld [vmem:[%s0 + $0x40] sm:$0xff]
  %v35 = vld [vmem:[%s0 + $0x48] sm:$0xff]
  %v36 = vld [vmem:[%s0 + $0x50] sm:$0xff]
  %v37 = vld [vmem:[%s0 + $0x58] sm:$0xff]
  %v38 = vld [vmem:[%s0 + $0x60] sm:$0xff]
  %v39 = vld [vmem:[%s0 + $0x68] sm:$0xff]
  %v40 = vld [vmem:[%s0 + $0x70] sm:$0xff]
  %v41 = vld [vmem:[%s0 + $0x78] sm:$0xff]
  %v42 = vld [vmem:[%s0 + $0x80] sm:$0xff]
  %v43 = vld [vmem:[%s0 + $0x88] sm:$0xff]
  %v44 = vld [vmem:[%s0 + $0x90] sm:$0xff]
  %v45 = vld [vmem:[%s0 + $0x98] sm:$0xff]
  %v46 = vld [vmem:[%s0 + $0xa0] sm:$0xff]
  %v47 = vld [vmem:[%s0 + $0xa8] sm:$0xff]
  %v48 = vld [vmem:[%s0 + $0xb0] sm:$0xff]
  %v49 = vld [vmem:[%s0 + $0xb8] sm:$0xff]
  %v50 = vld [vmem:[%s0 + $0xc0] sm:$0xff]
  %v51 = vld [vmem:[%s0 + $0xc8] sm:$0xff]
  %v52 = vld [vmem:[%s0 + $0xd0] sm:$0xff]
  %v53 = vld [vmem:[%s0 + $0xd8] sm:$0xff]
  %v54 = vld [vmem:[%s0 + $0xe0] sm:$0xff]
  %v55 = vld [vmem:[%s0 + $0xe8] sm:$0xff]
  %v56 = vld [vmem:[%s0 + $0xf0] sm:$0xff]
  %v57 = vld [vmem:[%s0 + $0xf8] sm:$0xff]
  %v58 = vld [vmem:[%s0 + $0x100] sm:$0xff]
  %v59 = vld [vmem:[%s0 + $0x108] sm:$0xff]
  %v60 = vld [vmem:[%s0 + $0x110] sm:$0xff]
  %v61 = vld [vmem:[%s0 + $0x118] sm:$0xff]
  %v62 = vld [vmem:[%s0 + $0x120] sm:$0xff]
  %v63 = vld [vmem:[%s0 + $0x128] sm:$0xff]
  %v64 = vld [vmem:[%s0 + $0x130] sm:$0xff]
  %v65 = vld [vmem:[%s0 + $0x138] sm:$0xff]
  %v66 = vld [vmem:[%s0 + $0x140] sm:$0xff]
  %v67 = vld [vmem:[%s0 + $0x148] sm:$0xff]
  %v68 = vld [vmem:[%s0 + $0x150] sm:$0xff]
  %v69 = vld [vmem:[%s0 + $0x158] sm:$0xff]
  %v70 = vld [vmem:[%s0 + $0x160] sm:$0xff]
  %v71 = vld [vmem:[%s0 + $0x168] sm:$0xff]
  %v72 = vld [vmem:[%s0 + $0x170] sm:$0xff]
  %v73 = vld [vmem:[%s0 + $0x178] sm:$0xff]
  %v74 = vld [vmem:[%s0 + $0x180] sm:$0xff]
  %v75 = vld [vmem:[%s0 + $0x188] sm:$0xff]
  %v76 = vld [vmem:[%s0 + $0x190] sm:$0xff]
  %v77 = vld [vmem:[%s0 + $0x198] sm:$0xff]
  %v78 = vld [vmem:[%s0 + $0x1a0] sm:$0xff]
  %v79 = vld [vmem:[%s0 + $0x1a8] sm:$0xff]
  %v80 = vld [vmem:[%s0 + $0x1b0] sm:$0xff]
  %v81 = vld [vmem:[%s0 + $0x1b8] sm:$0xff]
  %v82 = vld [vmem:[%s0 + $0x1c0] sm:$0xff]
  %v83 = vld [vmem:[%s0 + $0x1c8] sm:$0xff]
  %v84 = vld [vmem:[%s0 + $0x1d0] sm:$0xff]
  %v85 = vld [vmem:[%s0 + $0x1d8] sm:$0xff]
  %v86 = vld [vmem:[%s0 + $0x1e0] sm:$0xff]
  %v87 = vld [vmem:[%s0 + $0x1e8] sm:$0xff]
  %v88 = vld [vmem:[%s0 + $0x1f0] sm:$0xff]
  %v89 = vld [vmem:[%s1] sm:$0xff]
  %v90 = vld [vmem:[%s1 + $0x8] sm:$0xff]
  %v91 = vld [vmem:[%s1 + $0x10] sm:$0xff]
  %v92 = vld [vmem:[%s1 + $0x18] sm:$0xff]
  %v93 = vld [vmem:[%s2] sm:$0x1]
  %v95 = vlaneseq
  %v96 = vshrl.u32 %v95, 7
  %v97 = vsub.s32 0, %v96
  %v98 = vrot.slane %v93, %v97
  %vm100 = vcmask 261120
  %v102 = vsel %vm100, %v26, 0
  %v105 = vsel %vm100, %v27, 0
  %v108 = vsel %vm100, %v28, 0
  %v111 = vsel %vm100, %v29, 0
  %v114 = vsel %vm100, %v30, 0
  %v117 = vsel %vm100, %v31, 0
  %v120 = vsel %vm100, %v32, 0
  %v123 = vsel %vm100, %v33, 0
  %v126 = vsel %vm100, %v34, 0
  %v129 = vsel %vm100, %v35, 0
  %v132 = vsel %vm100, %v36, 0
  %v135 = vsel %vm100, %v37, 0
  %v138 = vsel %vm100, %v38, 0
  %v141 = vsel %vm100, %v39, 0
  %v144 = vsel %vm100, %v40, 0
  %v147 = vsel %vm100, %v41, 0
  %v150 = vsel %vm100, %v42, 0
  %v153 = vsel %vm100, %v43, 0
  %v156 = vsel %vm100, %v44, 0
  %v159 = vsel %vm100, %v45, 0
  %v162 = vsel %vm100, %v46, 0
  %v165 = vsel %vm100, %v47, 0
  %v168 = vsel %vm100, %v48, 0
  %v171 = vsel %vm100, %v49, 0
  %v174 = vsel %vm100, %v50, 0
  %v177 = vsel %vm100, %v51, 0
  %v180 = vsel %vm100, %v52, 0
  %v183 = vsel %vm100, %v53, 0
  %v186 = vsel %vm100, %v54, 0
  %v189 = vsel %vm100, %v55, 0
  %v192 = vsel %vm100, %v56, 0
  %v195 = vsel %vm100, %v57, 0
  %v198 = vsel %vm100, %v58, 0
  %v201 = vsel %vm100, %v59, 0
  %v204 = vsel %vm100, %v60, 0
  %v207 = vsel %vm100, %v61, 0
  %v210 = vsel %vm100, %v62, 0
  %v213 = vsel %vm100, %v63, 0
  %v216 = vsel %vm100, %v64, 0
  %v219 = vsel %vm100, %v65, 0
  %v222 = vsel %vm100, %v66, 0
  %v225 = vsel %vm100, %v67, 0
  %v228 = vsel %vm100, %v68, 0
  %v231 = vsel %vm100, %v69, 0
  %v234 = vsel %vm100, %v70, 0
  %v237 = vsel %vm100, %v71, 0
  %v240 = vsel %vm100, %v72, 0
  %v243 = vsel %vm100, %v73, 0
  %v246 = vsel %vm100, %v74, 0
  %v249 = vsel %vm100, %v75, 0
  %v252 = vsel %vm100, %v76, 0
  %v255 = vsel %vm100, %v77, 0
  %v258 = vsel %vm100, %v78, 0
  %v261 = vsel %vm100, %v79, 0
  %v264 = vsel %vm100, %v80, 0
  %v267 = vsel %vm100, %v81, 0
  %v270 = vsel %vm100, %v82, 0
  %v273 = vsel %vm100, %v83, 0
  %v276 = vsel %vm100, %v84, 0
  %v279 = vsel %vm100, %v85, 0
  %v282 = vsel %vm100, %v86, 0
  %v285 = vsel %vm100, %v87, 0
  %v288 = vsel %vm100, %v88, 0
  %290 = vmatprep.subr.mxu0 0.0
  %291 = vmatpush1.msra.mxu0 %v89
  %292 = vmatprep.subr.mxu0 0.0
  %293 = vmatpush1.msra.mxu0 %v90
  %294 = vmatprep.subr.mxu0 0.0
  %295 = vmatpush1.msra.mxu0 %v91
  %296 = vmatprep.subr.mxu0 0.0
  %297 = vmatpush1.msra.mxu0 %v92
  %298 = vmatprep.subr.mxu0 0.0
  %299 = vmatpush1.msra.mxu0 0.0
  %300 = vmatprep.subr.mxu0 0.0
  %301 = vmatpush1.msra.mxu0 0.0
  %302 = vmatprep.subr.mxu0 0.0
  %303 = vmatpush1.msra.mxu0 0.0
  %304 = vmatprep.subr.mxu0 0.0
  %305 = vmatpush1.msra.mxu0 0.0
  %306 = vmatprep.subr.mxu0 0.0
  %307 = vmatpush1.msra.mxu0 0.0
  %308 = vmatprep.subr.mxu0 0.0
  %309 = vmatpush1.msra.mxu0 0.0
  %310 = vmatprep.subr.mxu0 0.0
  %311 = vmatpush1.msra.mxu0 0.0
  %312 = vmatprep.subr.mxu0 0.0
  %313 = vmatpush1.msra.mxu0 0.0
  %314 = vmatprep.subr.mxu0 0.0
  %315 = vmatpush1.msra.mxu0 0.0
  %316 = vmatprep.subr.mxu0 0.0
  %317 = vmatpush1.msra.mxu0 0.0
  %318 = vmatprep.subr.mxu0 0.0
  %319 = vmatpush1.msra.mxu0 0.0
  %320 = vmatprep.subr.mxu0 0.0
  %321 = vmatpush1.msra.mxu0 0.0
  %322 = vmatprep.subr.mxu0 0.0
  %323 = vmatpush1.msra.mxu0 0.0
  %324 = vmatprep.subr.mxu0 0.0
  %325 = vmatpush1.msra.mxu0 0.0
  %326 = vmatprep.subr.mxu0 0.0
  %327 = vmatpush1.msra.mxu0 0.0
  %328 = vmatprep.subr.mxu0 0.0
  %329 = vmatpush1.msra.mxu0 0.0
  %330 = vmatprep.subr.mxu0 0.0
  %331 = vmatpush1.msra.mxu0 0.0
  %332 = vmatprep.subr.mxu0 0.0
  %333 = vmatpush1.msra.mxu0 0.0
  %334 = vmatprep.subr.mxu0 0.0
  %335 = vmatpush1.msra.mxu0 0.0
  %336 = vmatprep.subr.mxu0 0.0
  %337 = vmatpush1.msra.mxu0 0.0
  %338 = vmatprep.subr.mxu0 0.0
  %339 = vmatpush1.msra.mxu0 0.0
  %340 = vmatprep.subr.mxu0 0.0
  %341 = vmatpush1.msra.mxu0 0.0
  %342 = vmatprep.subr.mxu0 0.0
  %343 = vmatpush1.msra.mxu0 0.0
  %344 = vmatprep.subr.mxu0 0.0
  %345 = vmatpush1.msra.mxu0 0.0
  %346 = vmatprep.subr.mxu0 0.0
  %347 = vmatpush1.msra.mxu0 0.0
  %348 = vmatprep.subr.mxu0 0.0
  %349 = vmatpush1.msra.mxu0 0.0
  %350 = vmatprep.subr.mxu0 0.0
  %351 = vmatpush1.msra.mxu0 0.0
  %352 = vmatprep.subr.mxu0 0.0
  %353 = vmatpush1.msra.mxu0 0.0
  %354 = vmatprep.mubr.f32.mxu0 0.0
  %355 = vmatmul.mubr.f32.gmra.mrb[0].mxu0 %v102
  %v356 = vpop.f32.mrb[0].mxu0
  %v357 = vadd.f32 %v98, %v356
  %v358 = vpop.f32.mrb[0].mxu0
  %359 = vmatprep.mubr.f32.mxu0 0.0
  %360 = vmatmul.mubr.f32.gmra.mrb[0].mxu0 %v105
  %v361 = vpop.f32.mrb[0].mxu0
  %v362 = vadd.f32 %v98, %v361
  %v363 = vpop.f32.mrb[0].mxu0
  %364 = vmatprep.mubr.f32.mxu0 0.0
  %365 = vmatmul.mubr.f32.gmra.mrb[0].mxu0 %v108
  %v366 = vpop.f32.mrb[0].mxu0
  %v367 = vadd.f32 %v98, %v366
  %v368 = vpop.f32.mrb[0].mxu0
  %369 = vmatprep.mubr.f32.mxu0 0.0
  %370 = vmatmul.mubr.f32.gmra.mrb[0].mxu0 %v111
  %v371 = vpop.f32.mrb[0].mxu0
  %v372 = vadd.f32 %v98, %v371
  %v373 = vpop.f32.mrb[0].mxu0
  %374 = vmatprep.mubr.f32.mxu0 0.0
  %375 = vmatmul.mubr.f32.gmra.mrb[0].mxu0 %v114
  %v376 = vpop.f32.mrb[0].mxu0
  %v377 = vadd.f32 %v98, %v376
  %v378 = vpop.f32.mrb[0].mxu0
  %379 = vmatprep.mubr.f32.mxu0 0.0
  %380 = vmatmul.mubr.f32.gmra.mrb[0].mxu0 %v117
  %v381 = vpop.f32.mrb[0].mxu0
  %v382 = vadd.f32 %v98, %v381
  %v383 = vpop.f32.mrb[0].mxu0
  %384 = vmatprep.mubr.f32.mxu0 0.0
  %385 = vmatmul.mubr.f32.gmra.mrb[0].mxu0 %v120
  %v386 = vpop.f32.mrb[0].mxu0
  %v387 = vadd.f32 %v98, %v386
  %v388 = vpop.f32.mrb[0].mxu0
  %389 = vmatprep.mubr.f32.mxu0 0.0
  %390 = vmatmul.mubr.f32.gmra.mrb[0].mxu0 %v123
  %v391 = vpop.f32.mrb[0].mxu0
  %v392 = vadd.f32 %v98, %v391
  %v393 = vpop.f32.mrb[0].mxu0
  %394 = vmatprep.mubr.f32.mxu0 0.0
  %395 = vmatmul.mubr.f32.gmra.mrb[0].mxu0 %v126
  %v396 = vpop.f32.mrb[0].mxu0
  %v397 = vadd.f32 %v98, %v396
  %v398 = vpop.f32.mrb[0].mxu0
  %399 = vmatprep.mubr.f32.mxu0 0.0
  %400 = vmatmul.mubr.f32.gmra.mrb[0].mxu0 %v129
  %v401 = vpop.f32.mrb[0].mxu0
  %v402 = vadd.f32 %v98, %v401
  %v403 = vpop.f32.mrb[0].mxu0
  %404 = vmatprep.mubr.f32.mxu0 0.0
  %405 = vmatmul.mubr.f32.gmra.mrb[0].mxu0 %v132
  %v406 = vpop.f32.mrb[0].mxu0
  %v407 = vadd.f32 %v98, %v406
  %v408 = vpop.f32.mrb[0].mxu0
  %409 = vmatprep.mubr.f32.mxu0 0.0
  %410 = vmatmul.mubr.f32.gmra.mrb[0].mxu0 %v135
  %v411 = vpop.f32.mrb[0].mxu0
  %v412 = vadd.f32 %v98, %v411
  %v413 = vpop.f32.mrb[0].mxu0
  %414 = vmatprep.mubr.f32.mxu0 0.0
  %415 = vmatmul.mubr.f32.gmra.mrb[0].mxu0 %v138
  %v416 = vpop.f32.mrb[0].mxu0
  %v417 = vadd.f32 %v98, %v416
  %v418 = vpop.f32.mrb[0].mxu0
  %419 = vmatprep.mubr.f32.mxu0 0.0
  %420 = vmatmul.mubr.f32.gmra.mrb[0].mxu0 %v141
  %v421 = vpop.f32.mrb[0].mxu0
  %v422 = vadd.f32 %v98, %v421
  %v423 = vpop.f32.mrb[0].mxu0
  %424 = vmatprep.mubr.f32.mxu0 0.0
  %425 = vmatmul.mubr.f32.gmra.mrb[0].mxu0 %v144
  %v426 = vpop.f32.mrb[0].mxu0
  %v427 = vadd.f32 %v98, %v426
  %v428 = vpop.f32.mrb[0].mxu0
  %429 = vmatprep.mubr.f32.mxu0 0.0
  %430 = vmatmul.mubr.f32.gmra.mrb[0].mxu0 %v147
  %v431 = vpop.f32.mrb[0].mxu0
  %v432 = vadd.f32 %v98, %v431
  %v433 = vpop.f32.mrb[0].mxu0
  %434 = vmatprep.mubr.f32.mxu0 0.0
  %435 = vmatmul.mubr.f32.gmra.mrb[0].mxu0 %v150
  %v436 = vpop.f32.mrb[0].mxu0
  %v437 = vadd.f32 %v98, %v436
  %v438 = vpop.f32.mrb[0].mxu0
  %439 = vmatprep.mubr.f32.mxu0 0.0
  %440 = vmatmul.mubr.f32.gmra.mrb[0].mxu0 %v153
  %v441 = vpop.f32.mrb[0].mxu0
  %v442 = vadd.f32 %v98, %v441
  %v443 = vpop.f32.mrb[0].mxu0
  %444 = vmatprep.mubr.f32.mxu0 0.0
  %445 = vmatmul.mubr.f32.gmra.mrb[0].mxu0 %v156
  %v446 = vpop.f32.mrb[0].mxu0
  %v447 = vadd.f32 %v98, %v446
  %v448 = vpop.f32.mrb[0].mxu0
  %449 = vmatprep.mubr.f32.mxu0 0.0
  %450 = vmatmul.mubr.f32.gmra.mrb[0].mxu0 %v159
  %v451 = vpop.f32.mrb[0].mxu0
  %v452 = vadd.f32 %v98, %v451
  %v453 = vpop.f32.mrb[0].mxu0
  %454 = vmatprep.mubr.f32.mxu0 0.0
  %455 = vmatmul.mubr.f32.gmra.mrb[0].mxu0 %v162
  %v456 = vpop.f32.mrb[0].mxu0
  %v457 = vadd.f32 %v98, %v456
  %v458 = vpop.f32.mrb[0].mxu0
  %459 = vmatprep.mubr.f32.mxu0 0.0
  %460 = vmatmul.mubr.f32.gmra.mrb[0].mxu0 %v165
  %v461 = vpop.f32.mrb[0].mxu0
  %v462 = vadd.f32 %v98, %v461
  %v463 = vpop.f32.mrb[0].mxu0
  %464 = vmatprep.mubr.f32.mxu0 0.0
  %465 = vmatmul.mubr.f32.gmra.mrb[0].mxu0 %v168
  %v466 = vpop.f32.mrb[0].mxu0
  %v467 = vadd.f32 %v98, %v466
  %v468 = vpop.f32.mrb[0].mxu0
  %469 = vmatprep.mubr.f32.mxu0 0.0
  %470 = vmatmul.mubr.f32.gmra.mrb[0].mxu0 %v171
  %v471 = vpop.f32.mrb[0].mxu0
  %v472 = vadd.f32 %v98, %v471
  %v473 = vpop.f32.mrb[0].mxu0
  %474 = vmatprep.mubr.f32.mxu0 0.0
  %475 = vmatmul.mubr.f32.gmra.mrb[0].mxu0 %v174
  %v476 = vpop.f32.mrb[0].mxu0
  %v477 = vadd.f32 %v98, %v476
  %v478 = vpop.f32.mrb[0].mxu0
  %479 = vmatprep.mubr.f32.mxu0 0.0
  %480 = vmatmul.mubr.f32.gmra.mrb[0].mxu0 %v177
  %v481 = vpop.f32.mrb[0].mxu0
  %v482 = vadd.f32 %v98, %v481
  %v483 = vpop.f32.mrb[0].mxu0
  %484 = vmatprep.mubr.f32.mxu0 0.0
  %485 = vmatmul.mubr.f32.gmra.mrb[0].mxu0 %v180
  %v486 = vpop.f32.mrb[0].mxu0
  %v487 = vadd.f32 %v98, %v486
  %v488 = vpop.f32.mrb[0].mxu0
  %489 = vmatprep.mubr.f32.mxu0 0.0
  %490 = vmatmul.mubr.f32.gmra.mrb[0].mxu0 %v183
  %v491 = vpop.f32.mrb[0].mxu0
  %v492 = vadd.f32 %v98, %v491
  %v493 = vpop.f32.mrb[0].mxu0
  %494 = vmatprep.mubr.f32.mxu0 0.0
  %495 = vmatmul.mubr.f32.gmra.mrb[0].mxu0 %v186
  %v496 = vpop.f32.mrb[0].mxu0
  %v497 = vadd.f32 %v98, %v496
  %v498 = vpop.f32.mrb[0].mxu0
  %499 = vmatprep.mubr.f32.mxu0 0.0
  %500 = vmatmul.mubr.f32.gmra.mrb[0].mxu0 %v189
  %v501 = vpop.f32.mrb[0].mxu0
  %v502 = vadd.f32 %v98, %v501
  %v503 = vpop.f32.mrb[0].mxu0
  %504 = vmatprep.mubr.f32.mxu0 0.0
  %505 = vmatmul.mubr.f32.gmra.mrb[0].mxu0 %v192
  %v506 = vpop.f32.mrb[0].mxu0
  %v507 = vadd.f32 %v98, %v506
  %v508 = vpop.f32.mrb[0].mxu0
  %509 = vmatprep.mubr.f32.mxu0 0.0
  %510 = vmatmul.mubr.f32.gmra.mrb[0].mxu0 %v195
  %v511 = vpop.f32.mrb[0].mxu0
  %v512 = vadd.f32 %v98, %v511
  %v513 = vpop.f32.mrb[0].mxu0
  %514 = vmatprep.mubr.f32.mxu0 0.0
  %515 = vmatmul.mubr.f32.gmra.mrb[0].mxu0 %v198
  %v516 = vpop.f32.mrb[0].mxu0
  %v517 = vadd.f32 %v98, %v516
  %v518 = vpop.f32.mrb[0].mxu0
  %519 = vmatprep.mubr.f32.mxu0 0.0
  %520 = vmatmul.mubr.f32.gmra.mrb[0].mxu0 %v201
  %v521 = vpop.f32.mrb[0].mxu0
  %v522 = vadd.f32 %v98, %v521
  %v523 = vpop.f32.mrb[0].mxu0
  %524 = vmatprep.mubr.f32.mxu0 0.0
  %525 = vmatmul.mubr.f32.gmra.mrb[0].mxu0 %v204
  %v526 = vpop.f32.mrb[0].mxu0
  %v527 = vadd.f32 %v98, %v526
  %v528 = vpop.f32.mrb[0].mxu0
  %529 = vmatprep.mubr.f32.mxu0 0.0
  %530 = vmatmul.mubr.f32.gmra.mrb[0].mxu0 %v207
  %v531 = vpop.f32.mrb[0].mxu0
  %v532 = vadd.f32 %v98, %v531
  %v533 = vpop.f32.mrb[0].mxu0
  %534 = vmatprep.mubr.f32.mxu0 0.0
  %535 = vmatmul.mubr.f32.gmra.mrb[0].mxu0 %v210
  %v536 = vpop.f32.mrb[0].mxu0
  %v537 = vadd.f32 %v98, %v536
  %v538 = vpop.f32.mrb[0].mxu0
  %539 = vmatprep.mubr.f32.mxu0 0.0
  %540 = vmatmul.mubr.f32.gmra.mrb[0].mxu0 %v213
  %v541 = vpop.f32.mrb[0].mxu0
  %v542 = vadd.f32 %v98, %v541
  %v543 = vpop.f32.mrb[0].mxu0
  %544 = vmatprep.mubr.f32.mxu0 0.0
  %545 = vmatmul.mubr.f32.gmra.mrb[0].mxu0 %v216
  %v546 = vpop.f32.mrb[0].mxu0
  %v547 = vadd.f32 %v98, %v546
  %v548 = vpop.f32.mrb[0].mxu0
  %549 = vmatprep.mubr.f32.mxu0 0.0
  %550 = vmatmul.mubr.f32.gmra.mrb[0].mxu0 %v219
  %v551 = vpop.f32.mrb[0].mxu0
  %v552 = vadd.f32 %v98, %v551
  %v553 = vpop.f32.mrb[0].mxu0
  %554 = vmatprep.mubr.f32.mxu0 0.0
  %555 = vmatmul.mubr.f32.gmra.mrb[0].mxu0 %v222
  %v556 = vpop.f32.mrb[0].mxu0
  %v557 = vadd.f32 %v98, %v556
  %v558 = vpop.f32.mrb[0].mxu0
  %559 = vmatprep.mubr.f32.mxu0 0.0
  %560 = vmatmul.mubr.f32.gmra.mrb[0].mxu0 %v225
  %v561 = vpop.f32.mrb[0].mxu0
  %v562 = vadd.f32 %v98, %v561
  %v563 = vpop.f32.mrb[0].mxu0
  %564 = vmatprep.mubr.f32.mxu0 0.0
  %565 = vmatmul.mubr.f32.gmra.mrb[0].mxu0 %v228
  %v566 = vpop.f32.mrb[0].mxu0
  %v567 = vadd.f32 %v98, %v566
  %v568 = vpop.f32.mrb[0].mxu0
  %569 = vmatprep.mubr.f32.mxu0 0.0
  %570 = vmatmul.mubr.f32.gmra.mrb[0].mxu0 %v231
  %v571 = vpop.f32.mrb[0].mxu0
  %v572 = vadd.f32 %v98, %v571
  %v573 = vpop.f32.mrb[0].mxu0
  %574 = vmatprep.mubr.f32.mxu0 0.0
  %575 = vmatmul.mubr.f32.gmra.mrb[0].mxu0 %v234
  %v576 = vpop.f32.mrb[0].mxu0
  %v577 = vadd.f32 %v98, %v576
  %v578 = vpop.f32.mrb[0].mxu0
  %579 = vmatprep.mubr.f32.mxu0 0.0
  %580 = vmatmul.mubr.f32.gmra.mrb[0].mxu0 %v237
  %v581 = vpop.f32.mrb[0].mxu0
  %v582 = vadd.f32 %v98, %v581
  %v583 = vpop.f32.mrb[0].mxu0
  %584 = vmatprep.mubr.f32.mxu0 0.0
  %585 = vmatmul.mubr.f32.gmra.mrb[0].mxu0 %v240
  %v586 = vpop.f32.mrb[0].mxu0
  %v587 = vadd.f32 %v98, %v586
  %v588 = vpop.f32.mrb[0].mxu0
  %589 = vmatprep.mubr.f32.mxu0 0.0
  %590 = vmatmul.mubr.f32.gmra.mrb[0].mxu0 %v243
  %v591 = vpop.f32.mrb[0].mxu0
  %v592 = vadd.f32 %v98, %v591
  %v593 = vpop.f32.mrb[0].mxu0
  %594 = vmatprep.mubr.f32.mxu0 0.0
  %595 = vmatmul.mubr.f32.gmra.mrb[0].mxu0 %v246
  %v596 = vpop.f32.mrb[0].mxu0
  %v597 = vadd.f32 %v98, %v596
  %v598 = vpop.f32.mrb[0].mxu0
  %599 = vmatprep.mubr.f32.mxu0 0.0
  %600 = vmatmul.mubr.f32.gmra.mrb[0].mxu0 %v249
  %v601 = vpop.f32.mrb[0].mxu0
  %v602 = vadd.f32 %v98, %v601
  %v603 = vpop.f32.mrb[0].mxu0
  %604 = vmatprep.mubr.f32.mxu0 0.0
  %605 = vmatmul.mubr.f32.gmra.mrb[0].mxu0 %v252
  %v606 = vpop.f32.mrb[0].mxu0
  %v607 = vadd.f32 %v98, %v606
  %v608 = vpop.f32.mrb[0].mxu0
  %609 = vmatprep.mubr.f32.mxu0 0.0
  %610 = vmatmul.mubr.f32.gmra.mrb[0].mxu0 %v255
  %v611 = vpop.f32.mrb[0].mxu0
  %v612 = vadd.f32 %v98, %v611
  %v613 = vpop.f32.mrb[0].mxu0
  %614 = vmatprep.mubr.f32.mxu0 0.0
  %615 = vmatmul.mubr.f32.gmra.mrb[0].mxu0 %v258
  %v616 = vpop.f32.mrb[0].mxu0
  %v617 = vadd.f32 %v98, %v616
  %v618 = vpop.f32.mrb[0].mxu0
  %619 = vmatprep.mubr.f32.mxu0 0.0
  %620 = vmatmul.mubr.f32.gmra.mrb[0].mxu0 %v261
  %v621 = vpop.f32.mrb[0].mxu0
  %v622 = vadd.f32 %v98, %v621
  %v623 = vpop.f32.mrb[0].mxu0
  %624 = vmatprep.mubr.f32.mxu0 0.0
  %625 = vmatmul.mubr.f32.gmra.mrb[0].mxu0 %v264
  %v626 = vpop.f32.mrb[0].mxu0
  %v627 = vadd.f32 %v98, %v626
  %v628 = vpop.f32.mrb[0].mxu0
  %629 = vmatprep.mubr.f32.mxu0 0.0
  %630 = vmatmul.mubr.f32.gmra.mrb[0].mxu0 %v267
  %v631 = vpop.f32.mrb[0].mxu0
  %v632 = vadd.f32 %v98, %v631
  %v633 = vpop.f32.mrb[0].mxu0
  %634 = vmatprep.mubr.f32.mxu0 0.0
  %635 = vmatmul.mubr.f32.gmra.mrb[0].mxu0 %v270
  %v636 = vpop.f32.mrb[0].mxu0
  %v637 = vadd.f32 %v98, %v636
  %v638 = vpop.f32.mrb[0].mxu0
  %639 = vmatprep.mubr.f32.mxu0 0.0
  %640 = vmatmul.mubr.f32.gmra.mrb[0].mxu0 %v273
  %v641 = vpop.f32.mrb[0].mxu0
  %v642 = vadd.f32 %v98, %v641
  %v643 = vpop.f32.mrb[0].mxu0
  %644 = vmatprep.mubr.f32.mxu0 0.0
  %645 = vmatmul.mubr.f32.gmra.mrb[0].mxu0 %v276
  %v646 = vpop.f32.mrb[0].mxu0
  %v647 = vadd.f32 %v98, %v646
  %v648 = vpop.f32.mrb[0].mxu0
  %649 = vmatprep.mubr.f32.mxu0 0.0
  %650 = vmatmul.mubr.f32.gmra.mrb[0].mxu0 %v279
  %v651 = vpop.f32.mrb[0].mxu0
  %v652 = vadd.f32 %v98, %v651
  %v653 = vpop.f32.mrb[0].mxu0
  %654 = vmatprep.mubr.f32.mxu0 0.0
  %655 = vmatmul.mubr.f32.gmra.mrb[0].mxu0 %v282
  %v656 = vpop.f32.mrb[0].mxu0
  %v657 = vadd.f32 %v98, %v656
  %v658 = vpop.f32.mrb[0].mxu0
  %659 = vmatprep.mubr.f32.mxu0 0.0
  %660 = vmatmul.mubr.f32.gmra.mrb[0].mxu0 %v285
  %v661 = vpop.f32.mrb[0].mxu0
  %v662 = vadd.f32 %v98, %v661
  %v663 = vpop.f32.mrb[0].mxu0
  %664 = vmatprep.mubr.f32.mxu0 0.0
  %665 = vmatmul.mubr.f32.gmra.mrb[0].mxu0 %v288
  %v666 = vpop.f32.mrb[0].mxu0
  %v667 = vadd.f32 %v98, %v666
  %v668 = vpop.f32.mrb[0].mxu0
  %669 = vdwg.mxu0
  %v670 = vtanh.pop %v357
  %v671 = vtanh.pop %v362
  %v672 = vtanh.pop %v367
  %v673 = vtanh.pop %v372
  %v674 = vtanh.pop %v377
  %v675 = vtanh.pop %v382
  %v676 = vtanh.pop %v387
  %v677 = vtanh.pop %v392
  %v678 = vtanh.pop %v397
  %v679 = vtanh.pop %v402
  %v680 = vtanh.pop %v407
  %v681 = vtanh.pop %v412
  %v682 = vtanh.pop %v417
  %v683 = vtanh.pop %v422
  %v684 = vtanh.pop %v427
  %v685 = vtanh.pop %v432
  %v686 = vtanh.pop %v437
  %v687 = vtanh.pop %v442
  %v688 = vtanh.pop %v447
  %v689 = vtanh.pop %v452
  %v690 = vtanh.pop %v457
  %v691 = vtanh.pop %v462
  %v692 = vtanh.pop %v467
  %v693 = vtanh.pop %v472
  %v694 = vtanh.pop %v477
  %v695 = vtanh.pop %v482
  %v696 = vtanh.pop %v487
  %v697 = vtanh.pop %v492
  %v698 = vtanh.pop %v497
  %v699 = vtanh.pop %v502
  %v700 = vtanh.pop %v507
  %v701 = vtanh.pop %v512
  %v702 = vtanh.pop %v517
  %v703 = vtanh.pop %v522
  %v704 = vtanh.pop %v527
  %v705 = vtanh.pop %v532
  %v706 = vtanh.pop %v537
  %v707 = vtanh.pop %v542
  %v708 = vtanh.pop %v547
  %v709 = vtanh.pop %v552
  %v710 = vtanh.pop %v557
  %v711 = vtanh.pop %v562
  %v712 = vtanh.pop %v567
  %v713 = vtanh.pop %v572
  %v714 = vtanh.pop %v577
  %v715 = vtanh.pop %v582
  %v716 = vtanh.pop %v587
  %v717 = vtanh.pop %v592
  %v718 = vtanh.pop %v597
  %v719 = vtanh.pop %v602
  %v720 = vtanh.pop %v607
  %v721 = vtanh.pop %v612
  %v722 = vtanh.pop %v617
  %v723 = vtanh.pop %v622
  %v724 = vtanh.pop %v627
  %v725 = vtanh.pop %v632
  %v726 = vtanh.pop %v637
  %v727 = vtanh.pop %v642
  %v728 = vtanh.pop %v647
  %v729 = vtanh.pop %v652
  %v730 = vtanh.pop %v657
  %v731 = vtanh.pop %v662
  %v732 = vtanh.pop %v667
  %v733 = vld [vmem:[%s3] sm:$0xff]
  %v734 = vld [vmem:[%s3 + $0x8] sm:$0xff]
  %v735 = vld [vmem:[%s3 + $0x10] sm:$0xff]
  %v736 = vld [vmem:[%s3 + $0x18] sm:$0xff]
  %v737 = vld [vmem:[%s3 + $0x20] sm:$0xff]
  %v738 = vld [vmem:[%s3 + $0x28] sm:$0xff]
  %v739 = vld [vmem:[%s3 + $0x30] sm:$0xff]
  %v740 = vld [vmem:[%s3 + $0x38] sm:$0xff]
  %v741 = vld [vmem:[%s3 + $0x40] sm:$0xff]
  %v742 = vld [vmem:[%s3 + $0x48] sm:$0xff]
  %v743 = vld [vmem:[%s3 + $0x50] sm:$0xff]
  %v744 = vld [vmem:[%s3 + $0x58] sm:$0xff]
  %v745 = vld [vmem:[%s3 + $0x60] sm:$0xff]
  %v746 = vld [vmem:[%s3 + $0x68] sm:$0xff]
  %v747 = vld [vmem:[%s3 + $0x70] sm:$0xff]
  %v748 = vld [vmem:[%s3 + $0x78] sm:$0xff]
  %v749 = vld [vmem:[%s4] sm:$0x1]
  %v751 = vlaneseq
  %v752 = vshrl.u32 %v751, 7
  %v753 = vsub.s32 0, %v752
  %v754 = vrot.slane %v749, %v753
  %756 = vmatprep.subr.mxu0 0.0
  %757 = vmatpush1.msra.mxu0 %v733
  %758 = vmatprep.subr.mxu0 0.0
  %759 = vmatpush1.msra.mxu0 %v734
  %760 = vmatprep.subr.mxu0 0.0
  %761 = vmatpush1.msra.mxu0 %v735
  %762 = vmatprep.subr.mxu0 0.0
  %763 = vmatpush1.msra.mxu0 %v736
  %764 = vmatprep.subr.mxu0 0.0
  %765 = vmatpush1.msra.mxu0 %v737
  %766 = vmatprep.subr.mxu0 0.0
  %767 = vmatpush1.msra.mxu0 %v738
  %768 = vmatprep.subr.mxu0 0.0
  %769 = vmatpush1.msra.mxu0 %v739
  %770 = vmatprep.subr.mxu0 0.0
  %771 = vmatpush1.msra.mxu0 %v740
  %772 = vmatprep.subr.mxu0 0.0
  %773 = vmatpush1.msra.mxu0 %v741
  %774 = vmatprep.subr.mxu0 0.0
  %775 = vmatpush1.msra.mxu0 %v742
  %776 = vmatprep.subr.mxu0 0.0
  %777 = vmatpush1.msra.mxu0 %v743
  %778 = vmatprep.subr.mxu0 0.0
  %779 = vmatpush1.msra.mxu0 %v744
  %780 = vmatprep.subr.mxu0 0.0
  %781 = vmatpush1.msra.mxu0 %v745
  %782 = vmatprep.subr.mxu0 0.0
  %783 = vmatpush1.msra.mxu0 %v746
  %784 = vmatprep.subr.mxu0 0.0
  %785 = vmatpush1.msra.mxu0 %v747
  %786 = vmatprep.subr.mxu0 0.0
  %787 = vmatpush1.msra.mxu0 %v748
  %788 = vmatprep.subr.mxu0 0.0
  %789 = vmatpush1.msra.mxu0 0.0
  %790 = vmatprep.subr.mxu0 0.0
  %791 = vmatpush1.msra.mxu0 0.0
  %792 = vmatprep.subr.mxu0 0.0
  %793 = vmatpush1.msra.mxu0 0.0
  %794 = vmatprep.subr.mxu0 0.0
  %795 = vmatpush1.msra.mxu0 0.0
  %796 = vmatprep.subr.mxu0 0.0
  %797 = vmatpush1.msra.mxu0 0.0
  %798 = vmatprep.subr.mxu0 0.0
  %799 = vmatpush1.msra.mxu0 0.0
  %800 = vmatprep.subr.mxu0 0.0
  %801 = vmatpush1.msra.mxu0 0.0
  %802 = vmatprep.subr.mxu0 0.0
  %803 = vmatpush1.msra.mxu0 0.0
  %804 = vmatprep.subr.mxu0 0.0
  %805 = vmatpush1.msra.mxu0 0.0
  %806 = vmatprep.subr.mxu0 0.0
  %807 = vmatpush1.msra.mxu0 0.0
  %808 = vmatprep.subr.mxu0 0.0
  %809 = vmatpush1.msra.mxu0 0.0
  %810 = vmatprep.subr.mxu0 0.0
  %811 = vmatpush1.msra.mxu0 0.0
  %812 = vmatprep.subr.mxu0 0.0
  %813 = vmatpush1.msra.mxu0 0.0
  %814 = vmatprep.subr.mxu0 0.0
  %815 = vmatpush1.msra.mxu0 0.0
  %816 = vmatprep.subr.mxu0 0.0
  %817 = vmatpush1.msra.mxu0 0.0
  %818 = vmatprep.subr.mxu0 0.0
  %819 = vmatpush1.msra.mxu0 0.0
  %820 = vmatprep.mubr.f32.mxu0 0.0
  %821 = vmatmul.mubr.f32.gmra.mrb[0].mxu0 %v670
  %v822 = vpop.f32.mrb[0].mxu0
  %v823 = vadd.f32 %v754, %v822
  %v824 = vpop.f32.mrb[0].mxu0
  %825 = vmatprep.mubr.f32.mxu0 0.0
  %826 = vmatmul.mubr.f32.gmra.mrb[0].mxu0 %v671
  %v827 = vpop.f32.mrb[0].mxu0
  %v828 = vadd.f32 %v754, %v827
  %v829 = vpop.f32.mrb[0].mxu0
  %830 = vmatprep.mubr.f32.mxu0 0.0
  %831 = vmatmul.mubr.f32.gmra.mrb[0].mxu0 %v672
  %v832 = vpop.f32.mrb[0].mxu0
  %v833 = vadd.f32 %v754, %v832
  %v834 = vpop.f32.mrb[0].mxu0
  %835 = vmatprep.mubr.f32.mxu0 0.0
  %836 = vmatmul.mubr.f32.gmra.mrb[0].mxu0 %v673
  %v837 = vpop.f32.mrb[0].mxu0
  %v838 = vadd.f32 %v754, %v837
  %v839 = vpop.f32.mrb[0].mxu0
  %840 = vmatprep.mubr.f32.mxu0 0.0
  %841 = vmatmul.mubr.f32.gmra.mrb[0].mxu0 %v674
  %v842 = vpop.f32.mrb[0].mxu0
  %v843 = vadd.f32 %v754, %v842
  %v844 = vpop.f32.mrb[0].mxu0
  %845 = vmatprep.mubr.f32.mxu0 0.0
  %846 = vmatmul.mubr.f32.gmra.mrb[0].mxu0 %v675
  %v847 = vpop.f32.mrb[0].mxu0
  %v848 = vadd.f32 %v754, %v847
  %v849 = vpop.f32.mrb[0].mxu0
  %850 = vmatprep.mubr.f32.mxu0 0.0
  %851 = vmatmul.mubr.f32.gmra.mrb[0].mxu0 %v676
  %v852 = vpop.f32.mrb[0].mxu0
  %v853 = vadd.f32 %v754, %v852
  %v854 = vpop.f32.mrb[0].mxu0
  %855 = vmatprep.mubr.f32.mxu0 0.0
  %856 = vmatmul.mubr.f32.gmra.mrb[0].mxu0 %v677
  %v857 = vpop.f32.mrb[0].mxu0
  %v858 = vadd.f32 %v754, %v857
  %v859 = vpop.f32.mrb[0].mxu0
  %860 = vmatprep.mubr.f32.mxu0 0.0
  %861 = vmatmul.mubr.f32.gmra.mrb[0].mxu0 %v678
  %v862 = vpop.f32.mrb[0].mxu0
  %v863 = vadd.f32 %v754, %v862
  %v864 = vpop.f32.mrb[0].mxu0
  %865 = vmatprep.mubr.f32.mxu0 0.0
  %866 = vmatmul.mubr.f32.gmra.mrb[0].mxu0 %v679
  %v867 = vpop.f32.mrb[0].mxu0
  %v868 = vadd.f32 %v754, %v867
  %v869 = vpop.f32.mrb[0].mxu0
  %870 = vmatprep.mubr.f32.mxu0 0.0
  %871 = vmatmul.mubr.f32.gmra.mrb[0].mxu0 %v680
  %v872 = vpop.f32.mrb[0].mxu0
  %v873 = vadd.f32 %v754, %v872
  %v874 = vpop.f32.mrb[0].mxu0
  %875 = vmatprep.mubr.f32.mxu0 0.0
  %876 = vmatmul.mubr.f32.gmra.mrb[0].mxu0 %v681
  %v877 = vpop.f32.mrb[0].mxu0
  %v878 = vadd.f32 %v754, %v877
  %v879 = vpop.f32.mrb[0].mxu0
  %880 = vmatprep.mubr.f32.mxu0 0.0
  %881 = vmatmul.mubr.f32.gmra.mrb[0].mxu0 %v682
  %v882 = vpop.f32.mrb[0].mxu0
  %v883 = vadd.f32 %v754, %v882
  %v884 = vpop.f32.mrb[0].mxu0
  %885 = vmatprep.mubr.f32.mxu0 0.0
  %886 = vmatmul.mubr.f32.gmra.mrb[0].mxu0 %v683
  %v887 = vpop.f32.mrb[0].mxu0
  %v888 = vadd.f32 %v754, %v887
  %v889 = vpop.f32.mrb[0].mxu0
  %890 = vmatprep.mubr.f32.mxu0 0.0
  %891 = vmatmul.mubr.f32.gmra.mrb[0].mxu0 %v684
  %v892 = vpop.f32.mrb[0].mxu0
  %v893 = vadd.f32 %v754, %v892
  %v894 = vpop.f32.mrb[0].mxu0
  %895 = vmatprep.mubr.f32.mxu0 0.0
  %896 = vmatmul.mubr.f32.gmra.mrb[0].mxu0 %v685
  %v897 = vpop.f32.mrb[0].mxu0
  %v898 = vadd.f32 %v754, %v897
  %v899 = vpop.f32.mrb[0].mxu0
  %900 = vmatprep.mubr.f32.mxu0 0.0
  %901 = vmatmul.mubr.f32.gmra.mrb[0].mxu0 %v686
  %v902 = vpop.f32.mrb[0].mxu0
  %v903 = vadd.f32 %v754, %v902
  %v904 = vpop.f32.mrb[0].mxu0
  %905 = vmatprep.mubr.f32.mxu0 0.0
  %906 = vmatmul.mubr.f32.gmra.mrb[0].mxu0 %v687
  %v907 = vpop.f32.mrb[0].mxu0
  %v908 = vadd.f32 %v754, %v907
  %v909 = vpop.f32.mrb[0].mxu0
  %910 = vmatprep.mubr.f32.mxu0 0.0
  %911 = vmatmul.mubr.f32.gmra.mrb[0].mxu0 %v688
  %v912 = vpop.f32.mrb[0].mxu0
  %v913 = vadd.f32 %v754, %v912
  %v914 = vpop.f32.mrb[0].mxu0
  %915 = vmatprep.mubr.f32.mxu0 0.0
  %916 = vmatmul.mubr.f32.gmra.mrb[0].mxu0 %v689
  %v917 = vpop.f32.mrb[0].mxu0
  %v918 = vadd.f32 %v754, %v917
  %v919 = vpop.f32.mrb[0].mxu0
  %920 = vmatprep.mubr.f32.mxu0 0.0
  %921 = vmatmul.mubr.f32.gmra.mrb[0].mxu0 %v690
  %v922 = vpop.f32.mrb[0].mxu0
  %v923 = vadd.f32 %v754, %v922
  %v924 = vpop.f32.mrb[0].mxu0
  %925 = vmatprep.mubr.f32.mxu0 0.0
  %926 = vmatmul.mubr.f32.gmra.mrb[0].mxu0 %v691
  %v927 = vpop.f32.mrb[0].mxu0
  %v928 = vadd.f32 %v754, %v927
  %v929 = vpop.f32.mrb[0].mxu0
  %930 = vmatprep.mubr.f32.mxu0 0.0
  %931 = vmatmul.mubr.f32.gmra.mrb[0].mxu0 %v692
  %v932 = vpop.f32.mrb[0].mxu0
  %v933 = vadd.f32 %v754, %v932
  %v934 = vpop.f32.mrb[0].mxu0
  %935 = vmatprep.mubr.f32.mxu0 0.0
  %936 = vmatmul.mubr.f32.gmra.mrb[0].mxu0 %v693
  %v937 = vpop.f32.mrb[0].mxu0
  %v938 = vadd.f32 %v754, %v937
  %v939 = vpop.f32.mrb[0].mxu0
  %940 = vmatprep.mubr.f32.mxu0 0.0
  %941 = vmatmul.mubr.f32.gmra.mrb[0].mxu0 %v694
  %v942 = vpop.f32.mrb[0].mxu0
  %v943 = vadd.f32 %v754, %v942
  %v944 = vpop.f32.mrb[0].mxu0
  %945 = vmatprep.mubr.f32.mxu0 0.0
  %946 = vmatmul.mubr.f32.gmra.mrb[0].mxu0 %v695
  %v947 = vpop.f32.mrb[0].mxu0
  %v948 = vadd.f32 %v754, %v947
  %v949 = vpop.f32.mrb[0].mxu0
  %950 = vmatprep.mubr.f32.mxu0 0.0
  %951 = vmatmul.mubr.f32.gmra.mrb[0].mxu0 %v696
  %v952 = vpop.f32.mrb[0].mxu0
  %v953 = vadd.f32 %v754, %v952
  %v954 = vpop.f32.mrb[0].mxu0
  %955 = vmatprep.mubr.f32.mxu0 0.0
  %956 = vmatmul.mubr.f32.gmra.mrb[0].mxu0 %v697
  %v957 = vpop.f32.mrb[0].mxu0
  %v958 = vadd.f32 %v754, %v957
  %v959 = vpop.f32.mrb[0].mxu0
  %960 = vmatprep.mubr.f32.mxu0 0.0
  %961 = vmatmul.mubr.f32.gmra.mrb[0].mxu0 %v698
  %v962 = vpop.f32.mrb[0].mxu0
  %v963 = vadd.f32 %v754, %v962
  %v964 = vpop.f32.mrb[0].mxu0
  %965 = vmatprep.mubr.f32.mxu0 0.0
  %966 = vmatmul.mubr.f32.gmra.mrb[0].mxu0 %v699
  %v967 = vpop.f32.mrb[0].mxu0
  %v968 = vadd.f32 %v754, %v967
  %v969 = vpop.f32.mrb[0].mxu0
  %970 = vmatprep.mubr.f32.mxu0 0.0
  %971 = vmatmul.mubr.f32.gmra.mrb[0].mxu0 %v700
  %v972 = vpop.f32.mrb[0].mxu0
  %v973 = vadd.f32 %v754, %v972
  %v974 = vpop.f32.mrb[0].mxu0
  %975 = vmatprep.mubr.f32.mxu0 0.0
  %976 = vmatmul.mubr.f32.gmra.mrb[0].mxu0 %v701
  %v977 = vpop.f32.mrb[0].mxu0
  %v978 = vadd.f32 %v754, %v977
  %v979 = vpop.f32.mrb[0].mxu0
  %980 = vmatprep.mubr.f32.mxu0 0.0
  %981 = vmatmul.mubr.f32.gmra.mrb[0].mxu0 %v702
  %v982 = vpop.f32.mrb[0].mxu0
  %v983 = vadd.f32 %v754, %v982
  %v984 = vpop.f32.mrb[0].mxu0
  %985 = vmatprep.mubr.f32.mxu0 0.0
  %986 = vmatmul.mubr.f32.gmra.mrb[0].mxu0 %v703
  %v987 = vpop.f32.mrb[0].mxu0
  %v988 = vadd.f32 %v754, %v987
  %v989 = vpop.f32.mrb[0].mxu0
  %990 = vmatprep.mubr.f32.mxu0 0.0
  %991 = vmatmul.mubr.f32.gmra.mrb[0].mxu0 %v704
  %v992 = vpop.f32.mrb[0].mxu0
  %v993 = vadd.f32 %v754, %v992
  %v994 = vpop.f32.mrb[0].mxu0
  %995 = vmatprep.mubr.f32.mxu0 0.0
  %996 = vmatmul.mubr.f32.gmra.mrb[0].mxu0 %v705
  %v997 = vpop.f32.mrb[0].mxu0
  %v998 = vadd.f32 %v754, %v997
  %v999 = vpop.f32.mrb[0].mxu0
  %1000 = vmatprep.mubr.f32.mxu0 0.0
  %1001 = vmatmul.mubr.f32.gmra.mrb[0].mxu0 %v706
  %v1002 = vpop.f32.mrb[0].mxu0
  %v1003 = vadd.f32 %v754, %v1002
  %v1004 = vpop.f32.mrb[0].mxu0
  %1005 = vmatprep.mubr.f32.mxu0 0.0
  %1006 = vmatmul.mubr.f32.gmra.mrb[0].mxu0 %v707
  %v1007 = vpop.f32.mrb[0].mxu0
  %v1008 = vadd.f32 %v754, %v1007
  %v1009 = vpop.f32.mrb[0].mxu0
  %1010 = vmatprep.mubr.f32.mxu0 0.0
  %1011 = vmatmul.mubr.f32.gmra.mrb[0].mxu0 %v708
  %v1012 = vpop.f32.mrb[0].mxu0
  %v1013 = vadd.f32 %v754, %v1012
  %v1014 = vpop.f32.mrb[0].mxu0
  %1015 = vmatprep.mubr.f32.mxu0 0.0
  %1016 = vmatmul.mubr.f32.gmra.mrb[0].mxu0 %v709
  %v1017 = vpop.f32.mrb[0].mxu0
  %v1018 = vadd.f32 %v754, %v1017
  %v1019 = vpop.f32.mrb[0].mxu0
  %1020 = vmatprep.mubr.f32.mxu0 0.0
  %1021 = vmatmul.mubr.f32.gmra.mrb[0].mxu0 %v710
  %v1022 = vpop.f32.mrb[0].mxu0
  %v1023 = vadd.f32 %v754, %v1022
  %v1024 = vpop.f32.mrb[0].mxu0
  %1025 = vmatprep.mubr.f32.mxu0 0.0
  %1026 = vmatmul.mubr.f32.gmra.mrb[0].mxu0 %v711
  %v1027 = vpop.f32.mrb[0].mxu0
  %v1028 = vadd.f32 %v754, %v1027
  %v1029 = vpop.f32.mrb[0].mxu0
  %1030 = vmatprep.mubr.f32.mxu0 0.0
  %1031 = vmatmul.mubr.f32.gmra.mrb[0].mxu0 %v712
  %v1032 = vpop.f32.mrb[0].mxu0
  %v1033 = vadd.f32 %v754, %v1032
  %v1034 = vpop.f32.mrb[0].mxu0
  %1035 = vmatprep.mubr.f32.mxu0 0.0
  %1036 = vmatmul.mubr.f32.gmra.mrb[0].mxu0 %v713
  %v1037 = vpop.f32.mrb[0].mxu0
  %v1038 = vadd.f32 %v754, %v1037
  %v1039 = vpop.f32.mrb[0].mxu0
  %1040 = vmatprep.mubr.f32.mxu0 0.0
  %1041 = vmatmul.mubr.f32.gmra.mrb[0].mxu0 %v714
  %v1042 = vpop.f32.mrb[0].mxu0
  %v1043 = vadd.f32 %v754, %v1042
  %v1044 = vpop.f32.mrb[0].mxu0
  %1045 = vmatprep.mubr.f32.mxu0 0.0
  %1046 = vmatmul.mubr.f32.gmra.mrb[0].mxu0 %v715
  %v1047 = vpop.f32.mrb[0].mxu0
  %v1048 = vadd.f32 %v754, %v1047
  %v1049 = vpop.f32.mrb[0].mxu0
  %1050 = vmatprep.mubr.f32.mxu0 0.0
  %1051 = vmatmul.mubr.f32.gmra.mrb[0].mxu0 %v716
  %v1052 = vpop.f32.mrb[0].mxu0
  %v1053 = vadd.f32 %v754, %v1052
  %v1054 = vpop.f32.mrb[0].mxu0
  %1055 = vmatprep.mubr.f32.mxu0 0.0
  %1056 = vmatmul.mubr.f32.gmra.mrb[0].mxu0 %v717
  %v1057 = vpop.f32.mrb[0].mxu0
  %v1058 = vadd.f32 %v754, %v1057
  %v1059 = vpop.f32.mrb[0].mxu0
  %1060 = vmatprep.mubr.f32.mxu0 0.0
  %1061 = vmatmul.mubr.f32.gmra.mrb[0].mxu0 %v718
  %v1062 = vpop.f32.mrb[0].mxu0
  %v1063 = vadd.f32 %v754, %v1062
  %v1064 = vpop.f32.mrb[0].mxu0
  %1065 = vmatprep.mubr.f32.mxu0 0.0
  %1066 = vmatmul.mubr.f32.gmra.mrb[0].mxu0 %v719
  %v1067 = vpop.f32.mrb[0].mxu0
  %v1068 = vadd.f32 %v754, %v1067
  %v1069 = vpop.f32.mrb[0].mxu0
  %1070 = vmatprep.mubr.f32.mxu0 0.0
  %1071 = vmatmul.mubr.f32.gmra.mrb[0].mxu0 %v720
  %v1072 = vpop.f32.mrb[0].mxu0
  %v1073 = vadd.f32 %v754, %v1072
  %v1074 = vpop.f32.mrb[0].mxu0
  %1075 = vmatprep.mubr.f32.mxu0 0.0
  %1076 = vmatmul.mubr.f32.gmra.mrb[0].mxu0 %v721
  %v1077 = vpop.f32.mrb[0].mxu0
  %v1078 = vadd.f32 %v754, %v1077
  %v1079 = vpop.f32.mrb[0].mxu0
  %1080 = vmatprep.mubr.f32.mxu0 0.0
  %1081 = vmatmul.mubr.f32.gmra.mrb[0].mxu0 %v722
  %v1082 = vpop.f32.mrb[0].mxu0
  %v1083 = vadd.f32 %v754, %v1082
  %v1084 = vpop.f32.mrb[0].mxu0
  %1085 = vmatprep.mubr.f32.mxu0 0.0
  %1086 = vmatmul.mubr.f32.gmra.mrb[0].mxu0 %v723
  %v1087 = vpop.f32.mrb[0].mxu0
  %v1088 = vadd.f32 %v754, %v1087
  %v1089 = vpop.f32.mrb[0].mxu0
  %1090 = vmatprep.mubr.f32.mxu0 0.0
  %1091 = vmatmul.mubr.f32.gmra.mrb[0].mxu0 %v724
  %v1092 = vpop.f32.mrb[0].mxu0
  %v1093 = vadd.f32 %v754, %v1092
  %v1094 = vpop.f32.mrb[0].mxu0
  %1095 = vmatprep.mubr.f32.mxu0 0.0
  %1096 = vmatmul.mubr.f32.gmra.mrb[0].mxu0 %v725
  %v1097 = vpop.f32.mrb[0].mxu0
  %v1098 = vadd.f32 %v754, %v1097
  %v1099 = vpop.f32.mrb[0].mxu0
  %1100 = vmatprep.mubr.f32.mxu0 0.0
  %1101 = vmatmul.mubr.f32.gmra.mrb[0].mxu0 %v726
  %v1102 = vpop.f32.mrb[0].mxu0
  %v1103 = vadd.f32 %v754, %v1102
  %v1104 = vpop.f32.mrb[0].mxu0
  %1105 = vmatprep.mubr.f32.mxu0 0.0
  %1106 = vmatmul.mubr.f32.gmra.mrb[0].mxu0 %v727
  %v1107 = vpop.f32.mrb[0].mxu0
  %v1108 = vadd.f32 %v754, %v1107
  %v1109 = vpop.f32.mrb[0].mxu0
  %1110 = vmatprep.mubr.f32.mxu0 0.0
  %1111 = vmatmul.mubr.f32.gmra.mrb[0].mxu0 %v728
  %v1112 = vpop.f32.mrb[0].mxu0
  %v1113 = vadd.f32 %v754, %v1112
  %v1114 = vpop.f32.mrb[0].mxu0
  %1115 = vmatprep.mubr.f32.mxu0 0.0
  %1116 = vmatmul.mubr.f32.gmra.mrb[0].mxu0 %v729
  %v1117 = vpop.f32.mrb[0].mxu0
  %v1118 = vadd.f32 %v754, %v1117
  %v1119 = vpop.f32.mrb[0].mxu0
  %1120 = vmatprep.mubr.f32.mxu0 0.0
  %1121 = vmatmul.mubr.f32.gmra.mrb[0].mxu0 %v730
  %v1122 = vpop.f32.mrb[0].mxu0
  %v1123 = vadd.f32 %v754, %v1122
  %v1124 = vpop.f32.mrb[0].mxu0
  %1125 = vmatprep.mubr.f32.mxu0 0.0
  %1126 = vmatmul.mubr.f32.gmra.mrb[0].mxu0 %v731
  %v1127 = vpop.f32.mrb[0].mxu0
  %v1128 = vadd.f32 %v754, %v1127
  %v1129 = vpop.f32.mrb[0].mxu0
  %1130 = vmatprep.mubr.f32.mxu0 0.0
  %1131 = vmatmul.mubr.f32.gmra.mrb[0].mxu0 %v732
  %v1132 = vpop.f32.mrb[0].mxu0
  %v1133 = vadd.f32 %v754, %v1132
  %v1134 = vpop.f32.mrb[0].mxu0
  %1135 = vdwg.mxu0
  %v1136 = vtanh.pop %v823
  %v1137 = vtanh.pop %v828
  %v1138 = vtanh.pop %v833
  %v1139 = vtanh.pop %v838
  %v1140 = vtanh.pop %v843
  %v1141 = vtanh.pop %v848
  %v1142 = vtanh.pop %v853
  %v1143 = vtanh.pop %v858
  %v1144 = vtanh.pop %v863
  %v1145 = vtanh.pop %v868
  %v1146 = vtanh.pop %v873
  %v1147 = vtanh.pop %v878
  %v1148 = vtanh.pop %v883
  %v1149 = vtanh.pop %v888
  %v1150 = vtanh.pop %v893
  %v1151 = vtanh.pop %v898
  %v1152 = vtanh.pop %v903
  %v1153 = vtanh.pop %v908
  %v1154 = vtanh.pop %v913
  %v1155 = vtanh.pop %v918
  %v1156 = vtanh.pop %v923
  %v1157 = vtanh.pop %v928
  %v1158 = vtanh.pop %v933
  %v1159 = vtanh.pop %v938
  %v1160 = vtanh.pop %v943
  %v1161 = vtanh.pop %v948
  %v1162 = vtanh.pop %v953
  %v1163 = vtanh.pop %v958
  %v1164 = vtanh.pop %v963
  %v1165 = vtanh.pop %v968
  %v1166 = vtanh.pop %v973
  %v1167 = vtanh.pop %v978
  %v1168 = vtanh.pop %v983
  %v1169 = vtanh.pop %v988
  %v1170 = vtanh.pop %v993
  %v1171 = vtanh.pop %v998
  %v1172 = vtanh.pop %v1003
  %v1173 = vtanh.pop %v1008
  %v1174 = vtanh.pop %v1013
  %v1175 = vtanh.pop %v1018
  %v1176 = vtanh.pop %v1023
  %v1177 = vtanh.pop %v1028
  %v1178 = vtanh.pop %v1033
  %v1179 = vtanh.pop %v1038
  %v1180 = vtanh.pop %v1043
  %v1181 = vtanh.pop %v1048
  %v1182 = vtanh.pop %v1053
  %v1183 = vtanh.pop %v1058
  %v1184 = vtanh.pop %v1063
  %v1185 = vtanh.pop %v1068
  %v1186 = vtanh.pop %v1073
  %v1187 = vtanh.pop %v1078
  %v1188 = vtanh.pop %v1083
  %v1189 = vtanh.pop %v1088
  %v1190 = vtanh.pop %v1093
  %v1191 = vtanh.pop %v1098
  %v1192 = vtanh.pop %v1103
  %v1193 = vtanh.pop %v1108
  %v1194 = vtanh.pop %v1113
  %v1195 = vtanh.pop %v1118
  %v1196 = vtanh.pop %v1123
  %v1197 = vtanh.pop %v1128
  %v1198 = vtanh.pop %v1133
  %v1199 = vld [vmem:[%s5] sm:$0xff]
  %v1200 = vld [vmem:[%s5 + $0x8] sm:$0xff]
  %v1201 = vld [vmem:[%s5 + $0x10] sm:$0xff]
  %v1202 = vld [vmem:[%s5 + $0x18] sm:$0xff]
  %v1203 = vld [vmem:[%s5 + $0x20] sm:$0xff]
  %v1204 = vld [vmem:[%s5 + $0x28] sm:$0xff]
  %v1205 = vld [vmem:[%s5 + $0x30] sm:$0xff]
  %v1206 = vld [vmem:[%s5 + $0x38] sm:$0xff]
  %v1207 = vld [vmem:[%s5 + $0x40] sm:$0xff]
  %v1208 = vld [vmem:[%s5 + $0x48] sm:$0xff]
  %v1209 = vld [vmem:[%s5 + $0x50] sm:$0xff]
  %v1210 = vld [vmem:[%s5 + $0x58] sm:$0xff]
  %v1211 = vld [vmem:[%s5 + $0x60] sm:$0xff]
  %v1212 = vld [vmem:[%s5 + $0x68] sm:$0xff]
  %v1213 = vld [vmem:[%s5 + $0x70] sm:$0xff]
  %v1214 = vld [vmem:[%s5 + $0x78] sm:$0xff]
  %v1215 = vld [vmem:[%s6] sm:$0x1]
  %v1217 = vlaneseq
  %v1218 = vshrl.u32 %v1217, 7
  %v1219 = vsub.s32 0, %v1218
  %v1220 = vrot.slane %v1215, %v1219
  %1222 = vmatprep.subr.mxu0 0.0
  %1223 = vmatpush1.msra.mxu0 %v1199
  %1224 = vmatprep.subr.mxu0 0.0
  %1225 = vmatpush1.msra.mxu0 %v1200
  %1226 = vmatprep.subr.mxu0 0.0
  %1227 = vmatpush1.msra.mxu0 %v1201
  %1228 = vmatprep.subr.mxu0 0.0
  %1229 = vmatpush1.msra.mxu0 %v1202
  %1230 = vmatprep.subr.mxu0 0.0
  %1231 = vmatpush1.msra.mxu0 %v1203
  %1232 = vmatprep.subr.mxu0 0.0
  %1233 = vmatpush1.msra.mxu0 %v1204
  %1234 = vmatprep.subr.mxu0 0.0
  %1235 = vmatpush1.msra.mxu0 %v1205
  %1236 = vmatprep.subr.mxu0 0.0
  %1237 = vmatpush1.msra.mxu0 %v1206
  %1238 = vmatprep.subr.mxu0 0.0
  %1239 = vmatpush1.msra.mxu0 %v1207
  %1240 = vmatprep.subr.mxu0 0.0
  %1241 = vmatpush1.msra.mxu0 %v1208
  %1242 = vmatprep.subr.mxu0 0.0
  %1243 = vmatpush1.msra.mxu0 %v1209
  %1244 = vmatprep.subr.mxu0 0.0
  %1245 = vmatpush1.msra.mxu0 %v1210
  %1246 = vmatprep.subr.mxu0 0.0
  %1247 = vmatpush1.msra.mxu0 %v1211
  %1248 = vmatprep.subr.mxu0 0.0
  %1249 = vmatpush1.msra.mxu0 %v1212
  %1250 = vmatprep.subr.mxu0 0.0
  %1251 = vmatpush1.msra.mxu0 %v1213
  %1252 = vmatprep.subr.mxu0 0.0
  %1253 = vmatpush1.msra.mxu0 %v1214
  %1254 = vmatprep.subr.mxu0 0.0
  %1255 = vmatpush1.msra.mxu0 0.0
  %1256 = vmatprep.subr.mxu0 0.0
  %1257 = vmatpush1.msra.mxu0 0.0
  %1258 = vmatprep.subr.mxu0 0.0
  %1259 = vmatpush1.msra.mxu0 0.0
  %1260 = vmatprep.subr.mxu0 0.0
  %1261 = vmatpush1.msra.mxu0 0.0
  %1262 = vmatprep.subr.mxu0 0.0
  %1263 = vmatpush1.msra.mxu0 0.0
  %1264 = vmatprep.subr.mxu0 0.0
  %1265 = vmatpush1.msra.mxu0 0.0
  %1266 = vmatprep.subr.mxu0 0.0
  %1267 = vmatpush1.msra.mxu0 0.0
  %1268 = vmatprep.subr.mxu0 0.0
  %1269 = vmatpush1.msra.mxu0 0.0
  %1270 = vmatprep.subr.mxu0 0.0
  %1271 = vmatpush1.msra.mxu0 0.0
  %1272 = vmatprep.subr.mxu0 0.0
  %1273 = vmatpush1.msra.mxu0 0.0
  %1274 = vmatprep.subr.mxu0 0.0
  %1275 = vmatpush1.msra.mxu0 0.0
  %1276 = vmatprep.subr.mxu0 0.0
  %1277 = vmatpush1.msra.mxu0 0.0
  %1278 = vmatprep.subr.mxu0 0.0
  %1279 = vmatpush1.msra.mxu0 0.0
  %1280 = vmatprep.subr.mxu0 0.0
  %1281 = vmatpush1.msra.mxu0 0.0
  %1282 = vmatprep.subr.mxu0 0.0
  %1283 = vmatpush1.msra.mxu0 0.0
  %1284 = vmatprep.subr.mxu0 0.0
  %1285 = vmatpush1.msra.mxu0 0.0
  %1286 = vmatprep.mubr.f32.mxu0 0.0
  %1287 = vmatmul.mubr.f32.gmra.mrb[0].mxu0 %v1136
  %v1288 = vpop.f32.mrb[0].mxu0
  %v1289 = vadd.f32 %v1220, %v1288
  %v1290 = vpop.f32.mrb[0].mxu0
  %1291 = vmatprep.mubr.f32.mxu0 0.0
  %1292 = vmatmul.mubr.f32.gmra.mrb[0].mxu0 %v1137
  %v1293 = vpop.f32.mrb[0].mxu0
  %v1294 = vadd.f32 %v1220, %v1293
  %v1295 = vpop.f32.mrb[0].mxu0
  %1296 = vmatprep.mubr.f32.mxu0 0.0
  %1297 = vmatmul.mubr.f32.gmra.mrb[0].mxu0 %v1138
  %v1298 = vpop.f32.mrb[0].mxu0
  %v1299 = vadd.f32 %v1220, %v1298
  %v1300 = vpop.f32.mrb[0].mxu0
  %1301 = vmatprep.mubr.f32.mxu0 0.0
  %1302 = vmatmul.mubr.f32.gmra.mrb[0].mxu0 %v1139
  %v1303 = vpop.f32.mrb[0].mxu0
  %v1304 = vadd.f32 %v1220, %v1303
  %v1305 = vpop.f32.mrb[0].mxu0
  %1306 = vmatprep.mubr.f32.mxu0 0.0
  %1307 = vmatmul.mubr.f32.gmra.mrb[0].mxu0 %v1140
  %v1308 = vpop.f32.mrb[0].mxu0
  %v1309 = vadd.f32 %v1220, %v1308
  %v1310 = vpop.f32.mrb[0].mxu0
  %1311 = vmatprep.mubr.f32.mxu0 0.0
  %1312 = vmatmul.mubr.f32.gmra.mrb[0].mxu0 %v1141
  %v1313 = vpop.f32.mrb[0].mxu0
  %v1314 = vadd.f32 %v1220, %v1313
  %v1315 = vpop.f32.mrb[0].mxu0
  %1316 = vmatprep.mubr.f32.mxu0 0.0
  %1317 = vmatmul.mubr.f32.gmra.mrb[0].mxu0 %v1142
  %v1318 = vpop.f32.mrb[0].mxu0
  %v1319 = vadd.f32 %v1220, %v1318
  %v1320 = vpop.f32.mrb[0].mxu0
  %1321 = vmatprep.mubr.f32.mxu0 0.0
  %1322 = vmatmul.mubr.f32.gmra.mrb[0].mxu0 %v1143
  %v1323 = vpop.f32.mrb[0].mxu0
  %v1324 = vadd.f32 %v1220, %v1323
  %v1325 = vpop.f32.mrb[0].mxu0
  %1326 = vmatprep.mubr.f32.mxu0 0.0
  %1327 = vmatmul.mubr.f32.gmra.mrb[0].mxu0 %v1144
  %v1328 = vpop.f32.mrb[0].mxu0
  %v1329 = vadd.f32 %v1220, %v1328
  %v1330 = vpop.f32.mrb[0].mxu0
  %1331 = vmatprep.mubr.f32.mxu0 0.0
  %1332 = vmatmul.mubr.f32.gmra.mrb[0].mxu0 %v1145
  %v1333 = vpop.f32.mrb[0].mxu0
  %v1334 = vadd.f32 %v1220, %v1333
  %v1335 = vpop.f32.mrb[0].mxu0
  %1336 = vmatprep.mubr.f32.mxu0 0.0
  %1337 = vmatmul.mubr.f32.gmra.mrb[0].mxu0 %v1146
  %v1338 = vpop.f32.mrb[0].mxu0
  %v1339 = vadd.f32 %v1220, %v1338
  %v1340 = vpop.f32.mrb[0].mxu0
  %1341 = vmatprep.mubr.f32.mxu0 0.0
  %1342 = vmatmul.mubr.f32.gmra.mrb[0].mxu0 %v1147
  %v1343 = vpop.f32.mrb[0].mxu0
  %v1344 = vadd.f32 %v1220, %v1343
  %v1345 = vpop.f32.mrb[0].mxu0
  %1346 = vmatprep.mubr.f32.mxu0 0.0
  %1347 = vmatmul.mubr.f32.gmra.mrb[0].mxu0 %v1148
  %v1348 = vpop.f32.mrb[0].mxu0
  %v1349 = vadd.f32 %v1220, %v1348
  %v1350 = vpop.f32.mrb[0].mxu0
  %1351 = vmatprep.mubr.f32.mxu0 0.0
  %1352 = vmatmul.mubr.f32.gmra.mrb[0].mxu0 %v1149
  %v1353 = vpop.f32.mrb[0].mxu0
  %v1354 = vadd.f32 %v1220, %v1353
  %v1355 = vpop.f32.mrb[0].mxu0
  %1356 = vmatprep.mubr.f32.mxu0 0.0
  %1357 = vmatmul.mubr.f32.gmra.mrb[0].mxu0 %v1150
  %v1358 = vpop.f32.mrb[0].mxu0
  %v1359 = vadd.f32 %v1220, %v1358
  %v1360 = vpop.f32.mrb[0].mxu0
  %1361 = vmatprep.mubr.f32.mxu0 0.0
  %1362 = vmatmul.mubr.f32.gmra.mrb[0].mxu0 %v1151
  %v1363 = vpop.f32.mrb[0].mxu0
  %v1364 = vadd.f32 %v1220, %v1363
  %v1365 = vpop.f32.mrb[0].mxu0
  %1366 = vmatprep.mubr.f32.mxu0 0.0
  %1367 = vmatmul.mubr.f32.gmra.mrb[0].mxu0 %v1152
  %v1368 = vpop.f32.mrb[0].mxu0
  %v1369 = vadd.f32 %v1220, %v1368
  %v1370 = vpop.f32.mrb[0].mxu0
  %1371 = vmatprep.mubr.f32.mxu0 0.0
  %1372 = vmatmul.mubr.f32.gmra.mrb[0].mxu0 %v1153
  %v1373 = vpop.f32.mrb[0].mxu0
  %v1374 = vadd.f32 %v1220, %v1373
  %v1375 = vpop.f32.mrb[0].mxu0
  %1376 = vmatprep.mubr.f32.mxu0 0.0
  %1377 = vmatmul.mubr.f32.gmra.mrb[0].mxu0 %v1154
  %v1378 = vpop.f32.mrb[0].mxu0
  %v1379 = vadd.f32 %v1220, %v1378
  %v1380 = vpop.f32.mrb[0].mxu0
  %1381 = vmatprep.mubr.f32.mxu0 0.0
  %1382 = vmatmul.mubr.f32.gmra.mrb[0].mxu0 %v1155
  %v1383 = vpop.f32.mrb[0].mxu0
  %v1384 = vadd.f32 %v1220, %v1383
  %v1385 = vpop.f32.mrb[0].mxu0
  %1386 = vmatprep.mubr.f32.mxu0 0.0
  %1387 = vmatmul.mubr.f32.gmra.mrb[0].mxu0 %v1156
  %v1388 = vpop.f32.mrb[0].mxu0
  %v1389 = vadd.f32 %v1220, %v1388
  %v1390 = vpop.f32.mrb[0].mxu0
  %1391 = vmatprep.mubr.f32.mxu0 0.0
  %1392 = vmatmul.mubr.f32.gmra.mrb[0].mxu0 %v1157
  %v1393 = vpop.f32.mrb[0].mxu0
  %v1394 = vadd.f32 %v1220, %v1393
  %v1395 = vpop.f32.mrb[0].mxu0
  %1396 = vmatprep.mubr.f32.mxu0 0.0
  %1397 = vmatmul.mubr.f32.gmra.mrb[0].mxu0 %v1158
  %v1398 = vpop.f32.mrb[0].mxu0
  %v1399 = vadd.f32 %v1220, %v1398
  %v1400 = vpop.f32.mrb[0].mxu0
  %1401 = vmatprep.mubr.f32.mxu0 0.0
  %1402 = vmatmul.mubr.f32.gmra.mrb[0].mxu0 %v1159
  %v1403 = vpop.f32.mrb[0].mxu0
  %v1404 = vadd.f32 %v1220, %v1403
  %v1405 = vpop.f32.mrb[0].mxu0
  %1406 = vmatprep.mubr.f32.mxu0 0.0
  %1407 = vmatmul.mubr.f32.gmra.mrb[0].mxu0 %v1160
  %v1408 = vpop.f32.mrb[0].mxu0
  %v1409 = vadd.f32 %v1220, %v1408
  %v1410 = vpop.f32.mrb[0].mxu0
  %1411 = vmatprep.mubr.f32.mxu0 0.0
  %1412 = vmatmul.mubr.f32.gmra.mrb[0].mxu0 %v1161
  %v1413 = vpop.f32.mrb[0].mxu0
  %v1414 = vadd.f32 %v1220, %v1413
  %v1415 = vpop.f32.mrb[0].mxu0
  %1416 = vmatprep.mubr.f32.mxu0 0.0
  %1417 = vmatmul.mubr.f32.gmra.mrb[0].mxu0 %v1162
  %v1418 = vpop.f32.mrb[0].mxu0
  %v1419 = vadd.f32 %v1220, %v1418
  %v1420 = vpop.f32.mrb[0].mxu0
  %1421 = vmatprep.mubr.f32.mxu0 0.0
  %1422 = vmatmul.mubr.f32.gmra.mrb[0].mxu0 %v1163
  %v1423 = vpop.f32.mrb[0].mxu0
  %v1424 = vadd.f32 %v1220, %v1423
  %v1425 = vpop.f32.mrb[0].mxu0
  %1426 = vmatprep.mubr.f32.mxu0 0.0
  %1427 = vmatmul.mubr.f32.gmra.mrb[0].mxu0 %v1164
  %v1428 = vpop.f32.mrb[0].mxu0
  %v1429 = vadd.f32 %v1220, %v1428
  %v1430 = vpop.f32.mrb[0].mxu0
  %1431 = vmatprep.mubr.f32.mxu0 0.0
  %1432 = vmatmul.mubr.f32.gmra.mrb[0].mxu0 %v1165
  %v1433 = vpop.f32.mrb[0].mxu0
  %v1434 = vadd.f32 %v1220, %v1433
  %v1435 = vpop.f32.mrb[0].mxu0
  %1436 = vmatprep.mubr.f32.mxu0 0.0
  %1437 = vmatmul.mubr.f32.gmra.mrb[0].mxu0 %v1166
  %v1438 = vpop.f32.mrb[0].mxu0
  %v1439 = vadd.f32 %v1220, %v1438
  %v1440 = vpop.f32.mrb[0].mxu0
  %1441 = vmatprep.mubr.f32.mxu0 0.0
  %1442 = vmatmul.mubr.f32.gmra.mrb[0].mxu0 %v1167
  %v1443 = vpop.f32.mrb[0].mxu0
  %v1444 = vadd.f32 %v1220, %v1443
  %v1445 = vpop.f32.mrb[0].mxu0
  %1446 = vmatprep.mubr.f32.mxu0 0.0
  %1447 = vmatmul.mubr.f32.gmra.mrb[0].mxu0 %v1168
  %v1448 = vpop.f32.mrb[0].mxu0
  %v1449 = vadd.f32 %v1220, %v1448
  %v1450 = vpop.f32.mrb[0].mxu0
  %1451 = vmatprep.mubr.f32.mxu0 0.0
  %1452 = vmatmul.mubr.f32.gmra.mrb[0].mxu0 %v1169
  %v1453 = vpop.f32.mrb[0].mxu0
  %v1454 = vadd.f32 %v1220, %v1453
  %v1455 = vpop.f32.mrb[0].mxu0
  %1456 = vmatprep.mubr.f32.mxu0 0.0
  %1457 = vmatmul.mubr.f32.gmra.mrb[0].mxu0 %v1170
  %v1458 = vpop.f32.mrb[0].mxu0
  %v1459 = vadd.f32 %v1220, %v1458
  %v1460 = vpop.f32.mrb[0].mxu0
  %1461 = vmatprep.mubr.f32.mxu0 0.0
  %1462 = vmatmul.mubr.f32.gmra.mrb[0].mxu0 %v1171
  %v1463 = vpop.f32.mrb[0].mxu0
  %v1464 = vadd.f32 %v1220, %v1463
  %v1465 = vpop.f32.mrb[0].mxu0
  %1466 = vmatprep.mubr.f32.mxu0 0.0
  %1467 = vmatmul.mubr.f32.gmra.mrb[0].mxu0 %v1172
  %v1468 = vpop.f32.mrb[0].mxu0
  %v1469 = vadd.f32 %v1220, %v1468
  %v1470 = vpop.f32.mrb[0].mxu0
  %1471 = vmatprep.mubr.f32.mxu0 0.0
  %1472 = vmatmul.mubr.f32.gmra.mrb[0].mxu0 %v1173
  %v1473 = vpop.f32.mrb[0].mxu0
  %v1474 = vadd.f32 %v1220, %v1473
  %v1475 = vpop.f32.mrb[0].mxu0
  %1476 = vmatprep.mubr.f32.mxu0 0.0
  %1477 = vmatmul.mubr.f32.gmra.mrb[0].mxu0 %v1174
  %v1478 = vpop.f32.mrb[0].mxu0
  %v1479 = vadd.f32 %v1220, %v1478
  %v1480 = vpop.f32.mrb[0].mxu0
  %1481 = vmatprep.mubr.f32.mxu0 0.0
  %1482 = vmatmul.mubr.f32.gmra.mrb[0].mxu0 %v1175
  %v1483 = vpop.f32.mrb[0].mxu0
  %v1484 = vadd.f32 %v1220, %v1483
  %v1485 = vpop.f32.mrb[0].mxu0
  %1486 = vmatprep.mubr.f32.mxu0 0.0
  %1487 = vmatmul.mubr.f32.gmra.mrb[0].mxu0 %v1176
  %v1488 = vpop.f32.mrb[0].mxu0
  %v1489 = vadd.f32 %v1220, %v1488
  %v1490 = vpop.f32.mrb[0].mxu0
  %1491 = vmatprep.mubr.f32.mxu0 0.0
  %1492 = vmatmul.mubr.f32.gmra.mrb[0].mxu0 %v1177
  %v1493 = vpop.f32.mrb[0].mxu0
  %v1494 = vadd.f32 %v1220, %v1493
  %v1495 = vpop.f32.mrb[0].mxu0
  %1496 = vmatprep.mubr.f32.mxu0 0.0
  %1497 = vmatmul.mubr.f32.gmra.mrb[0].mxu0 %v1178
  %v1498 = vpop.f32.mrb[0].mxu0
  %v1499 = vadd.f32 %v1220, %v1498
  %v1500 = vpop.f32.mrb[0].mxu0
  %1501 = vmatprep.mubr.f32.mxu0 0.0
  %1502 = vmatmul.mubr.f32.gmra.mrb[0].mxu0 %v1179
  %v1503 = vpop.f32.mrb[0].mxu0
  %v1504 = vadd.f32 %v1220, %v1503
  %v1505 = vpop.f32.mrb[0].mxu0
  %1506 = vmatprep.mubr.f32.mxu0 0.0
  %1507 = vmatmul.mubr.f32.gmra.mrb[0].mxu0 %v1180
  %v1508 = vpop.f32.mrb[0].mxu0
  %v1509 = vadd.f32 %v1220, %v1508
  %v1510 = vpop.f32.mrb[0].mxu0
  %1511 = vmatprep.mubr.f32.mxu0 0.0
  %1512 = vmatmul.mubr.f32.gmra.mrb[0].mxu0 %v1181
  %v1513 = vpop.f32.mrb[0].mxu0
  %v1514 = vadd.f32 %v1220, %v1513
  %v1515 = vpop.f32.mrb[0].mxu0
  %1516 = vmatprep.mubr.f32.mxu0 0.0
  %1517 = vmatmul.mubr.f32.gmra.mrb[0].mxu0 %v1182
  %v1518 = vpop.f32.mrb[0].mxu0
  %v1519 = vadd.f32 %v1220, %v1518
  %v1520 = vpop.f32.mrb[0].mxu0
  %1521 = vmatprep.mubr.f32.mxu0 0.0
  %1522 = vmatmul.mubr.f32.gmra.mrb[0].mxu0 %v1183
  %v1523 = vpop.f32.mrb[0].mxu0
  %v1524 = vadd.f32 %v1220, %v1523
  %v1525 = vpop.f32.mrb[0].mxu0
  %1526 = vmatprep.mubr.f32.mxu0 0.0
  %1527 = vmatmul.mubr.f32.gmra.mrb[0].mxu0 %v1184
  %v1528 = vpop.f32.mrb[0].mxu0
  %v1529 = vadd.f32 %v1220, %v1528
  %v1530 = vpop.f32.mrb[0].mxu0
  %1531 = vmatprep.mubr.f32.mxu0 0.0
  %1532 = vmatmul.mubr.f32.gmra.mrb[0].mxu0 %v1185
  %v1533 = vpop.f32.mrb[0].mxu0
  %v1534 = vadd.f32 %v1220, %v1533
  %v1535 = vpop.f32.mrb[0].mxu0
  %1536 = vmatprep.mubr.f32.mxu0 0.0
  %1537 = vmatmul.mubr.f32.gmra.mrb[0].mxu0 %v1186
  %v1538 = vpop.f32.mrb[0].mxu0
  %v1539 = vadd.f32 %v1220, %v1538
  %v1540 = vpop.f32.mrb[0].mxu0
  %1541 = vmatprep.mubr.f32.mxu0 0.0
  %1542 = vmatmul.mubr.f32.gmra.mrb[0].mxu0 %v1187
  %v1543 = vpop.f32.mrb[0].mxu0
  %v1544 = vadd.f32 %v1220, %v1543
  %v1545 = vpop.f32.mrb[0].mxu0
  %1546 = vmatprep.mubr.f32.mxu0 0.0
  %1547 = vmatmul.mubr.f32.gmra.mrb[0].mxu0 %v1188
  %v1548 = vpop.f32.mrb[0].mxu0
  %v1549 = vadd.f32 %v1220, %v1548
  %v1550 = vpop.f32.mrb[0].mxu0
  %1551 = vmatprep.mubr.f32.mxu0 0.0
  %1552 = vmatmul.mubr.f32.gmra.mrb[0].mxu0 %v1189
  %v1553 = vpop.f32.mrb[0].mxu0
  %v1554 = vadd.f32 %v1220, %v1553
  %v1555 = vpop.f32.mrb[0].mxu0
  %1556 = vmatprep.mubr.f32.mxu0 0.0
  %1557 = vmatmul.mubr.f32.gmra.mrb[0].mxu0 %v1190
  %v1558 = vpop.f32.mrb[0].mxu0
  %v1559 = vadd.f32 %v1220, %v1558
  %v1560 = vpop.f32.mrb[0].mxu0
  %1561 = vmatprep.mubr.f32.mxu0 0.0
  %1562 = vmatmul.mubr.f32.gmra.mrb[0].mxu0 %v1191
  %v1563 = vpop.f32.mrb[0].mxu0
  %v1564 = vadd.f32 %v1220, %v1563
  %v1565 = vpop.f32.mrb[0].mxu0
  %1566 = vmatprep.mubr.f32.mxu0 0.0
  %1567 = vmatmul.mubr.f32.gmra.mrb[0].mxu0 %v1192
  %v1568 = vpop.f32.mrb[0].mxu0
  %v1569 = vadd.f32 %v1220, %v1568
  %v1570 = vpop.f32.mrb[0].mxu0
  %1571 = vmatprep.mubr.f32.mxu0 0.0
  %1572 = vmatmul.mubr.f32.gmra.mrb[0].mxu0 %v1193
  %v1573 = vpop.f32.mrb[0].mxu0
  %v1574 = vadd.f32 %v1220, %v1573
  %v1575 = vpop.f32.mrb[0].mxu0
  %1576 = vmatprep.mubr.f32.mxu0 0.0
  %1577 = vmatmul.mubr.f32.gmra.mrb[0].mxu0 %v1194
  %v1578 = vpop.f32.mrb[0].mxu0
  %v1579 = vadd.f32 %v1220, %v1578
  %v1580 = vpop.f32.mrb[0].mxu0
  %1581 = vmatprep.mubr.f32.mxu0 0.0
  %1582 = vmatmul.mubr.f32.gmra.mrb[0].mxu0 %v1195
  %v1583 = vpop.f32.mrb[0].mxu0
  %v1584 = vadd.f32 %v1220, %v1583
  %v1585 = vpop.f32.mrb[0].mxu0
  %1586 = vmatprep.mubr.f32.mxu0 0.0
  %1587 = vmatmul.mubr.f32.gmra.mrb[0].mxu0 %v1196
  %v1588 = vpop.f32.mrb[0].mxu0
  %v1589 = vadd.f32 %v1220, %v1588
  %v1590 = vpop.f32.mrb[0].mxu0
  %1591 = vmatprep.mubr.f32.mxu0 0.0
  %1592 = vmatmul.mubr.f32.gmra.mrb[0].mxu0 %v1197
  %v1593 = vpop.f32.mrb[0].mxu0
  %v1594 = vadd.f32 %v1220, %v1593
  %v1595 = vpop.f32.mrb[0].mxu0
  %1596 = vmatprep.mubr.f32.mxu0 0.0
  %1597 = vmatmul.mubr.f32.gmra.mrb[0].mxu0 %v1198
  %v1598 = vpop.f32.mrb[0].mxu0
  %v1599 = vadd.f32 %v1220, %v1598
  %v1600 = vpop.f32.mrb[0].mxu0
  %1601 = vdwg.mxu0
  %v1602 = vxor.u32 %v1289, 2147483648
  %v1603 = vxor.u32 %v1294, 2147483648
  %v1604 = vxor.u32 %v1299, 2147483648
  %v1605 = vxor.u32 %v1304, 2147483648
  %v1606 = vxor.u32 %v1309, 2147483648
  %v1607 = vxor.u32 %v1314, 2147483648
  %v1608 = vxor.u32 %v1319, 2147483648
  %v1609 = vxor.u32 %v1324, 2147483648
  %v1610 = vxor.u32 %v1329, 2147483648
  %v1611 = vxor.u32 %v1334, 2147483648
  %v1612 = vxor.u32 %v1339, 2147483648
  %v1613 = vxor.u32 %v1344, 2147483648
  %v1614 = vxor.u32 %v1349, 2147483648
  %v1615 = vxor.u32 %v1354, 2147483648
  %v1616 = vxor.u32 %v1359, 2147483648
  %v1617 = vxor.u32 %v1364, 2147483648
  %v1618 = vxor.u32 %v1369, 2147483648
  %v1619 = vxor.u32 %v1374, 2147483648
  %v1620 = vxor.u32 %v1379, 2147483648
  %v1621 = vxor.u32 %v1384, 2147483648
  %v1622 = vxor.u32 %v1389, 2147483648
  %v1623 = vxor.u32 %v1394, 2147483648
  %v1624 = vxor.u32 %v1399, 2147483648
  %v1625 = vxor.u32 %v1404, 2147483648
  %v1626 = vxor.u32 %v1409, 2147483648
  %v1627 = vxor.u32 %v1414, 2147483648
  %v1628 = vxor.u32 %v1419, 2147483648
  %v1629 = vxor.u32 %v1424, 2147483648
  %v1630 = vxor.u32 %v1429, 2147483648
  %v1631 = vxor.u32 %v1434, 2147483648
  %v1632 = vxor.u32 %v1439, 2147483648
  %v1633 = vxor.u32 %v1444, 2147483648
  %v1634 = vxor.u32 %v1449, 2147483648
  %v1635 = vxor.u32 %v1454, 2147483648
  %v1636 = vxor.u32 %v1459, 2147483648
  %v1637 = vxor.u32 %v1464, 2147483648
  %v1638 = vxor.u32 %v1469, 2147483648
  %v1639 = vxor.u32 %v1474, 2147483648
  %v1640 = vxor.u32 %v1479, 2147483648
  %v1641 = vxor.u32 %v1484, 2147483648
  %v1642 = vxor.u32 %v1489, 2147483648
  %v1643 = vxor.u32 %v1494, 2147483648
  %v1644 = vxor.u32 %v1499, 2147483648
  %v1645 = vxor.u32 %v1504, 2147483648
  %v1646 = vxor.u32 %v1509, 2147483648
  %v1647 = vxor.u32 %v1514, 2147483648
  %v1648 = vxor.u32 %v1519, 2147483648
  %v1649 = vxor.u32 %v1524, 2147483648
  %v1650 = vxor.u32 %v1529, 2147483648
  %v1651 = vxor.u32 %v1534, 2147483648
  %v1652 = vxor.u32 %v1539, 2147483648
  %v1653 = vxor.u32 %v1544, 2147483648
  %v1654 = vxor.u32 %v1549, 2147483648
  %v1655 = vxor.u32 %v1554, 2147483648
  %v1656 = vxor.u32 %v1559, 2147483648
  %v1657 = vxor.u32 %v1564, 2147483648
  %v1658 = vxor.u32 %v1569, 2147483648
  %v1659 = vxor.u32 %v1574, 2147483648
  %v1660 = vxor.u32 %v1579, 2147483648
  %v1661 = vxor.u32 %v1584, 2147483648
  %v1662 = vxor.u32 %v1589, 2147483648
  %v1663 = vxor.u32 %v1594, 2147483648
  %v1664 = vxor.u32 %v1599, 2147483648
  %v1665 = vmul.f32 %v1602, 1.442695
  %v1666 = vpow.pop %v1665
  %v1667 = vmul.f32 %v1603, 1.442695
  %v1668 = vpow.pop %v1667
  %v1669 = vmul.f32 %v1604, 1.442695
  %v1670 = vpow.pop %v1669
  %v1671 = vmul.f32 %v1605, 1.442695
  %v1672 = vpow.pop %v1671
  %v1673 = vmul.f32 %v1606, 1.442695
  %v1674 = vpow.pop %v1673
  %v1675 = vmul.f32 %v1607, 1.442695
  %v1676 = vpow.pop %v1675
  %v1677 = vmul.f32 %v1608, 1.442695
  %v1678 = vpow.pop %v1677
  %v1679 = vmul.f32 %v1609, 1.442695
  %v1680 = vpow.pop %v1679
  %v1681 = vmul.f32 %v1610, 1.442695
  %v1682 = vpow.pop %v1681
  %v1683 = vmul.f32 %v1611, 1.442695
  %v1684 = vpow.pop %v1683
  %v1685 = vmul.f32 %v1612, 1.442695
  %v1686 = vpow.pop %v1685
  %v1687 = vmul.f32 %v1613, 1.442695
  %v1688 = vpow.pop %v1687
  %v1689 = vmul.f32 %v1614, 1.442695
  %v1690 = vpow.pop %v1689
  %v1691 = vmul.f32 %v1615, 1.442695
  %v1692 = vpow.pop %v1691
  %v1693 = vmul.f32 %v1616, 1.442695
  %v1694 = vpow.pop %v1693
  %v1695 = vmul.f32 %v1617, 1.442695
  %v1696 = vpow.pop %v1695
  %v1697 = vmul.f32 %v1618, 1.442695
  %v1698 = vpow.pop %v1697
  %v1699 = vmul.f32 %v1619, 1.442695
  %v1700 = vpow.pop %v1699
  %v1701 = vmul.f32 %v1620, 1.442695
  %v1702 = vpow.pop %v1701
  %v1703 = vmul.f32 %v1621, 1.442695
  %v1704 = vpow.pop %v1703
  %v1705 = vmul.f32 %v1622, 1.442695
  %v1706 = vpow.pop %v1705
  %v1707 = vmul.f32 %v1623, 1.442695
  %v1708 = vpow.pop %v1707
  %v1709 = vmul.f32 %v1624, 1.442695
  %v1710 = vpow.pop %v1709
  %v1711 = vmul.f32 %v1625, 1.442695
  %v1712 = vpow.pop %v1711
  %v1713 = vmul.f32 %v1626, 1.442695
  %v1714 = vpow.pop %v1713
  %v1715 = vmul.f32 %v1627, 1.442695
  %v1716 = vpow.pop %v1715
  %v1717 = vmul.f32 %v1628, 1.442695
  %v1718 = vpow.pop %v1717
  %v1719 = vmul.f32 %v1629, 1.442695
  %v1720 = vpow.pop %v1719
  %v1721 = vmul.f32 %v1630, 1.442695
  %v1722 = vpow.pop %v1721
  %v1723 = vmul.f32 %v1631, 1.442695
  %v1724 = vpow.pop %v1723
  %v1725 = vmul.f32 %v1632, 1.442695
  %v1726 = vpow.pop %v1725
  %v1727 = vmul.f32 %v1633, 1.442695
  %v1728 = vpow.pop %v1727
  %v1729 = vmul.f32 %v1634, 1.442695
  %v1730 = vpow.pop %v1729
  %v1731 = vmul.f32 %v1635, 1.442695
  %v1732 = vpow.pop %v1731
  %v1733 = vmul.f32 %v1636, 1.442695
  %v1734 = vpow.pop %v1733
  %v1735 = vmul.f32 %v1637, 1.442695
  %v1736 = vpow.pop %v1735
  %v1737 = vmul.f32 %v1638, 1.442695
  %v1738 = vpow.pop %v1737
  %v1739 = vmul.f32 %v1639, 1.442695
  %v1740 = vpow.pop %v1739
  %v1741 = vmul.f32 %v1640, 1.442695
  %v1742 = vpow.pop %v1741
  %v1743 = vmul.f32 %v1641, 1.442695
  %v1744 = vpow.pop %v1743
  %v1745 = vmul.f32 %v1642, 1.442695
  %v1746 = vpow.pop %v1745
  %v1747 = vmul.f32 %v1643, 1.442695
  %v1748 = vpow.pop %v1747
  %v1749 = vmul.f32 %v1644, 1.442695
  %v1750 = vpow.pop %v1749
  %v1751 = vmul.f32 %v1645, 1.442695
  %v1752 = vpow.pop %v1751
  %v1753 = vmul.f32 %v1646, 1.442695
  %v1754 = vpow.pop %v1753
  %v1755 = vmul.f32 %v1647, 1.442695
  %v1756 = vpow.pop %v1755
  %v1757 = vmul.f32 %v1648, 1.442695
  %v1758 = vpow.pop %v1757
  %v1759 = vmul.f32 %v1649, 1.442695
  %v1760 = vpow.pop %v1759
  %v1761 = vmul.f32 %v1650, 1.442695
  %v1762 = vpow.pop %v1761
  %v1763 = vmul.f32 %v1651, 1.442695
  %v1764 = vpow.pop %v1763
  %v1765 = vmul.f32 %v1652, 1.442695
  %v1766 = vpow.pop %v1765
  %v1767 = vmul.f32 %v1653, 1.442695
  %v1768 = vpow.pop %v1767
  %v1769 = vmul.f32 %v1654, 1.442695
  %v1770 = vpow.pop %v1769
  %v1771 = vmul.f32 %v1655, 1.442695
  %v1772 = vpow.pop %v1771
  %v1773 = vmul.f32 %v1656, 1.442695
  %v1774 = vpow.pop %v1773
  %v1775 = vmul.f32 %v1657, 1.442695
  %v1776 = vpow.pop %v1775
  %v1777 = vmul.f32 %v1658, 1.442695
  %v1778 = vpow.pop %v1777
  %v1779 = vmul.f32 %v1659, 1.442695
  %v1780 = vpow.pop %v1779
  %v1781 = vmul.f32 %v1660, 1.442695
  %v1782 = vpow.pop %v1781
  %v1783 = vmul.f32 %v1661, 1.442695
  %v1784 = vpow.pop %v1783
  %v1785 = vmul.f32 %v1662, 1.442695
  %v1786 = vpow.pop %v1785
  %v1787 = vmul.f32 %v1663, 1.442695
  %v1788 = vpow.pop %v1787
  %v1789 = vmul.f32 %v1664, 1.442695
  %v1790 = vpow.pop %v1789
  %v1791 = vadd.f32 %v1666, 1.0
  %v1792 = vadd.f32 %v1668, 1.0
  %v1793 = vadd.f32 %v1670, 1.0
  %v1794 = vadd.f32 %v1672, 1.0
  %v1795 = vadd.f32 %v1674, 1.0
  %v1796 = vadd.f32 %v1676, 1.0
  %v1797 = vadd.f32 %v1678, 1.0
  %v1798 = vadd.f32 %v1680, 1.0
  %v1799 = vadd.f32 %v1682, 1.0
  %v1800 = vadd.f32 %v1684, 1.0
  %v1801 = vadd.f32 %v1686, 1.0
  %v1802 = vadd.f32 %v1688, 1.0
  %v1803 = vadd.f32 %v1690, 1.0
  %v1804 = vadd.f32 %v1692, 1.0
  %v1805 = vadd.f32 %v1694, 1.0
  %v1806 = vadd.f32 %v1696, 1.0
  %v1807 = vadd.f32 %v1698, 1.0
  %v1808 = vadd.f32 %v1700, 1.0
  %v1809 = vadd.f32 %v1702, 1.0
  %v1810 = vadd.f32 %v1704, 1.0
  %v1811 = vadd.f32 %v1706, 1.0
  %v1812 = vadd.f32 %v1708, 1.0
  %v1813 = vadd.f32 %v1710, 1.0
  %v1814 = vadd.f32 %v1712, 1.0
  %v1815 = vadd.f32 %v1714, 1.0
  %v1816 = vadd.f32 %v1716, 1.0
  %v1817 = vadd.f32 %v1718, 1.0
  %v1818 = vadd.f32 %v1720, 1.0
  %v1819 = vadd.f32 %v1722, 1.0
  %v1820 = vadd.f32 %v1724, 1.0
  %v1821 = vadd.f32 %v1726, 1.0
  %v1822 = vadd.f32 %v1728, 1.0
  %v1823 = vadd.f32 %v1730, 1.0
  %v1824 = vadd.f32 %v1732, 1.0
  %v1825 = vadd.f32 %v1734, 1.0
  %v1826 = vadd.f32 %v1736, 1.0
  %v1827 = vadd.f32 %v1738, 1.0
  %v1828 = vadd.f32 %v1740, 1.0
  %v1829 = vadd.f32 %v1742, 1.0
  %v1830 = vadd.f32 %v1744, 1.0
  %v1831 = vadd.f32 %v1746, 1.0
  %v1832 = vadd.f32 %v1748, 1.0
  %v1833 = vadd.f32 %v1750, 1.0
  %v1834 = vadd.f32 %v1752, 1.0
  %v1835 = vadd.f32 %v1754, 1.0
  %v1836 = vadd.f32 %v1756, 1.0
  %v1837 = vadd.f32 %v1758, 1.0
  %v1838 = vadd.f32 %v1760, 1.0
  %v1839 = vadd.f32 %v1762, 1.0
  %v1840 = vadd.f32 %v1764, 1.0
  %v1841 = vadd.f32 %v1766, 1.0
  %v1842 = vadd.f32 %v1768, 1.0
  %v1843 = vadd.f32 %v1770, 1.0
  %v1844 = vadd.f32 %v1772, 1.0
  %v1845 = vadd.f32 %v1774, 1.0
  %v1846 = vadd.f32 %v1776, 1.0
  %v1847 = vadd.f32 %v1778, 1.0
  %v1848 = vadd.f32 %v1780, 1.0
  %v1849 = vadd.f32 %v1782, 1.0
  %v1850 = vadd.f32 %v1784, 1.0
  %v1851 = vadd.f32 %v1786, 1.0
  %v1852 = vadd.f32 %v1788, 1.0
  %v1853 = vadd.f32 %v1790, 1.0
  %v1854 = vrcp.pop %v1791
  %v1855 = vmul.f32 1.0, %v1854
  %v1856 = vrcp.pop %v1792
  %v1857 = vmul.f32 1.0, %v1856
  %v1858 = vrcp.pop %v1793
  %v1859 = vmul.f32 1.0, %v1858
  %v1860 = vrcp.pop %v1794
  %v1861 = vmul.f32 1.0, %v1860
  %v1862 = vrcp.pop %v1795
  %v1863 = vmul.f32 1.0, %v1862
  %v1864 = vrcp.pop %v1796
  %v1865 = vmul.f32 1.0, %v1864
  %v1866 = vrcp.pop %v1797
  %v1867 = vmul.f32 1.0, %v1866
  %v1868 = vrcp.pop %v1798
  %v1869 = vmul.f32 1.0, %v1868
  %v1870 = vrcp.pop %v1799
  %v1871 = vmul.f32 1.0, %v1870
  %v1872 = vrcp.pop %v1800
  %v1873 = vmul.f32 1.0, %v1872
  %v1874 = vrcp.pop %v1801
  %v1875 = vmul.f32 1.0, %v1874
  %v1876 = vrcp.pop %v1802
  %v1877 = vmul.f32 1.0, %v1876
  %v1878 = vrcp.pop %v1803
  %v1879 = vmul.f32 1.0, %v1878
  %v1880 = vrcp.pop %v1804
  %v1881 = vmul.f32 1.0, %v1880
  %v1882 = vrcp.pop %v1805
  %v1883 = vmul.f32 1.0, %v1882
  %v1884 = vrcp.pop %v1806
  %v1885 = vmul.f32 1.0, %v1884
  %v1886 = vrcp.pop %v1807
  %v1887 = vmul.f32 1.0, %v1886
  %v1888 = vrcp.pop %v1808
  %v1889 = vmul.f32 1.0, %v1888
  %v1890 = vrcp.pop %v1809
  %v1891 = vmul.f32 1.0, %v1890
  %v1892 = vrcp.pop %v1810
  %v1893 = vmul.f32 1.0, %v1892
  %v1894 = vrcp.pop %v1811
  %v1895 = vmul.f32 1.0, %v1894
  %v1896 = vrcp.pop %v1812
  %v1897 = vmul.f32 1.0, %v1896
  %v1898 = vrcp.pop %v1813
  %v1899 = vmul.f32 1.0, %v1898
  %v1900 = vrcp.pop %v1814
  %v1901 = vmul.f32 1.0, %v1900
  %v1902 = vrcp.pop %v1815
  %v1903 = vmul.f32 1.0, %v1902
  %v1904 = vrcp.pop %v1816
  %v1905 = vmul.f32 1.0, %v1904
  %v1906 = vrcp.pop %v1817
  %v1907 = vmul.f32 1.0, %v1906
  %v1908 = vrcp.pop %v1818
  %v1909 = vmul.f32 1.0, %v1908
  %v1910 = vrcp.pop %v1819
  %v1911 = vmul.f32 1.0, %v1910
  %v1912 = vrcp.pop %v1820
  %v1913 = vmul.f32 1.0, %v1912
  %v1914 = vrcp.pop %v1821
  %v1915 = vmul.f32 1.0, %v1914
  %v1916 = vrcp.pop %v1822
  %v1917 = vmul.f32 1.0, %v1916
  %v1918 = vrcp.pop %v1823
  %v1919 = vmul.f32 1.0, %v1918
  %v1920 = vrcp.pop %v1824
  %v1921 = vmul.f32 1.0, %v1920
  %v1922 = vrcp.pop %v1825
  %v1923 = vmul.f32 1.0, %v1922
  %v1924 = vrcp.pop %v1826
  %v1925 = vmul.f32 1.0, %v1924
  %v1926 = vrcp.pop %v1827
  %v1927 = vmul.f32 1.0, %v1926
  %v1928 = vrcp.pop %v1828
  %v1929 = vmul.f32 1.0, %v1928
  %v1930 = vrcp.pop %v1829
  %v1931 = vmul.f32 1.0, %v1930
  %v1932 = vrcp.pop %v1830
  %v1933 = vmul.f32 1.0, %v1932
  %v1934 = vrcp.pop %v1831
  %v1935 = vmul.f32 1.0, %v1934
  %v1936 = vrcp.pop %v1832
  %v1937 = vmul.f32 1.0, %v1936
  %v1938 = vrcp.pop %v1833
  %v1939 = vmul.f32 1.0, %v1938
  %v1940 = vrcp.pop %v1834
  %v1941 = vmul.f32 1.0, %v1940
  %v1942 = vrcp.pop %v1835
  %v1943 = vmul.f32 1.0, %v1942
  %v1944 = vrcp.pop %v1836
  %v1945 = vmul.f32 1.0, %v1944
  %v1946 = vrcp.pop %v1837
  %v1947 = vmul.f32 1.0, %v1946
  %v1948 = vrcp.pop %v1838
  %v1949 = vmul.f32 1.0, %v1948
  %v1950 = vrcp.pop %v1839
  %v1951 = vmul.f32 1.0, %v1950
  %v1952 = vrcp.pop %v1840
  %v1953 = vmul.f32 1.0, %v1952
  %v1954 = vrcp.pop %v1841
  %v1955 = vmul.f32 1.0, %v1954
  %v1956 = vrcp.pop %v1842
  %v1957 = vmul.f32 1.0, %v1956
  %v1958 = vrcp.pop %v1843
  %v1959 = vmul.f32 1.0, %v1958
  %v1960 = vrcp.pop %v1844
  %v1961 = vmul.f32 1.0, %v1960
  %v1962 = vrcp.pop %v1845
  %v1963 = vmul.f32 1.0, %v1962
  %v1964 = vrcp.pop %v1846
  %v1965 = vmul.f32 1.0, %v1964
  %v1966 = vrcp.pop %v1847
  %v1967 = vmul.f32 1.0, %v1966
  %v1968 = vrcp.pop %v1848
  %v1969 = vmul.f32 1.0, %v1968
  %v1970 = vrcp.pop %v1849
  %v1971 = vmul.f32 1.0, %v1970
  %v1972 = vrcp.pop %v1850
  %v1973 = vmul.f32 1.0, %v1972
  %v1974 = vrcp.pop %v1851
  %v1975 = vmul.f32 1.0, %v1974
  %v1976 = vrcp.pop %v1852
  %v1977 = vmul.f32 1.0, %v1976
  %v1978 = vrcp.pop %v1853
  %v1979 = vmul.f32 1.0, %v1978
  %1980 = vst [vmem:[%s7] sm:$0xff] %v1855
  %1981 = vst [vmem:[%s7 + $0x8] sm:$0xff] %v1857
  %1982 = vst [vmem:[%s7 + $0x10] sm:$0xff] %v1859
  %1983 = vst [vmem:[%s7 + $0x18] sm:$0xff] %v1861
  %1984 = vst [vmem:[%s7 + $0x20] sm:$0xff] %v1863
  %1985 = vst [vmem:[%s7 + $0x28] sm:$0xff] %v1865
  %1986 = vst [vmem:[%s7 + $0x30] sm:$0xff] %v1867
  %1987 = vst [vmem:[%s7 + $0x38] sm:$0xff] %v1869
  %1988 = vst [vmem:[%s7 + $0x40] sm:$0xff] %v1871
  %1989 = vst [vmem:[%s7 + $0x48] sm:$0xff] %v1873
  %1990 = vst [vmem:[%s7 + $0x50] sm:$0xff] %v1875
  %1991 = vst [vmem:[%s7 + $0x58] sm:$0xff] %v1877
  %1992 = vst [vmem:[%s7 + $0x60] sm:$0xff] %v1879
  %1993 = vst [vmem:[%s7 + $0x68] sm:$0xff] %v1881
  %1994 = vst [vmem:[%s7 + $0x70] sm:$0xff] %v1883
  %1995 = vst [vmem:[%s7 + $0x78] sm:$0xff] %v1885
  %1996 = vst [vmem:[%s7 + $0x80] sm:$0xff] %v1887
  %1997 = vst [vmem:[%s7 + $0x88] sm:$0xff] %v1889
  %1998 = vst [vmem:[%s7 + $0x90] sm:$0xff] %v1891
  %1999 = vst [vmem:[%s7 + $0x98] sm:$0xff] %v1893
  %2000 = vst [vmem:[%s7 + $0xa0] sm:$0xff] %v1895
  %2001 = vst [vmem:[%s7 + $0xa8] sm:$0xff] %v1897
  %2002 = vst [vmem:[%s7 + $0xb0] sm:$0xff] %v1899
  %2003 = vst [vmem:[%s7 + $0xb8] sm:$0xff] %v1901
  %2004 = vst [vmem:[%s7 + $0xc0] sm:$0xff] %v1903
  %2005 = vst [vmem:[%s7 + $0xc8] sm:$0xff] %v1905
  %2006 = vst [vmem:[%s7 + $0xd0] sm:$0xff] %v1907
  %2007 = vst [vmem:[%s7 + $0xd8] sm:$0xff] %v1909
  %2008 = vst [vmem:[%s7 + $0xe0] sm:$0xff] %v1911
  %2009 = vst [vmem:[%s7 + $0xe8] sm:$0xff] %v1913
  %2010 = vst [vmem:[%s7 + $0xf0] sm:$0xff] %v1915
  %2011 = vst [vmem:[%s7 + $0xf8] sm:$0xff] %v1917
  %2012 = vst [vmem:[%s7 + $0x100] sm:$0xff] %v1919
  %2013 = vst [vmem:[%s7 + $0x108] sm:$0xff] %v1921
  %2014 = vst [vmem:[%s7 + $0x110] sm:$0xff] %v1923
  %2015 = vst [vmem:[%s7 + $0x118] sm:$0xff] %v1925
  %2016 = vst [vmem:[%s7 + $0x120] sm:$0xff] %v1927
  %2017 = vst [vmem:[%s7 + $0x128] sm:$0xff] %v1929
  %2018 = vst [vmem:[%s7 + $0x130] sm:$0xff] %v1931
  %2019 = vst [vmem:[%s7 + $0x138] sm:$0xff] %v1933
  %2020 = vst [vmem:[%s7 + $0x140] sm:$0xff] %v1935
  %2021 = vst [vmem:[%s7 + $0x148] sm:$0xff] %v1937
  %2022 = vst [vmem:[%s7 + $0x150] sm:$0xff] %v1939
  %2023 = vst [vmem:[%s7 + $0x158] sm:$0xff] %v1941
  %2024 = vst [vmem:[%s7 + $0x160] sm:$0xff] %v1943
  %2025 = vst [vmem:[%s7 + $0x168] sm:$0xff] %v1945
  %2026 = vst [vmem:[%s7 + $0x170] sm:$0xff] %v1947
  %2027 = vst [vmem:[%s7 + $0x178] sm:$0xff] %v1949
  %2028 = vst [vmem:[%s7 + $0x180] sm:$0xff] %v1951
  %2029 = vst [vmem:[%s7 + $0x188] sm:$0xff] %v1953
  %2030 = vst [vmem:[%s7 + $0x190] sm:$0xff] %v1955
  %2031 = vst [vmem:[%s7 + $0x198] sm:$0xff] %v1957
  %2032 = vst [vmem:[%s7 + $0x1a0] sm:$0xff] %v1959
  %2033 = vst [vmem:[%s7 + $0x1a8] sm:$0xff] %v1961
  %2034 = vst [vmem:[%s7 + $0x1b0] sm:$0xff] %v1963
  %2035 = vst [vmem:[%s7 + $0x1b8] sm:$0xff] %v1965
  %2036 = vst [vmem:[%s7 + $0x1c0] sm:$0xff] %v1967
  %2037 = vst [vmem:[%s7 + $0x1c8] sm:$0xff] %v1969
  %2038 = vst [vmem:[%s7 + $0x1d0] sm:$0xff] %v1971
  %2039 = vst [vmem:[%s7 + $0x1d8] sm:$0xff] %v1973
  %2040 = vst [vmem:[%s7 + $0x1e0] sm:$0xff] %v1975
  %2041 = vst [vmem:[%s7 + $0x1e8] sm:$0xff] %v1977
  %2042 = vst [vmem:[%s7 + $0x1f0] sm:$0xff] %v1979
  // Predicated region
  $region30: #{fcn_forward.1} parent=0 // pred_check
    _
  $region31: #{fcn_forward.1} parent=0 // pred_check_branch
    %2044 = sbr.rel (0) target = $region33
  $region32: #{fcn_forward.1} parent=0 // pred_region
    _
  $region33: #{fcn_forward.1} parent=0 // pred_fallthru
    _
  // Predicated region
  $region34: #{fcn_forward.1} parent=0 // pred_check
    _
  $region35: #{fcn_forward.1} parent=0 // pred_check_branch
    %2046 = sbr.rel (0) target = $region37
  $region36: #{fcn_forward.1} parent=0 // pred_region
    _
  $region37: #{fcn_forward.1} parent=0 // pred_fallthru
    _

</llo_original>
